<compile_context>
chip_gen: v6e
topology: v6e:2x2x1
jax: 0.10.0
libtpu: 0.0.40
codegen_flags: <defaults>
</compile_context>

<pallas_src>
import functools

import jax
import jax.numpy as jnp
from jax import lax
from jax.experimental import pallas as pl
from jax.experimental.pallas import tpu as pltpu

# dot_general dims for "A @ B.T" (contract last dim of both):
# result[r, j] = sum_k A[r, k] * B[j, k]  -> batch lands on the lane (N) axis.
_NT_DIMS = (((1,), (1,)), ((), ()))


# ----------------------------------------------------------------------------
# Pallas kernel
# ----------------------------------------------------------------------------
def _ncf_kernel(num_layers, *refs):
    """refs = (eu, ei, w0_user, w0_item, b0,
               [w1, b1, ..., w{L-1}, b{L-1}], wpg8, wpm8, bp, out_ref)

    eu / ei: (tb, 2F) bf16 slabs laid out [MLP | GMF].
    w0_user / w0_item: (2F, 2F) bf16, W0 halves zero-padded over the GMF lanes.
    w_l: (2F, 2F) bf16 (in, out); b_l: (1, 2F) f32.
    wpg8 / wpm8: (8, 2F) bf16, real head weights in row 0 (wpg8 zero over the
    MLP lanes); bp: (1, 1) f32.  out_ref: (8, tb) f32, row 0 is the prediction.
    """
    f32, bf16 = jnp.float32, jnp.bfloat16

    eu_ref, ei_ref = refs[0], refs[1]
    w0u_ref, w0i_ref, b0_ref = refs[2], refs[3], refs[4]
    mid = refs[5:5 + 2 * (num_layers - 1)]
    wpg_ref, wpm_ref, bp_ref, out_ref = refs[5 + 2 * (num_layers - 1):]

    eu = eu_ref[...]                                   # (tb, 2F) bf16
    ei = ei_ref[...]

    # ---- GMF branch: product over the full slab (MLP-lane garbage is zeroed
    # by the head weights); head partial taken immediately so the (tb, 2F)
    # product does not stay live across the MLP loop.
    prod = eu.astype(f32) * ei.astype(f32)             # (tb, 2F) f32
    pred8 = lax.dot_general(wpg_ref[...], prod.astype(bf16), _NT_DIMS,
                            preferred_element_type=f32)          # (8, tb) f32

    # ---- MLP branch: layer 0 via zero-padded weight halves (no lane slicing).
    x = jnp.maximum(
        jnp.dot(eu, w0u_ref[...], preferred_element_type=f32)
        + jnp.dot(ei, w0i_ref[...], preferred_element_type=f32)
        + b0_ref[...], 0.0)                            # (tb, 2F) f32

    # TODO(synk): nn.Dropout is identity in eval mode; no stochastic dropout.
    for l in range(num_layers - 1):
        w = mid[2 * l][...]                            # (2F, 2F) bf16
        b = mid[2 * l + 1][...]                        # (1, 2F)  f32
        x = jnp.maximum(
            jnp.dot(x.astype(bf16), w, preferred_element_type=f32) + b, 0.0)

    # ---- NeuMF predict head, lane-dense.
    pred8 = pred8 + lax.dot_general(wpm_ref[...], x.astype(bf16), _NT_DIMS,
                                    preferred_element_type=f32)  # (8, tb)
    out_ref[...] = (pred8 + bp_ref[...]).astype(out_ref.dtype)


# ----------------------------------------------------------------------------
# Wrapper: 2 embedding gathers (glue) + pallas_call
# ----------------------------------------------------------------------------
def ncf_forward(user, item, packed, *, factor_num, num_layers, tb=None):
    """NeuMF-end forward. user/item: int32 (B,). Returns float32 (B,) logits."""
    B = user.shape[0]
    F = factor_num
    if tb is None:
        tb = min(B, 4096)
    tb = min(tb, B)
    assert B % tb == 0 and tb % 128 == 0, (B, tb)

    # Fused embedding gathers -- one per entity (plain JAX glue, bf16 tables).
    eu = jnp.take(packed["user_table"], user, axis=0)   # (B, 2F) bf16
    ei = jnp.take(packed["item_table"], item, axis=0)   # (B, 2F) bf16

    # Resident weight operands (full-array blocks).
    weight_args = [packed["w0_user"], packed["w0_item"], packed["b0"]]
    for l in range(1, num_layers):
        weight_args += [packed[f"w{l}"], packed[f"b{l}"]]
    weight_args += [packed["wpg8"], packed["wpm8"], packed["bp"]]
    weight_specs = [pl.BlockSpec(a.shape, lambda i: (0, 0)) for a in weight_args]

    emb_spec = pl.BlockSpec((tb, 2 * F), lambda i: (i, 0))

    flops = int(B * ((num_layers + 1) * 2 * (2 * F) * (2 * F)
                     + 2 * 2 * (2 * F) * 8 + 4 * (2 * F)))
    bytes_accessed = int(
        2 * B * (2 * F) * 2                              # embedding slabs (bf16)
        + (num_layers + 1) * ((2 * F) * (2 * F) * 2 + 2 * F * 4)
        + 2 * 8 * (2 * F) * 2 + 4
        + 8 * B * 4)                                     # (8, B) output
    cost = pl.CostEstimate(flops=flops, transcendentals=0,
                           bytes_accessed=bytes_accessed)

    # Raise the scoped VMEM limit only when huge tiles actually need it
    # (v5e default is 16 MiB); at normal tile sizes leave the default alone.
    compiler_kwargs = dict(dimension_semantics=("parallel",))
    vmem_est = tb * 4096 + (2 << 20)
    if vmem_est > (16 << 20):
        compiler_kwargs["vmem_limit_bytes"] = int(min(vmem_est, 96 << 20))

    out = pl.pallas_call(
        functools.partial(_ncf_kernel, num_layers),
        out_shape=jax.ShapeDtypeStruct((8, B), jnp.float32),
        grid_spec=pltpu.PrefetchScalarGridSpec(
            num_scalar_prefetch=0,
            grid=(B // tb,),
            in_specs=[emb_spec, emb_spec] + weight_specs,
            out_specs=pl.BlockSpec((8, tb), lambda i: (0, i)),
        ),
        compiler_params=pltpu.CompilerParams(**compiler_kwargs),
        cost_estimate=cost,
    )(eu, ei, *weight_args)

    return out[0, :]   # prediction.view(-1)


# ----------------------------------------------------------------------------
# Parameter init (mirrors shapes / init style of the nn.Module, NeuMF-end)
# ----------------------------------------------------------------------------
def init_params(key, user_num, item_num, factor_num, num_layers):
    F = factor_num
    ks = jax.random.split(key, 5 + num_layers)
    bf16 = jnp.bfloat16
    params = {
        "embed_user_GMF": (0.01 * jax.random.normal(ks[0], (user_num, F))).astype(bf16),
        "embed_item_GMF": (0.01 * jax.random.normal(ks[1], (item_num, F))).astype(bf16),
        "embed_user_MLP": (0.01 * jax.random.normal(ks[2], (user_num, F))).astype(bf16),
        "embed_item_MLP": (0.01 * jax.random.normal(ks[3], (item_num, F))).astype(bf16),
    }
    in_size = 2 * F
    for l in range(num_layers):
        # xavier_uniform on a square (in,in) Linear; bias zero.
        limit = (6.0 / (in_size + in_size)) ** 0.5
        params[f"mlp_w{l}"] = jax.random.uniform(
            ks[4 + l], (in_size, in_size), jnp.float32, -limit, limit).astype(bf16)
        params[f"mlp_b{l}"] = jnp.zeros((1, in_size), jnp.float32)
    # predict layer: kaiming_uniform(a=1, 'sigmoid') -> gain 1, bound sqrt(3/fan_in)
    fan_in = 3 * F
    bound = (3.0 / fan_in) ** 0.5
    params["predict_w"] = jax.random.uniform(
        ks[4 + num_layers], (fan_in, 1), jnp.float32, -bound, bound).astype(bf16)
    params["predict_b"] = jnp.zeros((1, 1), jnp.float32)
    return params


def pack_params(params, *, factor_num, num_layers):
    """Offline re-layout of parameters into the kernel-friendly fused format."""
    F = factor_num
    bf16 = jnp.bfloat16
    packed = {
        # Slab layout [MLP | GMF]: MLP half at lane offset 0 feeds the matmuls.
        "user_table": jnp.concatenate(
            [params["embed_user_MLP"], params["embed_user_GMF"]], axis=1),
        "item_table": jnp.concatenate(
            [params["embed_item_MLP"], params["embed_item_GMF"]], axis=1),
    }
    # Layer 0: cat(eu_mlp, ei_mlp) @ W0 == eu_slab @ W0_user_pad + ei_slab @ W0_item_pad
    w0 = params["mlp_w0"]                               # (2F, 2F) bf16, (in, out)
    zeros = jnp.zeros((F, 2 * F), w0.dtype)
    packed["w0_user"] = jnp.concatenate([w0[:F, :], zeros], axis=0)
    packed["w0_item"] = jnp.concatenate([w0[F:, :], zeros], axis=0)
    packed["b0"] = params["mlp_b0"]
    for l in range(1, num_layers):
        packed[f"w{l}"] = params[f"mlp_w{l}"]
        packed[f"b{l}"] = params[f"mlp_b{l}"]
    # Predict head split into GMF/MLP halves, padded to 8 sublanes (row 0 real).
    # GMF weights sit over lanes F:2F (the GMF half of the product slab);
    # lanes 0:F are zero so the MLP-lane garbage contributes nothing.
    wp = params["predict_w"]                            # (3F, 1) bf16
    packed["wpg8"] = jnp.zeros((8, 2 * F), bf16).at[0, F:].set(wp[:F, 0])
    packed["wpm8"] = jnp.zeros((8, 2 * F), bf16).at[0, :].set(wp[F:, 0])
    packed["bp"] = params["predict_b"]
    return packed


# Pure-JAX reference (same precision regime) for a sanity check.
def ncf_reference(user, item, params, *, num_layers):
    f32, bf16 = jnp.float32, jnp.bfloat16
    eu_gmf = jnp.take(params["embed_user_GMF"], user, axis=0)
    ei_gmf = jnp.take(params["embed_item_GMF"], item, axis=0)
    eu_mlp = jnp.take(params["embed_user_MLP"], user, axis=0)
    ei_mlp = jnp.take(params["embed_item_MLP"], item, axis=0)
    out_gmf = eu_gmf.astype(f32) * ei_gmf.astype(f32)
    x = jnp.concatenate([eu_mlp, ei_mlp], axis=-1).astype(f32)
    for l in range(num_layers):
        x = jnp.maximum(
            jnp.dot(x.astype(bf16), params[f"mlp_w{l}"],
                    preferred_element_type=f32) + params[f"mlp_b{l}"], 0.0)
    concat = jnp.concatenate([out_gmf, x], axis=-1).astype(bf16)
    pred = jnp.dot(concat, params["predict_w"],
                   preferred_element_type=f32) + params["predict_b"]
    return pred.reshape(-1)


if __name__ == "__main__":
    user_num, item_num = 100, 200
    factor_num, num_layers = 32, 3
    batch = 1024

    key = jax.random.PRNGKey(0)
    kp, ku, ki = jax.random.split(key, 3)
    raw_params = init_params(kp, user_num, item_num, factor_num, num_layers)
    packed = pack_params(raw_params, factor_num=factor_num, num_layers=num_layers)
    user = jax.random.randint(ku, (batch,), 0, user_num, dtype=jnp.int32)
    item = jax.random.randint(ki, (batch,), 0, item_num, dtype=jnp.int32)

    # tb = B // 2 -> exactly 2 "parallel" grid steps: both v7x TensorCores get a
    # tile; on 1-TC chips the second step simply pipelines behind the first.
    pred = ncf_forward(user, item, packed, factor_num=factor_num,
                       num_layers=num_layers, tb=batch // 2)
    pred = jax.block_until_ready(pred)

    ref = ncf_reference(user, item, raw_params, num_layers=num_layers)
    assert pred.shape == (batch,)
    assert jnp.allclose(pred, ref, atol=1e-4, rtol=1e-3), \
        float(jnp.max(jnp.abs(pred - ref)))

    print("KERNEL_OK")
</pallas_src>

<mosaic_0001>
module attributes {stable_mosaic.version = 11 : i64} {
  func.func @_ncf_kernel(%arg0: i32, %arg1: memref<512x64xbf16, #tpu.memory_space<vmem>>, %arg2: memref<512x64xbf16, #tpu.memory_space<vmem>>, %arg3: memref<64x64xbf16, #tpu.memory_space<vmem>>, %arg4: memref<64x64xbf16, #tpu.memory_space<vmem>>, %arg5: memref<1x64xf32, #tpu.memory_space<vmem>>, %arg6: memref<64x64xbf16, #tpu.memory_space<vmem>>, %arg7: memref<1x64xf32, #tpu.memory_space<vmem>>, %arg8: memref<64x64xbf16, #tpu.memory_space<vmem>>, %arg9: memref<1x64xf32, #tpu.memory_space<vmem>>, %arg10: memref<8x64xbf16, #tpu.memory_space<vmem>>, %arg11: memref<8x64xbf16, #tpu.memory_space<vmem>>, %arg12: memref<1x1xf32, #tpu.memory_space<vmem>>, %arg13: memref<8x512xf32, #tpu.memory_space<vmem>>) attributes {dimension_semantics = [#tpu.dimension_semantics<parallel>], iteration_bounds = array<i64: 2>, scalar_prefetch = 0 : i64, scratch_operands = 0 : i64, tpu.core_type = #tpu.core_type<tc>, window_params = [{transform_indices = @transform_0, window_bounds = array<i64: 512, 64>}, {transform_indices = @transform_1, window_bounds = array<i64: 512, 64>}, {pipeline_mode = #tpu.pipeline_mode<synchronous>, transform_indices = @transform_2, window_bounds = array<i64: 64, 64>}, {pipeline_mode = #tpu.pipeline_mode<synchronous>, transform_indices = @transform_3, window_bounds = array<i64: 64, 64>}, {pipeline_mode = #tpu.pipeline_mode<synchronous>, transform_indices = @transform_4, window_bounds = array<i64: 1, 64>}, {pipeline_mode = #tpu.pipeline_mode<synchronous>, transform_indices = @transform_5, window_bounds = array<i64: 64, 64>}, {pipeline_mode = #tpu.pipeline_mode<synchronous>, transform_indices = @transform_6, window_bounds = array<i64: 1, 64>}, {pipeline_mode = #tpu.pipeline_mode<synchronous>, transform_indices = @transform_7, window_bounds = array<i64: 64, 64>}, {pipeline_mode = #tpu.pipeline_mode<synchronous>, transform_indices = @transform_8, window_bounds = array<i64: 1, 64>}, {pipeline_mode = #tpu.pipeline_mode<synchronous>, transform_indices = @transform_9, window_bounds = array<i64: 8, 64>}, {pipeline_mode = #tpu.pipeline_mode<synchronous>, transform_indices = @transform_10, window_bounds = array<i64: 8, 64>}, {pipeline_mode = #tpu.pipeline_mode<synchronous>, transform_indices = @transform_11, window_bounds = array<i64: 1, 1>}, {transform_indices = @transform_12, window_bounds = array<i64: 8, 512>}]} {
    %c0 = arith.constant 0 : index
    %c0_0 = arith.constant 0 : index
    %0 = vector.load %arg1[%c0, %c0_0] : memref<512x64xbf16, #tpu.memory_space<vmem>>, vector<512x64xbf16>
    %c0_1 = arith.constant 0 : index
    %c0_2 = arith.constant 0 : index
    %1 = vector.load %arg2[%c0_1, %c0_2] : memref<512x64xbf16, #tpu.memory_space<vmem>>, vector<512x64xbf16>
    %2 = arith.extf %0 : vector<512x64xbf16> to vector<512x64xf32>
    %3 = arith.extf %1 : vector<512x64xbf16> to vector<512x64xf32>
    %4 = arith.mulf %2, %3 : vector<512x64xf32>
    %c0_3 = arith.constant 0 : index
    %c0_4 = arith.constant 0 : index
    %5 = vector.load %arg10[%c0_3, %c0_4] : memref<8x64xbf16, #tpu.memory_space<vmem>>, vector<8x64xbf16>
    %6 = arith.truncf %4 : vector<512x64xf32> to vector<512x64xbf16>
    %cst = arith.constant dense<0.000000e+00> : vector<8x512xf32>
    %7 = tpu.matmul %5, %6, %cst {dimension_numbers = #tpu.dot_dimension_numbers<[1], [1], [0], [0], [0, 0, 1, 0], [], []>} : vector<8x64xbf16>, vector<512x64xbf16>, vector<8x512xf32> -> vector<8x512xf32>
    %c0_5 = arith.constant 0 : index
    %c0_6 = arith.constant 0 : index
    %8 = vector.load %arg3[%c0_5, %c0_6] : memref<64x64xbf16, #tpu.memory_space<vmem>>, vector<64x64xbf16>
    %cst_7 = arith.constant dense<0.000000e+00> : vector<512x64xf32>
    %9 = tpu.matmul %0, %8, %cst_7 {dimension_numbers = #tpu.dot_dimension_numbers<[1], [0], [0], [1], [0, 0, 1, 1], [], []>} : vector<512x64xbf16>, vector<64x64xbf16>, vector<512x64xf32> -> vector<512x64xf32>
    %c0_8 = arith.constant 0 : index
    %c0_9 = arith.constant 0 : index
    %10 = vector.load %arg4[%c0_8, %c0_9] : memref<64x64xbf16, #tpu.memory_space<vmem>>, vector<64x64xbf16>
    %cst_10 = arith.constant dense<0.000000e+00> : vector<512x64xf32>
    %11 = tpu.matmul %1, %10, %cst_10 {dimension_numbers = #tpu.dot_dimension_numbers<[1], [0], [0], [1], [0, 0, 1, 1], [], []>} : vector<512x64xbf16>, vector<64x64xbf16>, vector<512x64xf32> -> vector<512x64xf32>
    %12 = arith.addf %9, %11 : vector<512x64xf32>
    %c0_11 = arith.constant 0 : index
    %c0_12 = arith.constant 0 : index
    %13 = vector.load %arg5[%c0_11, %c0_12] : memref<1x64xf32, #tpu.memory_space<vmem>>, vector<1x64xf32>
    %14 = vector.broadcast %13 : vector<1x64xf32> to vector<512x64xf32>
    %15 = arith.addf %12, %14 : vector<512x64xf32>
    %cst_13 = arith.constant 0.000000e+00 : f32
    %16 = vector.broadcast %cst_13 : f32 to vector<512x64xf32>
    %17 = arith.maximumf %15, %16 : vector<512x64xf32>
    %c0_14 = arith.constant 0 : index
    %c0_15 = arith.constant 0 : index
    %18 = vector.load %arg6[%c0_14, %c0_15] : memref<64x64xbf16, #tpu.memory_space<vmem>>, vector<64x64xbf16>
    %c0_16 = arith.constant 0 : index
    %c0_17 = arith.constant 0 : index
    %19 = vector.load %arg7[%c0_16, %c0_17] : memref<1x64xf32, #tpu.memory_space<vmem>>, vector<1x64xf32>
    %20 = arith.truncf %17 : vector<512x64xf32> to vector<512x64xbf16>
    %cst_18 = arith.constant dense<0.000000e+00> : vector<512x64xf32>
    %21 = tpu.matmul %20, %18, %cst_18 {dimension_numbers = #tpu.dot_dimension_numbers<[1], [0], [0], [1], [0, 0, 1, 1], [], []>} : vector<512x64xbf16>, vector<64x64xbf16>, vector<512x64xf32> -> vector<512x64xf32>
    %22 = vector.broadcast %19 : vector<1x64xf32> to vector<512x64xf32>
    %23 = arith.addf %21, %22 : vector<512x64xf32>
    %cst_19 = arith.constant 0.000000e+00 : f32
    %24 = vector.broadcast %cst_19 : f32 to vector<512x64xf32>
    %25 = arith.maximumf %23, %24 : vector<512x64xf32>
    %c0_20 = arith.constant 0 : index
    %c0_21 = arith.constant 0 : index
    %26 = vector.load %arg8[%c0_20, %c0_21] : memref<64x64xbf16, #tpu.memory_space<vmem>>, vector<64x64xbf16>
    %c0_22 = arith.constant 0 : index
    %c0_23 = arith.constant 0 : index
    %27 = vector.load %arg9[%c0_22, %c0_23] : memref<1x64xf32, #tpu.memory_space<vmem>>, vector<1x64xf32>
    %28 = arith.truncf %25 : vector<512x64xf32> to vector<512x64xbf16>
    %cst_24 = arith.constant dense<0.000000e+00> : vector<512x64xf32>
    %29 = tpu.matmul %28, %26, %cst_24 {dimension_numbers = #tpu.dot_dimension_numbers<[1], [0], [0], [1], [0, 0, 1, 1], [], []>} : vector<512x64xbf16>, vector<64x64xbf16>, vector<512x64xf32> -> vector<512x64xf32>
    %30 = vector.broadcast %27 : vector<1x64xf32> to vector<512x64xf32>
    %31 = arith.addf %29, %30 : vector<512x64xf32>
    %cst_25 = arith.constant 0.000000e+00 : f32
    %32 = vector.broadcast %cst_25 : f32 to vector<512x64xf32>
    %33 = arith.maximumf %31, %32 : vector<512x64xf32>
    %c0_26 = arith.constant 0 : index
    %c0_27 = arith.constant 0 : index
    %34 = vector.load %arg11[%c0_26, %c0_27] : memref<8x64xbf16, #tpu.memory_space<vmem>>, vector<8x64xbf16>
    %35 = arith.truncf %33 : vector<512x64xf32> to vector<512x64xbf16>
    %cst_28 = arith.constant dense<0.000000e+00> : vector<8x512xf32>
    %36 = tpu.matmul %34, %35, %cst_28 {dimension_numbers = #tpu.dot_dimension_numbers<[1], [1], [0], [0], [0, 0, 1, 0], [], []>} : vector<8x64xbf16>, vector<512x64xbf16>, vector<8x512xf32> -> vector<8x512xf32>
    %37 = arith.addf %7, %36 : vector<8x512xf32>
    %c0_29 = arith.constant 0 : index
    %c0_30 = arith.constant 0 : index
    %38 = vector.load %arg12[%c0_29, %c0_30] : memref<1x1xf32, #tpu.memory_space<vmem>>, vector<1x1xf32>
    %39 = vector.broadcast %38 : vector<1x1xf32> to vector<8x512xf32>
    %40 = arith.addf %37, %39 : vector<8x512xf32>
    %c0_31 = arith.constant 0 : index
    %c0_32 = arith.constant 0 : index
    %41 = vector.load %arg13[%c0_31, %c0_32] : memref<8x512xf32, #tpu.memory_space<vmem>>, vector<8x512xf32>
    tpu.vector_store %arg13[%c0_31, %c0_32], %40 {strides = array<i32>} : memref<8x512xf32, #tpu.memory_space<vmem>>, vector<8x512xf32>,
    return
  }
  func.func @transform_0(%arg0: i32) -> (i32, i32) {
    %c0_i32 = arith.constant 0 : i32
    %c0_i32_0 = arith.constant 0 : i32
    return %arg0, %c0_i32 : i32, i32
  }
  func.func @transform_1(%arg0: i32) -> (i32, i32) {
    %c0_i32 = arith.constant 0 : i32
    %c0_i32_0 = arith.constant 0 : i32
    return %arg0, %c0_i32 : i32, i32
  }
  func.func @transform_2(%arg0: i32) -> (i32, i32) {
    %c0_i32 = arith.constant 0 : i32
    %c0_i32_0 = arith.constant 0 : i32
    %c0_i32_1 = arith.constant 0 : i32
    return %c0_i32, %c0_i32_0 : i32, i32
  }
  func.func @transform_3(%arg0: i32) -> (i32, i32) {
    %c0_i32 = arith.constant 0 : i32
    %c0_i32_0 = arith.constant 0 : i32
    %c0_i32_1 = arith.constant 0 : i32
    return %c0_i32, %c0_i32_0 : i32, i32
  }
  func.func @transform_4(%arg0: i32) -> (i32, i32) {
    %c0_i32 = arith.constant 0 : i32
    %c0_i32_0 = arith.constant 0 : i32
    %c0_i32_1 = arith.constant 0 : i32
    return %c0_i32, %c0_i32_0 : i32, i32
  }
  func.func @transform_5(%arg0: i32) -> (i32, i32) {
    %c0_i32 = arith.constant 0 : i32
    %c0_i32_0 = arith.constant 0 : i32
    %c0_i32_1 = arith.constant 0 : i32
    return %c0_i32, %c0_i32_0 : i32, i32
  }
  func.func @transform_6(%arg0: i32) -> (i32, i32) {
    %c0_i32 = arith.constant 0 : i32
    %c0_i32_0 = arith.constant 0 : i32
    %c0_i32_1 = arith.constant 0 : i32
    return %c0_i32, %c0_i32_0 : i32, i32
  }
  func.func @transform_7(%arg0: i32) -> (i32, i32) {
    %c0_i32 = arith.constant 0 : i32
    %c0_i32_0 = arith.constant 0 : i32
    %c0_i32_1 = arith.constant 0 : i32
    return %c0_i32, %c0_i32_0 : i32, i32
  }
  func.func @transform_8(%arg0: i32) -> (i32, i32) {
    %c0_i32 = arith.constant 0 : i32
    %c0_i32_0 = arith.constant 0 : i32
    %c0_i32_1 = arith.constant 0 : i32
    return %c0_i32, %c0_i32_0 : i32, i32
  }
  func.func @transform_9(%arg0: i32) -> (i32, i32) {
    %c0_i32 = arith.constant 0 : i32
    %c0_i32_0 = arith.constant 0 : i32
    %c0_i32_1 = arith.constant 0 : i32
    return %c0_i32, %c0_i32_0 : i32, i32
  }
  func.func @transform_10(%arg0: i32) -> (i32, i32) {
    %c0_i32 = arith.constant 0 : i32
    %c0_i32_0 = arith.constant 0 : i32
    %c0_i32_1 = arith.constant 0 : i32
    return %c0_i32, %c0_i32_0 : i32, i32
  }
  func.func @transform_11(%arg0: i32) -> (i32, i32) {
    %c0_i32 = arith.constant 0 : i32
    %c0_i32_0 = arith.constant 0 : i32
    %c0_i32_1 = arith.constant 0 : i32
    return %c0_i32, %c0_i32_0 : i32, i32
  }
  func.func @transform_12(%arg0: i32) -> (i32, i32) {
    %c0_i32 = arith.constant 0 : i32
    %c0_i32_0 = arith.constant 0 : i32
    return %c0_i32, %arg0 : i32, i32
  }
}

</mosaic_0001>

<llo_original>
// kernel: tpu_custom_call.1
$region0: #{tpu_custom_call.1}
  #allocation0 [shape = 'u32[]', space=smem, size = 0x4, offset = 0x4, fixed_abs, tag = 'smem constant byte address 0x4 - core index']
  #allocation1 [shape = 'u32[144,128]{1,0:T(1,128)}', space=vmem, size = 0x12000, scoped, tag = 'internal scratch']
  #allocation2 [shape = 'f32[1,1]{1,0:T(1,128)S(1)}', space=vmem, size = 0x200, scoped, tag = 'scoped memory for tpu_custom_call.1']
  %s0 = inlined_call_operand.vmem [shape: bf16[1024,64], index: 0, kind: input, shape index: {}]
  %s1 = inlined_call_operand.vmem [shape: bf16[1024,64], index: 1, kind: input, shape index: {}]
  %s2 = inlined_call_operand.vmem [shape: bf16[64,64], index: 2, kind: input, shape index: {}]
  %s3 = inlined_call_operand.vmem [shape: bf16[64,64], index: 3, kind: input, shape index: {}]
  %s4 = inlined_call_operand.vmem [shape: f32[1,64], index: 4, kind: input, shape index: {}]
  %s5 = inlined_call_operand.vmem [shape: bf16[64,64], index: 5, kind: input, shape index: {}]
  %s6 = inlined_call_operand.vmem [shape: f32[1,64], index: 6, kind: input, shape index: {}]
  %s7 = inlined_call_operand.vmem [shape: bf16[64,64], index: 7, kind: input, shape index: {}]
  %s8 = inlined_call_operand.vmem [shape: f32[1,64], index: 8, kind: input, shape index: {}]
  %s9 = inlined_call_operand.vmem [shape: bf16[8,64], index: 9, kind: input, shape index: {}]
  %s10 = inlined_call_operand.vmem [shape: bf16[8,64], index: 10, kind: input, shape index: {}]
  %s11 = inlined_call_operand.<no memory space> [shape: f32[1,1], index: 11, kind: input, shape index: {}]
  %s12 = inlined_call_operand.hbm [shape: f32[8,1024], index: 12, kind: output, shape index: {}]
  %s13 = sld [smem:[#allocation0]]
  $region81: #{tpu_custom_call.1} parent=0
    _
  %s15 = ssub.s32 1, %s13
  %s16 = scalar_select 0, %s15, %s13
  %v17 = vstv %s11
  %18 = vst [vmem:[#allocation2] sm:$0x1] %v17
  $region1: #{tpu_custom_call.1} parent=0
    #allocation3 [shape = 'u8[32768]{0}', space=vmem, size = 0x8000, scoped, tag = 'output window, operand 0']
    #allocation4 [shape = 's32[2]{0}', space=sflag, size = 0x8, scoped, tag = 'scoped memory for tpu_custom_call.1']
    %19 = vsyncpa [#allocation4], 0
    %s20 = scalar_lea.sflag [#allocation4], 1
    %21 = vsyncpa %s20, 0
    loop: start=0, step=1, limit=4
    $region2: #{tpu_custom_call.1} parent=1 // loop_pre_header
      _
    $region3: #{tpu_custom_call.1} parent=1 // loop_header
      %s23 = sphi 0, %s27
      %p24 = scmp.ge.s32.totalorder %s23, 4
      %s33 = sphi 0, %s35
      %s36 = sphi 0, %s33
      %s37 = sphi 0, %s36
      %s53 = sphi 0, %s37
      %s59 = sphi 0, %s61
      %s62 = sphi 0, %s59
      %s63 = sphi 0, %s62
      %s79 = sphi 0, %s63
      %s83 = sphi 0, %s83
      %s85 = sphi 0, %s83
      %s86 = sphi 0, %s85
      %s100 = sphi 0, %s86
      %s104 = sphi 0, %s104
      %s106 = sphi 0, %s104
      %s107 = sphi 0, %s106
      %s121 = sphi 0, %s107
      %s125 = sphi 0, %s125
      %s127 = sphi 0, %s125
      %s128 = sphi 0, %s127
      %s142 = sphi 0, %s128
      %s146 = sphi 0, %s146
      %s148 = sphi 0, %s146
      %s149 = sphi 0, %s148
      %s163 = sphi 0, %s149
      %s167 = sphi 0, %s167
      %s169 = sphi 0, %s167
      %s170 = sphi 0, %s169
      %s184 = sphi 0, %s170
      %s188 = sphi 0, %s188
      %s190 = sphi 0, %s188
      %s191 = sphi 0, %s190
      %s205 = sphi 0, %s191
      %s209 = sphi 0, %s209
      %s211 = sphi 0, %s209
      %s212 = sphi 0, %s211
      %s226 = sphi 0, %s212
      %s230 = sphi 0, %s230
      %s232 = sphi 0, %s230
      %s233 = sphi 0, %s232
      %s247 = sphi 0, %s233
      %s251 = sphi 0, %s251
      %s253 = sphi 0, %s251
      %s254 = sphi 0, %s253
      %s268 = sphi 0, %s254
      %s272 = sphi 0, %s272
      %s274 = sphi 0, %s272
      %s275 = sphi 0, %s274
      %s289 = sphi 0, %s275
      %s295 = sphi 0, %s297
      %s298 = sphi 0, %s295
      %s299 = sphi 0, %s298
      %s315 = sphi 0, %s299
    $region4: #{tpu_custom_call.1} parent=1 // loop_header_branch
      %26 = sbr.rel (%p24) target = $region8
    $region5: #{tpu_custom_call.1} parent=1 // loop_body
      %s28 = ssub.s32 %s23, 1
      %s29 = ssub.s32 %s23, 2
      %s30 = sadd.s32 %s23, 1
      %s31 = ssub.s32 %s23, %s30
      %p32 = scmp.eq.s32.totalorder %s31, 0
      %s34 = sadd.s32 %s33, 1
      %s35 = scalar_select %p32, %s33, %s34
      %p38 = pneg %p32
      %p39 = scmp.eq.s32.totalorder %s23, 1
      %p40 = por %p38, %p39
      %p41 = scmp.ne.s32.totalorder %s33, %s36
      %p42 = scmp.eq.s32.totalorder %s23, 0
      %p43 = por %p41, %p42
      %p44 = scmp.ne.s32.totalorder %s33, %s36
      %p45 = scmp.eq.s32.totalorder %s28, 1
      %p46 = por %p44, %p45
      %p47 = scmp.ne.s32.totalorder %s36, %s37
      %p48 = scmp.eq.s32.totalorder %s28, 0
      %p49 = por %p47, %p48
      %p50 = scmp.ne.s32.totalorder %s36, %s37
      %p51 = scmp.eq.s32.totalorder %s29, 1
      %p52 = por %p50, %p51
      %p54 = scmp.ne.s32.totalorder %s37, %s53
      %p55 = scmp.eq.s32.totalorder %s29, 0
      %p56 = por %p54, %p55
      %s57 = ssub.s32 %s23, %s30
      %p58 = scmp.eq.s32.totalorder %s57, 0
      %s60 = sadd.s32 %s59, 1
      %s61 = scalar_select %p58, %s59, %s60
      %p64 = pneg %p58
      %p65 = scmp.eq.s32.totalorder %s23, 1
      %p66 = por %p64, %p65
      %p67 = scmp.ne.s32.totalorder %s59, %s62
      %p68 = scmp.eq.s32.totalorder %s23, 0
      %p69 = por %p67, %p68
      %p70 = scmp.ne.s32.totalorder %s59, %s62
      %p71 = scmp.eq.s32.totalorder %s28, 1
      %p72 = por %p70, %p71
      %p73 = scmp.ne.s32.totalorder %s62, %s63
      %p74 = scmp.eq.s32.totalorder %s28, 0
      %p75 = por %p73, %p74
      %p76 = scmp.ne.s32.totalorder %s62, %s63
      %p77 = scmp.eq.s32.totalorder %s29, 1
      %p78 = por %p76, %p77
      %p80 = scmp.ne.s32.totalorder %s63, %s79
      %p81 = scmp.eq.s32.totalorder %s29, 0
      %p82 = por %p80, %p81
      %s84 = sadd.s32 %s83, 1
      %p87 = scmp.eq.s32.totalorder %s23, 1
      %p88 = scmp.ne.s32.totalorder %s83, %s85
      %p89 = scmp.eq.s32.totalorder %s23, 0
      %p90 = por %p88, %p89
      %p91 = scmp.ne.s32.totalorder %s83, %s85
      %p92 = scmp.eq.s32.totalorder %s28, 1
      %p93 = por %p91, %p92
      %p94 = scmp.ne.s32.totalorder %s85, %s86
      %p95 = scmp.eq.s32.totalorder %s28, 0
      %p96 = por %p94, %p95
      %p97 = scmp.ne.s32.totalorder %s85, %s86
      %p98 = scmp.eq.s32.totalorder %s29, 1
      %p99 = por %p97, %p98
      %p101 = scmp.ne.s32.totalorder %s86, %s100
      %p102 = scmp.eq.s32.totalorder %s29, 0
      %p103 = por %p101, %p102
      %s105 = sadd.s32 %s104, 1
      %p108 = scmp.eq.s32.totalorder %s23, 1
      %p109 = scmp.ne.s32.totalorder %s104, %s106
      %p110 = scmp.eq.s32.totalorder %s23, 0
      %p111 = por %p109, %p110
      %p112 = scmp.ne.s32.totalorder %s104, %s106
      %p113 = scmp.eq.s32.totalorder %s28, 1
      %p114 = por %p112, %p113
      %p115 = scmp.ne.s32.totalorder %s106, %s107
      %p116 = scmp.eq.s32.totalorder %s28, 0
      %p117 = por %p115, %p116
      %p118 = scmp.ne.s32.totalorder %s106, %s107
      %p119 = scmp.eq.s32.totalorder %s29, 1
      %p120 = por %p118, %p119
      %p122 = scmp.ne.s32.totalorder %s107, %s121
      %p123 = scmp.eq.s32.totalorder %s29, 0
      %p124 = por %p122, %p123
      %s126 = sadd.s32 %s125, 1
      %p129 = scmp.eq.s32.totalorder %s23, 1
      %p130 = scmp.ne.s32.totalorder %s125, %s127
      %p131 = scmp.eq.s32.totalorder %s23, 0
      %p132 = por %p130, %p131
      %p133 = scmp.ne.s32.totalorder %s125, %s127
      %p134 = scmp.eq.s32.totalorder %s28, 1
      %p135 = por %p133, %p134
      %p136 = scmp.ne.s32.totalorder %s127, %s128
      %p137 = scmp.eq.s32.totalorder %s28, 0
      %p138 = por %p136, %p137
      %p139 = scmp.ne.s32.totalorder %s127, %s128
      %p140 = scmp.eq.s32.totalorder %s29, 1
      %p141 = por %p139, %p140
      %p143 = scmp.ne.s32.totalorder %s128, %s142
      %p144 = scmp.eq.s32.totalorder %s29, 0
      %p145 = por %p143, %p144
      %s147 = sadd.s32 %s146, 1
      %p150 = scmp.eq.s32.totalorder %s23, 1
      %p151 = scmp.ne.s32.totalorder %s146, %s148
      %p152 = scmp.eq.s32.totalorder %s23, 0
      %p153 = por %p151, %p152
      %p154 = scmp.ne.s32.totalorder %s146, %s148
      %p155 = scmp.eq.s32.totalorder %s28, 1
      %p156 = por %p154, %p155
      %p157 = scmp.ne.s32.totalorder %s148, %s149
      %p158 = scmp.eq.s32.totalorder %s28, 0
      %p159 = por %p157, %p158
      %p160 = scmp.ne.s32.totalorder %s148, %s149
      %p161 = scmp.eq.s32.totalorder %s29, 1
      %p162 = por %p160, %p161
      %p164 = scmp.ne.s32.totalorder %s149, %s163
      %p165 = scmp.eq.s32.totalorder %s29, 0
      %p166 = por %p164, %p165
      %s168 = sadd.s32 %s167, 1
      %p171 = scmp.eq.s32.totalorder %s23, 1
      %p172 = scmp.ne.s32.totalorder %s167, %s169
      %p173 = scmp.eq.s32.totalorder %s23, 0
      %p174 = por %p172, %p173
      %p175 = scmp.ne.s32.totalorder %s167, %s169
      %p176 = scmp.eq.s32.totalorder %s28, 1
      %p177 = por %p175, %p176
      %p178 = scmp.ne.s32.totalorder %s169, %s170
      %p179 = scmp.eq.s32.totalorder %s28, 0
      %p180 = por %p178, %p179
      %p181 = scmp.ne.s32.totalorder %s169, %s170
      %p182 = scmp.eq.s32.totalorder %s29, 1
      %p183 = por %p181, %p182
      %p185 = scmp.ne.s32.totalorder %s170, %s184
      %p186 = scmp.eq.s32.totalorder %s29, 0
      %p187 = por %p185, %p186
      %s189 = sadd.s32 %s188, 1
      %p192 = scmp.eq.s32.totalorder %s23, 1
      %p193 = scmp.ne.s32.totalorder %s188, %s190
      %p194 = scmp.eq.s32.totalorder %s23, 0
      %p195 = por %p193, %p194
      %p196 = scmp.ne.s32.totalorder %s188, %s190
      %p197 = scmp.eq.s32.totalorder %s28, 1
      %p198 = por %p196, %p197
      %p199 = scmp.ne.s32.totalorder %s190, %s191
      %p200 = scmp.eq.s32.totalorder %s28, 0
      %p201 = por %p199, %p200
      %p202 = scmp.ne.s32.totalorder %s190, %s191
      %p203 = scmp.eq.s32.totalorder %s29, 1
      %p204 = por %p202, %p203
      %p206 = scmp.ne.s32.totalorder %s191, %s205
      %p207 = scmp.eq.s32.totalorder %s29, 0
      %p208 = por %p206, %p207
      %s210 = sadd.s32 %s209, 1
      %p213 = scmp.eq.s32.totalorder %s23, 1
      %p214 = scmp.ne.s32.totalorder %s209, %s211
      %p215 = scmp.eq.s32.totalorder %s23, 0
      %p216 = por %p214, %p215
      %p217 = scmp.ne.s32.totalorder %s209, %s211
      %p218 = scmp.eq.s32.totalorder %s28, 1
      %p219 = por %p217, %p218
      %p220 = scmp.ne.s32.totalorder %s211, %s212
      %p221 = scmp.eq.s32.totalorder %s28, 0
      %p222 = por %p220, %p221
      %p223 = scmp.ne.s32.totalorder %s211, %s212
      %p224 = scmp.eq.s32.totalorder %s29, 1
      %p225 = por %p223, %p224
      %p227 = scmp.ne.s32.totalorder %s212, %s226
      %p228 = scmp.eq.s32.totalorder %s29, 0
      %p229 = por %p227, %p228
      %s231 = sadd.s32 %s230, 1
      %p234 = scmp.eq.s32.totalorder %s23, 1
      %p235 = scmp.ne.s32.totalorder %s230, %s232
      %p236 = scmp.eq.s32.totalorder %s23, 0
      %p237 = por %p235, %p236
      %p238 = scmp.ne.s32.totalorder %s230, %s232
      %p239 = scmp.eq.s32.totalorder %s28, 1
      %p240 = por %p238, %p239
      %p241 = scmp.ne.s32.totalorder %s232, %s233
      %p242 = scmp.eq.s32.totalorder %s28, 0
      %p243 = por %p241, %p242
      %p244 = scmp.ne.s32.totalorder %s232, %s233
      %p245 = scmp.eq.s32.totalorder %s29, 1
      %p246 = por %p244, %p245
      %p248 = scmp.ne.s32.totalorder %s233, %s247
      %p249 = scmp.eq.s32.totalorder %s29, 0
      %p250 = por %p248, %p249
      %s252 = sadd.s32 %s251, 1
      %p255 = scmp.eq.s32.totalorder %s23, 1
      %p256 = scmp.ne.s32.totalorder %s251, %s253
      %p257 = scmp.eq.s32.totalorder %s23, 0
      %p258 = por %p256, %p257
      %p259 = scmp.ne.s32.totalorder %s251, %s253
      %p260 = scmp.eq.s32.totalorder %s28, 1
      %p261 = por %p259, %p260
      %p262 = scmp.ne.s32.totalorder %s253, %s254
      %p263 = scmp.eq.s32.totalorder %s28, 0
      %p264 = por %p262, %p263
      %p265 = scmp.ne.s32.totalorder %s253, %s254
      %p266 = scmp.eq.s32.totalorder %s29, 1
      %p267 = por %p265, %p266
      %p269 = scmp.ne.s32.totalorder %s254, %s268
      %p270 = scmp.eq.s32.totalorder %s29, 0
      %p271 = por %p269, %p270
      %s273 = sadd.s32 %s272, 1
      %p276 = scmp.eq.s32.totalorder %s23, 1
      %p277 = scmp.ne.s32.totalorder %s272, %s274
      %p278 = scmp.eq.s32.totalorder %s23, 0
      %p279 = por %p277, %p278
      %p280 = scmp.ne.s32.totalorder %s272, %s274
      %p281 = scmp.eq.s32.totalorder %s28, 1
      %p282 = por %p280, %p281
      %p283 = scmp.ne.s32.totalorder %s274, %s275
      %p284 = scmp.eq.s32.totalorder %s28, 0
      %p285 = por %p283, %p284
      %p286 = scmp.ne.s32.totalorder %s274, %s275
      %p287 = scmp.eq.s32.totalorder %s29, 1
      %p288 = por %p286, %p287
      %p290 = scmp.ne.s32.totalorder %s275, %s289
      %p291 = scmp.eq.s32.totalorder %s29, 0
      %p292 = por %p290, %p291
      %s293 = ssub.s32 %s23, %s30
      %p294 = scmp.eq.s32.totalorder %s293, 0
      %s296 = sadd.s32 %s295, 1
      %s297 = scalar_select %p294, %s295, %s296
      %p300 = pneg %p294
      %p301 = scmp.eq.s32.totalorder %s23, 1
      %p302 = por %p300, %p301
      %p303 = scmp.ne.s32.totalorder %s295, %s298
      %p304 = scmp.eq.s32.totalorder %s23, 0
      %p305 = por %p303, %p304
      %p306 = scmp.ne.s32.totalorder %s295, %s298
      %p307 = scmp.eq.s32.totalorder %s28, 1
      %p308 = por %p306, %p307
      %p309 = scmp.ne.s32.totalorder %s298, %s299
      %p310 = scmp.eq.s32.totalorder %s28, 0
      %p311 = por %p309, %p310
      %p312 = scmp.ne.s32.totalorder %s298, %s299
      %p313 = scmp.eq.s32.totalorder %s29, 1
      %p314 = por %p312, %p313
      %p316 = scmp.ne.s32.totalorder %s299, %s315
      %p317 = scmp.eq.s32.totalorder %s29, 0
      %p318 = por %p316, %p317
      %p319 = scmp.le.s32.totalorder 1, %s23
      %p320 = scmp.lt.s32.totalorder %s23, 3
      %p321 = pnand %p319, %p320
      %p322 = pneg %p321
      // Predicated region
      $region9: #{tpu_custom_call.1} parent=5 // pred_check
        _
      $region10: #{tpu_custom_call.1} parent=5 // pred_check_branch
        %324 = sbr.rel (%p321) target = $region12
      $region11: #{tpu_custom_call.1} parent=5 // pred_region
        %s325 = ssub.s32 %s23, 1
        // Predicated region
        $region13: #{tpu_custom_call.1} parent=11 // pred_check
          %p326 = pneg %p96
        $region14: #{tpu_custom_call.1} parent=11 // pred_check_branch
          %328 = sbr.rel (%p326) target = $region16
        $region15: #{tpu_custom_call.1} parent=11 // pred_region
          _
        $region16: #{tpu_custom_call.1} parent=11 // pred_fallthru
          _
        // Predicated region
        $region17: #{tpu_custom_call.1} parent=11 // pred_check
          %p329 = pneg %p117
        $region18: #{tpu_custom_call.1} parent=11 // pred_check_branch
          %331 = sbr.rel (%p329) target = $region20
        $region19: #{tpu_custom_call.1} parent=11 // pred_region
          _
        $region20: #{tpu_custom_call.1} parent=11 // pred_fallthru
          _
        // Predicated region
        $region21: #{tpu_custom_call.1} parent=11 // pred_check
          %p332 = pneg %p138
        $region22: #{tpu_custom_call.1} parent=11 // pred_check_branch
          %334 = sbr.rel (%p332) target = $region24
        $region23: #{tpu_custom_call.1} parent=11 // pred_region
          _
        $region24: #{tpu_custom_call.1} parent=11 // pred_fallthru
          _
        // Predicated region
        $region25: #{tpu_custom_call.1} parent=11 // pred_check
          %p335 = pneg %p159
        $region26: #{tpu_custom_call.1} parent=11 // pred_check_branch
          %337 = sbr.rel (%p335) target = $region28
        $region27: #{tpu_custom_call.1} parent=11 // pred_region
          _
        $region28: #{tpu_custom_call.1} parent=11 // pred_fallthru
          _
        // Predicated region
        $region29: #{tpu_custom_call.1} parent=11 // pred_check
          %p338 = pneg %p180
        $region30: #{tpu_custom_call.1} parent=11 // pred_check_branch
          %340 = sbr.rel (%p338) target = $region32
        $region31: #{tpu_custom_call.1} parent=11 // pred_region
          _
        $region32: #{tpu_custom_call.1} parent=11 // pred_fallthru
          _
        // Predicated region
        $region33: #{tpu_custom_call.1} parent=11 // pred_check
          %p341 = pneg %p201
        $region34: #{tpu_custom_call.1} parent=11 // pred_check_branch
          %343 = sbr.rel (%p341) target = $region36
        $region35: #{tpu_custom_call.1} parent=11 // pred_region
          _
        $region36: #{tpu_custom_call.1} parent=11 // pred_fallthru
          _
        // Predicated region
        $region37: #{tpu_custom_call.1} parent=11 // pred_check
          %p344 = pneg %p222
        $region38: #{tpu_custom_call.1} parent=11 // pred_check_branch
          %346 = sbr.rel (%p344) target = $region40
        $region39: #{tpu_custom_call.1} parent=11 // pred_region
          _
        $region40: #{tpu_custom_call.1} parent=11 // pred_fallthru
          _
        // Predicated region
        $region41: #{tpu_custom_call.1} parent=11 // pred_check
          %p347 = pneg %p243
        $region42: #{tpu_custom_call.1} parent=11 // pred_check_branch
          %349 = sbr.rel (%p347) target = $region44
        $region43: #{tpu_custom_call.1} parent=11 // pred_region
          _
        $region44: #{tpu_custom_call.1} parent=11 // pred_fallthru
          _
        // Predicated region
        $region45: #{tpu_custom_call.1} parent=11 // pred_check
          %p350 = pneg %p264
        $region46: #{tpu_custom_call.1} parent=11 // pred_check_branch
          %352 = sbr.rel (%p350) target = $region48
        $region47: #{tpu_custom_call.1} parent=11 // pred_region
          _
        $region48: #{tpu_custom_call.1} parent=11 // pred_fallthru
          _
        // Predicated region
        $region49: #{tpu_custom_call.1} parent=11 // pred_check
          %p353 = pneg %p285
        $region50: #{tpu_custom_call.1} parent=11 // pred_check_branch
          %355 = sbr.rel (%p353) target = $region52
        $region51: #{tpu_custom_call.1} parent=11 // pred_region
          _
        $region52: #{tpu_custom_call.1} parent=11 // pred_fallthru
          _
      $region12: #{tpu_custom_call.1} parent=5 // pred_fallthru
        _
      %p356 = scmp.lt.s32.totalorder %s23, 2
      // Predicated region
      $region53: #{tpu_custom_call.1} parent=5 // pred_check
        %p357 = pneg %p356
      $region54: #{tpu_custom_call.1} parent=5 // pred_check_branch
        %359 = sbr.rel (%p357) target = $region56
      $region55: #{tpu_custom_call.1} parent=5 // pred_region
        // Predicated region
        $region57: #{tpu_custom_call.1} parent=55 // pred_check
          %p360 = pneg %p43
        $region58: #{tpu_custom_call.1} parent=55 // pred_check_branch
          %362 = sbr.rel (%p360) target = $region60
        $region59: #{tpu_custom_call.1} parent=55 // pred_region
          %s363 = smul.u32 64, %s23
          %p364 = scmp.lt.s32.totalorder %s363, 127
          %s365 = scalar_select %p364, %s363, 127
          %s366 = smul.addr %s365, 4
          %s367 = scalar_lea.vmem %s0, %s366
          %s368 = smul.u32 64, %s23
        $region60: #{tpu_custom_call.1} parent=55 // pred_fallthru
          _
        // Predicated region
        $region61: #{tpu_custom_call.1} parent=55 // pred_check
          %p369 = pneg %p69
        $region62: #{tpu_custom_call.1} parent=55 // pred_check_branch
          %371 = sbr.rel (%p369) target = $region64
        $region63: #{tpu_custom_call.1} parent=55 // pred_region
          %s372 = smul.u32 64, %s23
          %p373 = scmp.lt.s32.totalorder %s372, 127
          %s374 = scalar_select %p373, %s372, 127
          %s375 = smul.addr %s374, 4
          %s376 = scalar_lea.vmem %s1, %s375
          %s377 = smul.u32 64, %s23
        $region64: #{tpu_custom_call.1} parent=55 // pred_fallthru
          _
      $region56: #{tpu_custom_call.1} parent=5 // pred_fallthru
        _
      %p378 = scmp.le.s32.totalorder 1, %s23
      %p379 = scmp.lt.s32.totalorder %s23, 3
      %p380 = pnand %p378, %p379
      %p381 = pneg %p380
      // Predicated region
      $region65: #{tpu_custom_call.1} parent=5 // pred_check
        _
      $region66: #{tpu_custom_call.1} parent=5 // pred_check_branch
        %383 = sbr.rel (%p380) target = $region68
      $region67: #{tpu_custom_call.1} parent=5 // pred_region
        %s384 = ssub.s32 %s23, 1
        %s385 = smul.u32 64, %s28
        %p386 = scmp.lt.s32.totalorder %s385, 127
        %s387 = scalar_select %p386, %s385, 127
        %s388 = smul.addr %s387, 4
        %s389 = scalar_lea.vmem %s0, %s388
        %p390 = pneg %p49
        %p391 = pneg %p46
        %s392 = smul.u32 64, %s28
        %p393 = scmp.lt.s32.totalorder %s392, 127
        %s394 = scalar_select %p393, %s392, 127
        %s395 = smul.addr %s394, 4
        %s396 = scalar_lea.vmem %s1, %s395
        %p397 = pneg %p75
        %p398 = pneg %p72
        %p399 = pneg %p96
        %p400 = pneg %p93
        %p401 = pneg %p117
        %p402 = pneg %p114
        %p403 = pneg %p138
        %p404 = pneg %p135
        %p405 = pneg %p159
        %p406 = pneg %p156
        %p407 = pneg %p180
        %p408 = pneg %p177
        %p409 = pneg %p201
        %p410 = pneg %p198
        %p411 = pneg %p222
        %p412 = pneg %p219
        %p413 = pneg %p243
        %p414 = pneg %p240
        %p415 = pneg %p264
        %p416 = pneg %p261
        %p417 = pneg %p285
        %p418 = pneg %p282
        %p419 = pneg %p311
        %p420 = pneg %p308
        %s421 = sand.u32 %s298, 1
        %s422 = scalar_lea.sflag [#allocation4], %s421
        %s423 = sand.u32 %s298, 1
        %s424 = smul.addr %s423, 32
        %s425 = scalar_lea.vmem [#allocation3], %s424
        %s426 = smul.u32 64, %s28
        %p427 = scmp.lt.s32.totalorder %s426, 127
        %s428 = scalar_select %p427, %s426, 127
        %s429 = smul.addr %s428, 4
        %s430 = scalar_lea.vmem %s0, %s429
        %s431 = smul.u32 64, %s28
        %s432 = smul.u32 64, %s28
        %p433 = scmp.lt.s32.totalorder %s432, 127
        %s434 = scalar_select %p433, %s432, 127
        %s435 = smul.addr %s434, 4
        %s436 = scalar_lea.vmem %s1, %s435
        %s437 = smul.u32 64, %s28
        %s438 = smul.u32 4, %s28
        %v440 = vld [vmem:[%s430] sm:$0xf]
        %v441 = vld [vmem:[%s430 + $0x4] sm:$0xf]
        %v442 = vld [vmem:[%s430 + $0x8] sm:$0xf]
        %v443 = vld [vmem:[%s430 + $0xc] sm:$0xf]
        %v444 = vld [vmem:[%s430 + $0x10] sm:$0xf]
        %v445 = vld [vmem:[%s430 + $0x14] sm:$0xf]
        %v446 = vld [vmem:[%s430 + $0x18] sm:$0xf]
        %v447 = vld [vmem:[%s430 + $0x1c] sm:$0xf]
        %v448 = vld [vmem:[%s430 + $0x20] sm:$0xf]
        %v449 = vld [vmem:[%s430 + $0x24] sm:$0xf]
        %v450 = vld [vmem:[%s430 + $0x28] sm:$0xf]
        %v451 = vld [vmem:[%s430 + $0x2c] sm:$0xf]
        %v452 = vld [vmem:[%s430 + $0x30] sm:$0xf]
        %v453 = vld [vmem:[%s430 + $0x34] sm:$0xf]
        %v454 = vld [vmem:[%s430 + $0x38] sm:$0xf]
        %v455 = vld [vmem:[%s430 + $0x3c] sm:$0xf]
        %v456 = vld [vmem:[%s430 + $0x40] sm:$0xf]
        %v457 = vld [vmem:[%s430 + $0x44] sm:$0xf]
        %v458 = vld [vmem:[%s430 + $0x48] sm:$0xf]
        %v459 = vld [vmem:[%s430 + $0x4c] sm:$0xf]
        %v460 = vld [vmem:[%s430 + $0x50] sm:$0xf]
        %v461 = vld [vmem:[%s430 + $0x54] sm:$0xf]
        %v462 = vld [vmem:[%s430 + $0x58] sm:$0xf]
        %v463 = vld [vmem:[%s430 + $0x5c] sm:$0xf]
        %v464 = vld [vmem:[%s430 + $0x60] sm:$0xf]
        %v465 = vld [vmem:[%s430 + $0x64] sm:$0xf]
        %v466 = vld [vmem:[%s430 + $0x68] sm:$0xf]
        %v467 = vld [vmem:[%s430 + $0x6c] sm:$0xf]
        %v468 = vld [vmem:[%s430 + $0x70] sm:$0xf]
        %v469 = vld [vmem:[%s430 + $0x74] sm:$0xf]
        %v470 = vld [vmem:[%s430 + $0x78] sm:$0xf]
        %v471 = vld [vmem:[%s430 + $0x7c] sm:$0xf]
        %v472 = vld [vmem:[%s430 + $0x80] sm:$0xf]
        %v473 = vld [vmem:[%s430 + $0x84] sm:$0xf]
        %v474 = vld [vmem:[%s430 + $0x88] sm:$0xf]
        %v475 = vld [vmem:[%s430 + $0x8c] sm:$0xf]
        %v476 = vld [vmem:[%s430 + $0x90] sm:$0xf]
        %v477 = vld [vmem:[%s430 + $0x94] sm:$0xf]
        %v478 = vld [vmem:[%s430 + $0x98] sm:$0xf]
        %v479 = vld [vmem:[%s430 + $0x9c] sm:$0xf]
        %v480 = vld [vmem:[%s430 + $0xa0] sm:$0xf]
        %v481 = vld [vmem:[%s430 + $0xa4] sm:$0xf]
        %v482 = vld [vmem:[%s430 + $0xa8] sm:$0xf]
        %v483 = vld [vmem:[%s430 + $0xac] sm:$0xf]
        %v484 = vld [vmem:[%s430 + $0xb0] sm:$0xf]
        %v485 = vld [vmem:[%s430 + $0xb4] sm:$0xf]
        %v486 = vld [vmem:[%s430 + $0xb8] sm:$0xf]
        %v487 = vld [vmem:[%s430 + $0xbc] sm:$0xf]
        %v488 = vld [vmem:[%s430 + $0xc0] sm:$0xf]
        %v489 = vld [vmem:[%s430 + $0xc4] sm:$0xf]
        %v490 = vld [vmem:[%s430 + $0xc8] sm:$0xf]
        %v491 = vld [vmem:[%s430 + $0xcc] sm:$0xf]
        %v492 = vld [vmem:[%s430 + $0xd0] sm:$0xf]
        %v493 = vld [vmem:[%s430 + $0xd4] sm:$0xf]
        %v494 = vld [vmem:[%s430 + $0xd8] sm:$0xf]
        %v495 = vld [vmem:[%s430 + $0xdc] sm:$0xf]
        %v496 = vld [vmem:[%s430 + $0xe0] sm:$0xf]
        %v497 = vld [vmem:[%s430 + $0xe4] sm:$0xf]
        %v498 = vld [vmem:[%s430 + $0xe8] sm:$0xf]
        %v499 = vld [vmem:[%s430 + $0xec] sm:$0xf]
        %v500 = vld [vmem:[%s430 + $0xf0] sm:$0xf]
        %v501 = vld [vmem:[%s430 + $0xf4] sm:$0xf]
        %v502 = vld [vmem:[%s430 + $0xf8] sm:$0xf]
        %v503 = vld [vmem:[%s430 + $0xfc] sm:$0xf]
        %v504 = vld [vmem:[%s436] sm:$0xf]
        %v505 = vld [vmem:[%s436 + $0x4] sm:$0xf]
        %v506 = vld [vmem:[%s436 + $0x8] sm:$0xf]
        %v507 = vld [vmem:[%s436 + $0xc] sm:$0xf]
        %v508 = vld [vmem:[%s436 + $0x10] sm:$0xf]
        %v509 = vld [vmem:[%s436 + $0x14] sm:$0xf]
        %v510 = vld [vmem:[%s436 + $0x18] sm:$0xf]
        %v511 = vld [vmem:[%s436 + $0x1c] sm:$0xf]
        %v512 = vld [vmem:[%s436 + $0x20] sm:$0xf]
        %v513 = vld [vmem:[%s436 + $0x24] sm:$0xf]
        %v514 = vld [vmem:[%s436 + $0x28] sm:$0xf]
        %v515 = vld [vmem:[%s436 + $0x2c] sm:$0xf]
        %v516 = vld [vmem:[%s436 + $0x30] sm:$0xf]
        %v517 = vld [vmem:[%s436 + $0x34] sm:$0xf]
        %v518 = vld [vmem:[%s436 + $0x38] sm:$0xf]
        %v519 = vld [vmem:[%s436 + $0x3c] sm:$0xf]
        %v520 = vld [vmem:[%s436 + $0x40] sm:$0xf]
        %v521 = vld [vmem:[%s436 + $0x44] sm:$0xf]
        %v522 = vld [vmem:[%s436 + $0x48] sm:$0xf]
        %v523 = vld [vmem:[%s436 + $0x4c] sm:$0xf]
        %v524 = vld [vmem:[%s436 + $0x50] sm:$0xf]
        %v525 = vld [vmem:[%s436 + $0x54] sm:$0xf]
        %v526 = vld [vmem:[%s436 + $0x58] sm:$0xf]
        %v527 = vld [vmem:[%s436 + $0x5c] sm:$0xf]
        %v528 = vld [vmem:[%s436 + $0x60] sm:$0xf]
        %v529 = vld [vmem:[%s436 + $0x64] sm:$0xf]
        %v530 = vld [vmem:[%s436 + $0x68] sm:$0xf]
        %v531 = vld [vmem:[%s436 + $0x6c] sm:$0xf]
        %v532 = vld [vmem:[%s436 + $0x70] sm:$0xf]
        %v533 = vld [vmem:[%s436 + $0x74] sm:$0xf]
        %v534 = vld [vmem:[%s436 + $0x78] sm:$0xf]
        %v535 = vld [vmem:[%s436 + $0x7c] sm:$0xf]
        %v536 = vld [vmem:[%s436 + $0x80] sm:$0xf]
        %v537 = vld [vmem:[%s436 + $0x84] sm:$0xf]
        %v538 = vld [vmem:[%s436 + $0x88] sm:$0xf]
        %v539 = vld [vmem:[%s436 + $0x8c] sm:$0xf]
        %v540 = vld [vmem:[%s436 + $0x90] sm:$0xf]
        %v541 = vld [vmem:[%s436 + $0x94] sm:$0xf]
        %v542 = vld [vmem:[%s436 + $0x98] sm:$0xf]
        %v543 = vld [vmem:[%s436 + $0x9c] sm:$0xf]
        %v544 = vld [vmem:[%s436 + $0xa0] sm:$0xf]
        %v545 = vld [vmem:[%s436 + $0xa4] sm:$0xf]
        %v546 = vld [vmem:[%s436 + $0xa8] sm:$0xf]
        %v547 = vld [vmem:[%s436 + $0xac] sm:$0xf]
        %v548 = vld [vmem:[%s436 + $0xb0] sm:$0xf]
        %v549 = vld [vmem:[%s436 + $0xb4] sm:$0xf]
        %v550 = vld [vmem:[%s436 + $0xb8] sm:$0xf]
        %v551 = vld [vmem:[%s436 + $0xbc] sm:$0xf]
        %v552 = vld [vmem:[%s436 + $0xc0] sm:$0xf]
        %v553 = vld [vmem:[%s436 + $0xc4] sm:$0xf]
        %v554 = vld [vmem:[%s436 + $0xc8] sm:$0xf]
        %v555 = vld [vmem:[%s436 + $0xcc] sm:$0xf]
        %v556 = vld [vmem:[%s436 + $0xd0] sm:$0xf]
        %v557 = vld [vmem:[%s436 + $0xd4] sm:$0xf]
        %v558 = vld [vmem:[%s436 + $0xd8] sm:$0xf]
        %v559 = vld [vmem:[%s436 + $0xdc] sm:$0xf]
        %v560 = vld [vmem:[%s436 + $0xe0] sm:$0xf]
        %v561 = vld [vmem:[%s436 + $0xe4] sm:$0xf]
        %v562 = vld [vmem:[%s436 + $0xe8] sm:$0xf]
        %v563 = vld [vmem:[%s436 + $0xec] sm:$0xf]
        %v564 = vld [vmem:[%s436 + $0xf0] sm:$0xf]
        %v565 = vld [vmem:[%s436 + $0xf4] sm:$0xf]
        %v566 = vld [vmem:[%s436 + $0xf8] sm:$0xf]
        %v567 = vld [vmem:[%s436 + $0xfc] sm:$0xf]
        %v568 = vunpack.c.l.bf16 %v440
        %v569 = vunpack.c.l.bf16 %v441
        %v570 = vunpack.c.l.bf16 %v442
        %v571 = vunpack.c.l.bf16 %v443
        %v572 = vunpack.c.l.bf16 %v444
        %v573 = vunpack.c.l.bf16 %v445
        %v574 = vunpack.c.l.bf16 %v446
        %v575 = vunpack.c.l.bf16 %v447
        %v576 = vunpack.c.l.bf16 %v448
        %v577 = vunpack.c.l.bf16 %v449
        %v578 = vunpack.c.l.bf16 %v450
        %v579 = vunpack.c.l.bf16 %v451
        %v580 = vunpack.c.l.bf16 %v452
        %v581 = vunpack.c.l.bf16 %v453
        %v582 = vunpack.c.l.bf16 %v454
        %v583 = vunpack.c.l.bf16 %v455
        %v584 = vunpack.c.l.bf16 %v456
        %v585 = vunpack.c.l.bf16 %v457
        %v586 = vunpack.c.l.bf16 %v458
        %v587 = vunpack.c.l.bf16 %v459
        %v588 = vunpack.c.l.bf16 %v460
        %v589 = vunpack.c.l.bf16 %v461
        %v590 = vunpack.c.l.bf16 %v462
        %v591 = vunpack.c.l.bf16 %v463
        %v592 = vunpack.c.l.bf16 %v464
        %v593 = vunpack.c.l.bf16 %v465
        %v594 = vunpack.c.l.bf16 %v466
        %v595 = vunpack.c.l.bf16 %v467
        %v596 = vunpack.c.l.bf16 %v468
        %v597 = vunpack.c.l.bf16 %v469
        %v598 = vunpack.c.l.bf16 %v470
        %v599 = vunpack.c.l.bf16 %v471
        %v600 = vunpack.c.l.bf16 %v472
        %v601 = vunpack.c.l.bf16 %v473
        %v602 = vunpack.c.l.bf16 %v474
        %v603 = vunpack.c.l.bf16 %v475
        %v604 = vunpack.c.l.bf16 %v476
        %v605 = vunpack.c.l.bf16 %v477
        %v606 = vunpack.c.l.bf16 %v478
        %v607 = vunpack.c.l.bf16 %v479
        %v608 = vunpack.c.l.bf16 %v480
        %v609 = vunpack.c.l.bf16 %v481
        %v610 = vunpack.c.l.bf16 %v482
        %v611 = vunpack.c.l.bf16 %v483
        %v612 = vunpack.c.l.bf16 %v484
        %v613 = vunpack.c.l.bf16 %v485
        %v614 = vunpack.c.l.bf16 %v486
        %v615 = vunpack.c.l.bf16 %v487
        %v616 = vunpack.c.l.bf16 %v488
        %v617 = vunpack.c.l.bf16 %v489
        %v618 = vunpack.c.l.bf16 %v490
        %v619 = vunpack.c.l.bf16 %v491
        %v620 = vunpack.c.l.bf16 %v492
        %v621 = vunpack.c.l.bf16 %v493
        %v622 = vunpack.c.l.bf16 %v494
        %v623 = vunpack.c.l.bf16 %v495
        %v624 = vunpack.c.l.bf16 %v496
        %v625 = vunpack.c.l.bf16 %v497
        %v626 = vunpack.c.l.bf16 %v498
        %v627 = vunpack.c.l.bf16 %v499
        %v628 = vunpack.c.l.bf16 %v500
        %v629 = vunpack.c.l.bf16 %v501
        %v630 = vunpack.c.l.bf16 %v502
        %v631 = vunpack.c.l.bf16 %v503
        %v632 = vunpack.c.l.bf16 %v504
        %v633 = vunpack.c.l.bf16 %v505
        %v634 = vunpack.c.l.bf16 %v506
        %v635 = vunpack.c.l.bf16 %v507
        %v636 = vunpack.c.l.bf16 %v508
        %v637 = vunpack.c.l.bf16 %v509
        %v638 = vunpack.c.l.bf16 %v510
        %v639 = vunpack.c.l.bf16 %v511
        %v640 = vunpack.c.l.bf16 %v512
        %v641 = vunpack.c.l.bf16 %v513
        %v642 = vunpack.c.l.bf16 %v514
        %v643 = vunpack.c.l.bf16 %v515
        %v644 = vunpack.c.l.bf16 %v516
        %v645 = vunpack.c.l.bf16 %v517
        %v646 = vunpack.c.l.bf16 %v518
        %v647 = vunpack.c.l.bf16 %v519
        %v648 = vunpack.c.l.bf16 %v520
        %v649 = vunpack.c.l.bf16 %v521
        %v650 = vunpack.c.l.bf16 %v522
        %v651 = vunpack.c.l.bf16 %v523
        %v652 = vunpack.c.l.bf16 %v524
        %v653 = vunpack.c.l.bf16 %v525
        %v654 = vunpack.c.l.bf16 %v526
        %v655 = vunpack.c.l.bf16 %v527
        %v656 = vunpack.c.l.bf16 %v528
        %v657 = vunpack.c.l.bf16 %v529
        %v658 = vunpack.c.l.bf16 %v530
        %v659 = vunpack.c.l.bf16 %v531
        %v660 = vunpack.c.l.bf16 %v532
        %v661 = vunpack.c.l.bf16 %v533
        %v662 = vunpack.c.l.bf16 %v534
        %v663 = vunpack.c.l.bf16 %v535
        %v664 = vunpack.c.l.bf16 %v536
        %v665 = vunpack.c.l.bf16 %v537
        %v666 = vunpack.c.l.bf16 %v538
        %v667 = vunpack.c.l.bf16 %v539
        %v668 = vunpack.c.l.bf16 %v540
        %v669 = vunpack.c.l.bf16 %v541
        %v670 = vunpack.c.l.bf16 %v542
        %v671 = vunpack.c.l.bf16 %v543
        %v672 = vunpack.c.l.bf16 %v544
        %v673 = vunpack.c.l.bf16 %v545
        %v674 = vunpack.c.l.bf16 %v546
        %v675 = vunpack.c.l.bf16 %v547
        %v676 = vunpack.c.l.bf16 %v548
        %v677 = vunpack.c.l.bf16 %v549
        %v678 = vunpack.c.l.bf16 %v550
        %v679 = vunpack.c.l.bf16 %v551
        %v680 = vunpack.c.l.bf16 %v552
        %v681 = vunpack.c.l.bf16 %v553
        %v682 = vunpack.c.l.bf16 %v554
        %v683 = vunpack.c.l.bf16 %v555
        %v684 = vunpack.c.l.bf16 %v556
        %v685 = vunpack.c.l.bf16 %v557
        %v686 = vunpack.c.l.bf16 %v558
        %v687 = vunpack.c.l.bf16 %v559
        %v688 = vunpack.c.l.bf16 %v560
        %v689 = vunpack.c.l.bf16 %v561
        %v690 = vunpack.c.l.bf16 %v562
        %v691 = vunpack.c.l.bf16 %v563
        %v692 = vunpack.c.l.bf16 %v564
        %v693 = vunpack.c.l.bf16 %v565
        %v694 = vunpack.c.l.bf16 %v566
        %v695 = vunpack.c.l.bf16 %v567
        %v696 = vmul.f32 %v568, %v632
        %v697 = vmul.f32 %v569, %v633
        %v698 = vmul.f32 %v570, %v634
        %v699 = vmul.f32 %v571, %v635
        %v700 = vmul.f32 %v572, %v636
        %v701 = vmul.f32 %v573, %v637
        %v702 = vmul.f32 %v574, %v638
        %v703 = vmul.f32 %v575, %v639
        %v704 = vmul.f32 %v576, %v640
        %v705 = vmul.f32 %v577, %v641
        %v706 = vmul.f32 %v578, %v642
        %v707 = vmul.f32 %v579, %v643
        %v708 = vmul.f32 %v580, %v644
        %v709 = vmul.f32 %v581, %v645
        %v710 = vmul.f32 %v582, %v646
        %v711 = vmul.f32 %v583, %v647
        %v712 = vmul.f32 %v584, %v648
        %v713 = vmul.f32 %v585, %v649
        %v714 = vmul.f32 %v586, %v650
        %v715 = vmul.f32 %v587, %v651
        %v716 = vmul.f32 %v588, %v652
        %v717 = vmul.f32 %v589, %v653
        %v718 = vmul.f32 %v590, %v654
        %v719 = vmul.f32 %v591, %v655
        %v720 = vmul.f32 %v592, %v656
        %v721 = vmul.f32 %v593, %v657
        %v722 = vmul.f32 %v594, %v658
        %v723 = vmul.f32 %v595, %v659
        %v724 = vmul.f32 %v596, %v660
        %v725 = vmul.f32 %v597, %v661
        %v726 = vmul.f32 %v598, %v662
        %v727 = vmul.f32 %v599, %v663
        %v728 = vmul.f32 %v600, %v664
        %v729 = vmul.f32 %v601, %v665
        %v730 = vmul.f32 %v602, %v666
        %v731 = vmul.f32 %v603, %v667
        %v732 = vmul.f32 %v604, %v668
        %v733 = vmul.f32 %v605, %v669
        %v734 = vmul.f32 %v606, %v670
        %v735 = vmul.f32 %v607, %v671
        %v736 = vmul.f32 %v608, %v672
        %v737 = vmul.f32 %v609, %v673
        %v738 = vmul.f32 %v610, %v674
        %v739 = vmul.f32 %v611, %v675
        %v740 = vmul.f32 %v612, %v676
        %v741 = vmul.f32 %v613, %v677
        %v742 = vmul.f32 %v614, %v678
        %v743 = vmul.f32 %v615, %v679
        %v744 = vmul.f32 %v616, %v680
        %v745 = vmul.f32 %v617, %v681
        %v746 = vmul.f32 %v618, %v682
        %v747 = vmul.f32 %v619, %v683
        %v748 = vmul.f32 %v620, %v684
        %v749 = vmul.f32 %v621, %v685
        %v750 = vmul.f32 %v622, %v686
        %v751 = vmul.f32 %v623, %v687
        %v752 = vmul.f32 %v624, %v688
        %v753 = vmul.f32 %v625, %v689
        %v754 = vmul.f32 %v626, %v690
        %v755 = vmul.f32 %v627, %v691
        %v756 = vmul.f32 %v628, %v692
        %v757 = vmul.f32 %v629, %v693
        %v758 = vmul.f32 %v630, %v694
        %v759 = vmul.f32 %v631, %v695
        %v760 = vld [vmem:[%s9] sm:$0xf]
        %v761 = vpack.c.bf16 %v697, %v696
        %v762 = vpack.c.bf16 %v699, %v698
        %v763 = vpack.c.bf16 %v701, %v700
        %v764 = vpack.c.bf16 %v703, %v702
        %v765 = vpack.c.bf16 %v705, %v704
        %v766 = vpack.c.bf16 %v707, %v706
        %v767 = vpack.c.bf16 %v709, %v708
        %v768 = vpack.c.bf16 %v711, %v710
        %v769 = vpack.c.bf16 %v713, %v712
        %v770 = vpack.c.bf16 %v715, %v714
        %v771 = vpack.c.bf16 %v717, %v716
        %v772 = vpack.c.bf16 %v719, %v718
        %v773 = vpack.c.bf16 %v721, %v720
        %v774 = vpack.c.bf16 %v723, %v722
        %v775 = vpack.c.bf16 %v725, %v724
        %v776 = vpack.c.bf16 %v727, %v726
        %v777 = vpack.c.bf16 %v729, %v728
        %v778 = vpack.c.bf16 %v731, %v730
        %v779 = vpack.c.bf16 %v733, %v732
        %v780 = vpack.c.bf16 %v735, %v734
        %v781 = vpack.c.bf16 %v737, %v736
        %v782 = vpack.c.bf16 %v739, %v738
        %v783 = vpack.c.bf16 %v741, %v740
        %v784 = vpack.c.bf16 %v743, %v742
        %v785 = vpack.c.bf16 %v745, %v744
        %v786 = vpack.c.bf16 %v747, %v746
        %v787 = vpack.c.bf16 %v749, %v748
        %v788 = vpack.c.bf16 %v751, %v750
        %v789 = vpack.c.bf16 %v753, %v752
        %v790 = vpack.c.bf16 %v755, %v754
        %v791 = vpack.c.bf16 %v757, %v756
        %v792 = vpack.c.bf16 %v759, %v758
        %v793 = vld [vmem:[%s2] sm:$0xf]
        %v794 = vld [vmem:[%s2 + $0x4] sm:$0xf]
        %v795 = vld [vmem:[%s2 + $0x8] sm:$0xf]
        %v796 = vld [vmem:[%s2 + $0xc] sm:$0xf]
        %v797 = vld [vmem:[%s2 + $0x10] sm:$0xf]
        %v798 = vld [vmem:[%s2 + $0x14] sm:$0xf]
        %v799 = vld [vmem:[%s2 + $0x18] sm:$0xf]
        %v800 = vld [vmem:[%s2 + $0x1c] sm:$0xf]
        %v801 = vld [vmem:[%s3] sm:$0xf]
        %v802 = vld [vmem:[%s3 + $0x4] sm:$0xf]
        %v803 = vld [vmem:[%s3 + $0x8] sm:$0xf]
        %v804 = vld [vmem:[%s3 + $0xc] sm:$0xf]
        %v805 = vld [vmem:[%s3 + $0x10] sm:$0xf]
        %v806 = vld [vmem:[%s3 + $0x14] sm:$0xf]
        %v807 = vld [vmem:[%s3 + $0x18] sm:$0xf]
        %v808 = vld [vmem:[%s3 + $0x1c] sm:$0xf]
        %v873 = vunpack.c.l.b16 %v504
        %v874 = vunpack.c.l.b16 %v505
        %v875 = vunpack.c.l.b16 %v506
        %v876 = vunpack.c.l.b16 %v507
        %v877 = vunpack.c.l.b16 %v508
        %v878 = vunpack.c.l.b16 %v509
        %v879 = vunpack.c.l.b16 %v510
        %v880 = vunpack.c.l.b16 %v511
        %v881 = vunpack.c.l.b16 %v512
        %v882 = vunpack.c.l.b16 %v513
        %v883 = vunpack.c.l.b16 %v514
        %v884 = vunpack.c.l.b16 %v515
        %v885 = vunpack.c.l.b16 %v516
        %v886 = vunpack.c.l.b16 %v517
        %v887 = vunpack.c.l.b16 %v518
        %v888 = vunpack.c.l.b16 %v519
        %v889 = vunpack.c.l.b16 %v520
        %v890 = vunpack.c.l.b16 %v521
        %v891 = vunpack.c.l.b16 %v522
        %v892 = vunpack.c.l.b16 %v523
        %v893 = vunpack.c.l.b16 %v524
        %v894 = vunpack.c.l.b16 %v525
        %v895 = vunpack.c.l.b16 %v526
        %v896 = vunpack.c.l.b16 %v527
        %v897 = vunpack.c.l.b16 %v528
        %v898 = vunpack.c.l.b16 %v529
        %v899 = vunpack.c.l.b16 %v530
        %v900 = vunpack.c.l.b16 %v531
        %v901 = vunpack.c.l.b16 %v532
        %v902 = vunpack.c.l.b16 %v533
        %v903 = vunpack.c.l.b16 %v534
        %v904 = vunpack.c.l.b16 %v535
        %v905 = vunpack.c.l.b16 %v536
        %v906 = vunpack.c.l.b16 %v537
        %v907 = vunpack.c.l.b16 %v538
        %v908 = vunpack.c.l.b16 %v539
        %v909 = vunpack.c.l.b16 %v540
        %v910 = vunpack.c.l.b16 %v541
        %v911 = vunpack.c.l.b16 %v542
        %v912 = vunpack.c.l.b16 %v543
        %v913 = vunpack.c.l.b16 %v544
        %v914 = vunpack.c.l.b16 %v545
        %v915 = vunpack.c.l.b16 %v546
        %v916 = vunpack.c.l.b16 %v547
        %v917 = vunpack.c.l.b16 %v548
        %v918 = vunpack.c.l.b16 %v549
        %v919 = vunpack.c.l.b16 %v550
        %v920 = vunpack.c.l.b16 %v551
        %v921 = vunpack.c.l.b16 %v552
        %v922 = vunpack.c.l.b16 %v553
        %v923 = vunpack.c.l.b16 %v554
        %v924 = vunpack.c.l.b16 %v555
        %v925 = vunpack.c.l.b16 %v556
        %v926 = vunpack.c.l.b16 %v557
        %v927 = vunpack.c.l.b16 %v558
        %v928 = vunpack.c.l.b16 %v559
        %v929 = vunpack.c.l.b16 %v560
        %v930 = vunpack.c.l.b16 %v561
        %v931 = vunpack.c.l.b16 %v562
        %v932 = vunpack.c.l.b16 %v563
        %v933 = vunpack.c.l.b16 %v564
        %v934 = vunpack.c.l.b16 %v565
        %v935 = vunpack.c.l.b16 %v566
        %v936 = vunpack.c.l.b16 %v567
        %v937 = vpack.c.b16 %v874, %v873
        %v938 = vpack.c.b16 %v876, %v875
        %v939 = vpack.c.b16 %v878, %v877
        %v940 = vpack.c.b16 %v880, %v879
        %v941 = vpack.c.b16 %v882, %v881
        %v942 = vpack.c.b16 %v884, %v883
        %v943 = vpack.c.b16 %v886, %v885
        %v944 = vpack.c.b16 %v888, %v887
        %v945 = vpack.c.b16 %v890, %v889
        %v946 = vpack.c.b16 %v892, %v891
        %v947 = vpack.c.b16 %v894, %v893
        %v948 = vpack.c.b16 %v896, %v895
        %v949 = vpack.c.b16 %v898, %v897
        %v950 = vpack.c.b16 %v900, %v899
        %v951 = vpack.c.b16 %v902, %v901
        %v952 = vpack.c.b16 %v904, %v903
        %v953 = vpack.c.b16 %v906, %v905
        %v954 = vpack.c.b16 %v908, %v907
        %v955 = vpack.c.b16 %v910, %v909
        %v956 = vpack.c.b16 %v912, %v911
        %v957 = vpack.c.b16 %v914, %v913
        %v958 = vpack.c.b16 %v916, %v915
        %v959 = vpack.c.b16 %v918, %v917
        %v960 = vpack.c.b16 %v920, %v919
        %v961 = vpack.c.b16 %v922, %v921
        %v962 = vpack.c.b16 %v924, %v923
        %v963 = vpack.c.b16 %v926, %v925
        %v964 = vpack.c.b16 %v928, %v927
        %v965 = vpack.c.b16 %v930, %v929
        %v966 = vpack.c.b16 %v932, %v931
        %v967 = vpack.c.b16 %v934, %v933
        %v968 = vpack.c.b16 %v936, %v935
        %v977 = vunpack.c.l.b16 %v801
        %v978 = vunpack.c.l.b16 %v802
        %v979 = vunpack.c.l.b16 %v803
        %v980 = vunpack.c.l.b16 %v804
        %v981 = vunpack.c.l.b16 %v805
        %v982 = vunpack.c.l.b16 %v806
        %v983 = vunpack.c.l.b16 %v807
        %v984 = vunpack.c.l.b16 %v808
        %v985 = vpack.c.b16 %v978, %v977
        %v986 = vpack.c.b16 %v980, %v979
        %v987 = vpack.c.b16 %v982, %v981
        %v988 = vpack.c.b16 %v984, %v983
        %vm993 = vcmask 523264
        %v995 = vsel %vm993, %v937, 0
        %v998 = vsel %vm993, %v938, 0
        %v1001 = vsel %vm993, %v939, 0
        %v1004 = vsel %vm993, %v940, 0
        %v1007 = vsel %vm993, %v941, 0
        %v1010 = vsel %vm993, %v942, 0
        %v1013 = vsel %vm993, %v943, 0
        %v1016 = vsel %vm993, %v944, 0
        %v1019 = vsel %vm993, %v945, 0
        %v1022 = vsel %vm993, %v946, 0
        %v1025 = vsel %vm993, %v947, 0
        %v1028 = vsel %vm993, %v948, 0
        %v1031 = vsel %vm993, %v949, 0
        %v1034 = vsel %vm993, %v950, 0
        %v1037 = vsel %vm993, %v951, 0
        %v1040 = vsel %vm993, %v952, 0
        %v1043 = vsel %vm993, %v953, 0
        %v1046 = vsel %vm993, %v954, 0
        %v1049 = vsel %vm993, %v955, 0
        %v1052 = vsel %vm993, %v956, 0
        %v1055 = vsel %vm993, %v957, 0
        %v1058 = vsel %vm993, %v958, 0
        %v1061 = vsel %vm993, %v959, 0
        %v1064 = vsel %vm993, %v960, 0
        %v1067 = vsel %vm993, %v961, 0
        %v1070 = vsel %vm993, %v962, 0
        %v1073 = vsel %vm993, %v963, 0
        %v1076 = vsel %vm993, %v964, 0
        %v1079 = vsel %vm993, %v965, 0
        %v1082 = vsel %vm993, %v966, 0
        %v1085 = vsel %vm993, %v967, 0
        %v1088 = vsel %vm993, %v968, 0
        %1090 = vmatprep.subr.bf16.mxu0 0
        %1091 = vmatpush1.bf16.msra.mxu0 0
        %1092 = vmatprep.subr.bf16.mxu0 0
        %1093 = vmatpush1.bf16.msra.mxu0 0
        %1094 = vmatprep.subr.bf16.mxu0 0
        %1095 = vmatpush1.bf16.msra.mxu0 0
        %1096 = vmatprep.subr.bf16.mxu0 0
        %1097 = vmatpush1.bf16.msra.mxu0 0
        %1098 = vmatprep.subr.bf16.mxu0 0
        %1099 = vmatpush1.bf16.msra.mxu0 %v988
        %1100 = vmatprep.subr.bf16.mxu0 0
        %1101 = vmatpush1.bf16.msra.mxu0 %v987
        %1102 = vmatprep.subr.bf16.mxu0 0
        %1103 = vmatpush1.bf16.msra.mxu0 %v986
        %1104 = vmatprep.subr.bf16.mxu0 0
        %1105 = vmatpush1.bf16.msra.mxu0 %v985
        %1106 = vmatprep.subr.bf16.mxu0 0
        %1107 = vmatpush2.bf16.msra.mxu0 0
        %1108 = vmatprep.subr.bf16.mxu0 0
        %1109 = vmatpush2.bf16.msra.mxu0 0
        %1110 = vmatprep.subr.bf16.mxu0 0
        %1111 = vmatpush2.bf16.msra.mxu0 0
        %1112 = vmatprep.subr.bf16.mxu0 0
        %1113 = vmatpush2.bf16.msra.mxu0 0
        %1114 = vmatprep.subr.bf16.mxu0 0
        %1115 = vmatpush2.bf16.msra.mxu0 0
        %1116 = vmatprep.subr.bf16.mxu0 0
        %1117 = vmatpush2.bf16.msra.mxu0 0
        %1118 = vmatprep.subr.bf16.mxu0 0
        %1119 = vmatpush2.bf16.msra.mxu0 0
        %1120 = vmatprep.subr.bf16.mxu0 0
        %1121 = vmatpush2.bf16.msra.mxu0 0
        %1122 = vmatprep.mubr.bf16.mxu0 0
        %1123 = vmatmul.mubr.bf16.gmra.mxu0 %v995
        %v1124 = vpop.f32.mrf.mxu0
        %v1125 = vadd.f32 0.0, %v1124
        %v1126 = vpop.f32.mrf.mxu0
        %v1127 = vpop.f32.mrf.mxu0
        %v1128 = vadd.f32 0.0, %v1127
        %v1129 = vpop.f32.mrf.mxu0
        %1130 = vmatprep.mubr.bf16.mxu0 0
        %1131 = vmatmul.mubr.bf16.gmra.mxu0 %v998
        %v1132 = vpop.f32.mrf.mxu0
        %v1133 = vadd.f32 0.0, %v1132
        %v1134 = vpop.f32.mrf.mxu0
        %v1135 = vpop.f32.mrf.mxu0
        %v1136 = vadd.f32 0.0, %v1135
        %v1137 = vpop.f32.mrf.mxu0
        %1138 = vmatprep.mubr.bf16.mxu0 0
        %1139 = vmatmul.mubr.bf16.gmra.mxu0 %v1001
        %v1140 = vpop.f32.mrf.mxu0
        %v1141 = vadd.f32 0.0, %v1140
        %v1142 = vpop.f32.mrf.mxu0
        %v1143 = vpop.f32.mrf.mxu0
        %v1144 = vadd.f32 0.0, %v1143
        %v1145 = vpop.f32.mrf.mxu0
        %1146 = vmatprep.mubr.bf16.mxu0 0
        %1147 = vmatmul.mubr.bf16.gmra.mxu0 %v1004
        %v1148 = vpop.f32.mrf.mxu0
        %v1149 = vadd.f32 0.0, %v1148
        %v1150 = vpop.f32.mrf.mxu0
        %v1151 = vpop.f32.mrf.mxu0
        %v1152 = vadd.f32 0.0, %v1151
        %v1153 = vpop.f32.mrf.mxu0
        %1154 = vmatprep.mubr.bf16.mxu0 0
        %1155 = vmatmul.mubr.bf16.gmra.mxu0 %v1007
        %v1156 = vpop.f32.mrf.mxu0
        %v1157 = vadd.f32 0.0, %v1156
        %v1158 = vpop.f32.mrf.mxu0
        %v1159 = vpop.f32.mrf.mxu0
        %v1160 = vadd.f32 0.0, %v1159
        %v1161 = vpop.f32.mrf.mxu0
        %1162 = vmatprep.mubr.bf16.mxu0 0
        %1163 = vmatmul.mubr.bf16.gmra.mxu0 %v1010
        %v1164 = vpop.f32.mrf.mxu0
        %v1165 = vadd.f32 0.0, %v1164
        %v1166 = vpop.f32.mrf.mxu0
        %v1167 = vpop.f32.mrf.mxu0
        %v1168 = vadd.f32 0.0, %v1167
        %v1169 = vpop.f32.mrf.mxu0
        %1170 = vmatprep.mubr.bf16.mxu0 0
        %1171 = vmatmul.mubr.bf16.gmra.mxu0 %v1013
        %v1172 = vpop.f32.mrf.mxu0
        %v1173 = vadd.f32 0.0, %v1172
        %v1174 = vpop.f32.mrf.mxu0
        %v1175 = vpop.f32.mrf.mxu0
        %v1176 = vadd.f32 0.0, %v1175
        %v1177 = vpop.f32.mrf.mxu0
        %1178 = vmatprep.mubr.bf16.mxu0 0
        %1179 = vmatmul.mubr.bf16.gmra.mxu0 %v1016
        %v1180 = vpop.f32.mrf.mxu0
        %v1181 = vadd.f32 0.0, %v1180
        %v1182 = vpop.f32.mrf.mxu0
        %v1183 = vpop.f32.mrf.mxu0
        %v1184 = vadd.f32 0.0, %v1183
        %v1185 = vpop.f32.mrf.mxu0
        %1186 = vmatprep.mubr.bf16.mxu0 0
        %1187 = vmatmul.mubr.bf16.gmra.mxu0 %v1019
        %v1188 = vpop.f32.mrf.mxu0
        %v1189 = vadd.f32 0.0, %v1188
        %v1190 = vpop.f32.mrf.mxu0
        %v1191 = vpop.f32.mrf.mxu0
        %v1192 = vadd.f32 0.0, %v1191
        %v1193 = vpop.f32.mrf.mxu0
        %1194 = vmatprep.mubr.bf16.mxu0 0
        %1195 = vmatmul.mubr.bf16.gmra.mxu0 %v1022
        %v1196 = vpop.f32.mrf.mxu0
        %v1197 = vadd.f32 0.0, %v1196
        %v1198 = vpop.f32.mrf.mxu0
        %v1199 = vpop.f32.mrf.mxu0
        %v1200 = vadd.f32 0.0, %v1199
        %v1201 = vpop.f32.mrf.mxu0
        %1202 = vmatprep.mubr.bf16.mxu0 0
        %1203 = vmatmul.mubr.bf16.gmra.mxu0 %v1025
        %v1204 = vpop.f32.mrf.mxu0
        %v1205 = vadd.f32 0.0, %v1204
        %v1206 = vpop.f32.mrf.mxu0
        %v1207 = vpop.f32.mrf.mxu0
        %v1208 = vadd.f32 0.0, %v1207
        %v1209 = vpop.f32.mrf.mxu0
        %1210 = vmatprep.mubr.bf16.mxu0 0
        %1211 = vmatmul.mubr.bf16.gmra.mxu0 %v1028
        %v1212 = vpop.f32.mrf.mxu0
        %v1213 = vadd.f32 0.0, %v1212
        %v1214 = vpop.f32.mrf.mxu0
        %v1215 = vpop.f32.mrf.mxu0
        %v1216 = vadd.f32 0.0, %v1215
        %v1217 = vpop.f32.mrf.mxu0
        %1218 = vmatprep.mubr.bf16.mxu0 0
        %1219 = vmatmul.mubr.bf16.gmra.mxu0 %v1031
        %v1220 = vpop.f32.mrf.mxu0
        %v1221 = vadd.f32 0.0, %v1220
        %v1222 = vpop.f32.mrf.mxu0
        %v1223 = vpop.f32.mrf.mxu0
        %v1224 = vadd.f32 0.0, %v1223
        %v1225 = vpop.f32.mrf.mxu0
        %1226 = vmatprep.mubr.bf16.mxu0 0
        %1227 = vmatmul.mubr.bf16.gmra.mxu0 %v1034
        %v1228 = vpop.f32.mrf.mxu0
        %v1229 = vadd.f32 0.0, %v1228
        %v1230 = vpop.f32.mrf.mxu0
        %v1231 = vpop.f32.mrf.mxu0
        %v1232 = vadd.f32 0.0, %v1231
        %v1233 = vpop.f32.mrf.mxu0
        %1234 = vmatprep.mubr.bf16.mxu0 0
        %1235 = vmatmul.mubr.bf16.gmra.mxu0 %v1037
        %v1236 = vpop.f32.mrf.mxu0
        %v1237 = vadd.f32 0.0, %v1236
        %v1238 = vpop.f32.mrf.mxu0
        %v1239 = vpop.f32.mrf.mxu0
        %v1240 = vadd.f32 0.0, %v1239
        %v1241 = vpop.f32.mrf.mxu0
        %1242 = vmatprep.mubr.bf16.mxu0 0
        %1243 = vmatmul.mubr.bf16.gmra.mxu0 %v1040
        %v1244 = vpop.f32.mrf.mxu0
        %v1245 = vadd.f32 0.0, %v1244
        %v1246 = vpop.f32.mrf.mxu0
        %v1247 = vpop.f32.mrf.mxu0
        %v1248 = vadd.f32 0.0, %v1247
        %v1249 = vpop.f32.mrf.mxu0
        %1250 = vmatprep.mubr.bf16.mxu0 0
        %1251 = vmatmul.mubr.bf16.gmra.mxu0 %v1043
        %v1252 = vpop.f32.mrf.mxu0
        %v1253 = vadd.f32 0.0, %v1252
        %v1254 = vpop.f32.mrf.mxu0
        %v1255 = vpop.f32.mrf.mxu0
        %v1256 = vadd.f32 0.0, %v1255
        %v1257 = vpop.f32.mrf.mxu0
        %1258 = vmatprep.mubr.bf16.mxu0 0
        %1259 = vmatmul.mubr.bf16.gmra.mxu0 %v1046
        %v1260 = vpop.f32.mrf.mxu0
        %v1261 = vadd.f32 0.0, %v1260
        %v1262 = vpop.f32.mrf.mxu0
        %v1263 = vpop.f32.mrf.mxu0
        %v1264 = vadd.f32 0.0, %v1263
        %v1265 = vpop.f32.mrf.mxu0
        %1266 = vmatprep.mubr.bf16.mxu0 0
        %1267 = vmatmul.mubr.bf16.gmra.mxu0 %v1049
        %v1268 = vpop.f32.mrf.mxu0
        %v1269 = vadd.f32 0.0, %v1268
        %v1270 = vpop.f32.mrf.mxu0
        %v1271 = vpop.f32.mrf.mxu0
        %v1272 = vadd.f32 0.0, %v1271
        %v1273 = vpop.f32.mrf.mxu0
        %1274 = vmatprep.mubr.bf16.mxu0 0
        %1275 = vmatmul.mubr.bf16.gmra.mxu0 %v1052
        %v1276 = vpop.f32.mrf.mxu0
        %v1277 = vadd.f32 0.0, %v1276
        %v1278 = vpop.f32.mrf.mxu0
        %v1279 = vpop.f32.mrf.mxu0
        %v1280 = vadd.f32 0.0, %v1279
        %v1281 = vpop.f32.mrf.mxu0
        %1282 = vmatprep.mubr.bf16.mxu0 0
        %1283 = vmatmul.mubr.bf16.gmra.mxu0 %v1055
        %v1284 = vpop.f32.mrf.mxu0
        %v1285 = vadd.f32 0.0, %v1284
        %v1286 = vpop.f32.mrf.mxu0
        %v1287 = vpop.f32.mrf.mxu0
        %v1288 = vadd.f32 0.0, %v1287
        %v1289 = vpop.f32.mrf.mxu0
        %1290 = vmatprep.mubr.bf16.mxu0 0
        %1291 = vmatmul.mubr.bf16.gmra.mxu0 %v1058
        %v1292 = vpop.f32.mrf.mxu0
        %v1293 = vadd.f32 0.0, %v1292
        %v1294 = vpop.f32.mrf.mxu0
        %v1295 = vpop.f32.mrf.mxu0
        %v1296 = vadd.f32 0.0, %v1295
        %v1297 = vpop.f32.mrf.mxu0
        %1298 = vmatprep.mubr.bf16.mxu0 0
        %1299 = vmatmul.mubr.bf16.gmra.mxu0 %v1061
        %v1300 = vpop.f32.mrf.mxu0
        %v1301 = vadd.f32 0.0, %v1300
        %v1302 = vpop.f32.mrf.mxu0
        %v1303 = vpop.f32.mrf.mxu0
        %v1304 = vadd.f32 0.0, %v1303
        %v1305 = vpop.f32.mrf.mxu0
        %1306 = vmatprep.mubr.bf16.mxu0 0
        %1307 = vmatmul.mubr.bf16.gmra.mxu0 %v1064
        %v1308 = vpop.f32.mrf.mxu0
        %v1309 = vadd.f32 0.0, %v1308
        %v1310 = vpop.f32.mrf.mxu0
        %v1311 = vpop.f32.mrf.mxu0
        %v1312 = vadd.f32 0.0, %v1311
        %v1313 = vpop.f32.mrf.mxu0
        %1314 = vmatprep.mubr.bf16.mxu0 0
        %1315 = vmatmul.mubr.bf16.gmra.mxu0 %v1067
        %v1316 = vpop.f32.mrf.mxu0
        %v1317 = vadd.f32 0.0, %v1316
        %v1318 = vpop.f32.mrf.mxu0
        %v1319 = vpop.f32.mrf.mxu0
        %v1320 = vadd.f32 0.0, %v1319
        %v1321 = vpop.f32.mrf.mxu0
        %1322 = vmatprep.mubr.bf16.mxu0 0
        %1323 = vmatmul.mubr.bf16.gmra.mxu0 %v1070
        %v1324 = vpop.f32.mrf.mxu0
        %v1325 = vadd.f32 0.0, %v1324
        %v1326 = vpop.f32.mrf.mxu0
        %v1327 = vpop.f32.mrf.mxu0
        %v1328 = vadd.f32 0.0, %v1327
        %v1329 = vpop.f32.mrf.mxu0
        %1330 = vmatprep.mubr.bf16.mxu0 0
        %1331 = vmatmul.mubr.bf16.gmra.mxu0 %v1073
        %v1332 = vpop.f32.mrf.mxu0
        %v1333 = vadd.f32 0.0, %v1332
        %v1334 = vpop.f32.mrf.mxu0
        %v1335 = vpop.f32.mrf.mxu0
        %v1336 = vadd.f32 0.0, %v1335
        %v1337 = vpop.f32.mrf.mxu0
        %1338 = vmatprep.mubr.bf16.mxu0 0
        %1339 = vmatmul.mubr.bf16.gmra.mxu0 %v1076
        %v1340 = vpop.f32.mrf.mxu0
        %v1341 = vadd.f32 0.0, %v1340
        %v1342 = vpop.f32.mrf.mxu0
        %v1343 = vpop.f32.mrf.mxu0
        %v1344 = vadd.f32 0.0, %v1343
        %v1345 = vpop.f32.mrf.mxu0
        %1346 = vmatprep.mubr.bf16.mxu0 0
        %1347 = vmatmul.mubr.bf16.gmra.mxu0 %v1079
        %v1348 = vpop.f32.mrf.mxu0
        %v1349 = vadd.f32 0.0, %v1348
        %v1350 = vpop.f32.mrf.mxu0
        %v1351 = vpop.f32.mrf.mxu0
        %v1352 = vadd.f32 0.0, %v1351
        %v1353 = vpop.f32.mrf.mxu0
        %1354 = vmatprep.mubr.bf16.mxu0 0
        %1355 = vmatmul.mubr.bf16.gmra.mxu0 %v1082
        %v1356 = vpop.f32.mrf.mxu0
        %v1357 = vadd.f32 0.0, %v1356
        %v1358 = vpop.f32.mrf.mxu0
        %v1359 = vpop.f32.mrf.mxu0
        %v1360 = vadd.f32 0.0, %v1359
        %v1361 = vpop.f32.mrf.mxu0
        %1362 = vmatprep.mubr.bf16.mxu0 0
        %1363 = vmatmul.mubr.bf16.gmra.mxu0 %v1085
        %v1364 = vpop.f32.mrf.mxu0
        %v1365 = vadd.f32 0.0, %v1364
        %v1366 = vpop.f32.mrf.mxu0
        %v1367 = vpop.f32.mrf.mxu0
        %v1368 = vadd.f32 0.0, %v1367
        %v1369 = vpop.f32.mrf.mxu0
        %1370 = vmatprep.mubr.bf16.mxu0 0
        %1371 = vmatmul.mubr.bf16.gmra.mxu0 %v1088
        %v1372 = vpop.f32.mrf.mxu0
        %v1373 = vadd.f32 0.0, %v1372
        %v1374 = vpop.f32.mrf.mxu0
        %v1375 = vpop.f32.mrf.mxu0
        %v1376 = vadd.f32 0.0, %v1375
        %v1377 = vpop.f32.mrf.mxu0
        %1378 = vdwg.mxu0
        %v1443 = vunpack.c.l.b16 %v440
        %v1444 = vunpack.c.l.b16 %v441
        %v1445 = vunpack.c.l.b16 %v442
        %v1446 = vunpack.c.l.b16 %v443
        %v1447 = vunpack.c.l.b16 %v444
        %v1448 = vunpack.c.l.b16 %v445
        %v1449 = vunpack.c.l.b16 %v446
        %v1450 = vunpack.c.l.b16 %v447
        %v1451 = vunpack.c.l.b16 %v448
        %v1452 = vunpack.c.l.b16 %v449
        %v1453 = vunpack.c.l.b16 %v450
        %v1454 = vunpack.c.l.b16 %v451
        %v1455 = vunpack.c.l.b16 %v452
        %v1456 = vunpack.c.l.b16 %v453
        %v1457 = vunpack.c.l.b16 %v454
        %v1458 = vunpack.c.l.b16 %v455
        %v1459 = vunpack.c.l.b16 %v456
        %v1460 = vunpack.c.l.b16 %v457
        %v1461 = vunpack.c.l.b16 %v458
        %v1462 = vunpack.c.l.b16 %v459
        %v1463 = vunpack.c.l.b16 %v460
        %v1464 = vunpack.c.l.b16 %v461
        %v1465 = vunpack.c.l.b16 %v462
        %v1466 = vunpack.c.l.b16 %v463
        %v1467 = vunpack.c.l.b16 %v464
        %v1468 = vunpack.c.l.b16 %v465
        %v1469 = vunpack.c.l.b16 %v466
        %v1470 = vunpack.c.l.b16 %v467
        %v1471 = vunpack.c.l.b16 %v468
        %v1472 = vunpack.c.l.b16 %v469
        %v1473 = vunpack.c.l.b16 %v470
        %v1474 = vunpack.c.l.b16 %v471
        %v1475 = vunpack.c.l.b16 %v472
        %v1476 = vunpack.c.l.b16 %v473
        %v1477 = vunpack.c.l.b16 %v474
        %v1478 = vunpack.c.l.b16 %v475
        %v1479 = vunpack.c.l.b16 %v476
        %v1480 = vunpack.c.l.b16 %v477
        %v1481 = vunpack.c.l.b16 %v478
        %v1482 = vunpack.c.l.b16 %v479
        %v1483 = vunpack.c.l.b16 %v480
        %v1484 = vunpack.c.l.b16 %v481
        %v1485 = vunpack.c.l.b16 %v482
        %v1486 = vunpack.c.l.b16 %v483
        %v1487 = vunpack.c.l.b16 %v484
        %v1488 = vunpack.c.l.b16 %v485
        %v1489 = vunpack.c.l.b16 %v486
        %v1490 = vunpack.c.l.b16 %v487
        %v1491 = vunpack.c.l.b16 %v488
        %v1492 = vunpack.c.l.b16 %v489
        %v1493 = vunpack.c.l.b16 %v490
        %v1494 = vunpack.c.l.b16 %v491
        %v1495 = vunpack.c.l.b16 %v492
        %v1496 = vunpack.c.l.b16 %v493
        %v1497 = vunpack.c.l.b16 %v494
        %v1498 = vunpack.c.l.b16 %v495
        %v1499 = vunpack.c.l.b16 %v496
        %v1500 = vunpack.c.l.b16 %v497
        %v1501 = vunpack.c.l.b16 %v498
        %v1502 = vunpack.c.l.b16 %v499
        %v1503 = vunpack.c.l.b16 %v500
        %v1504 = vunpack.c.l.b16 %v501
        %v1505 = vunpack.c.l.b16 %v502
        %v1506 = vunpack.c.l.b16 %v503
        %v1507 = vpack.c.b16 %v1444, %v1443
        %v1508 = vpack.c.b16 %v1446, %v1445
        %v1509 = vpack.c.b16 %v1448, %v1447
        %v1510 = vpack.c.b16 %v1450, %v1449
        %v1511 = vpack.c.b16 %v1452, %v1451
        %v1512 = vpack.c.b16 %v1454, %v1453
        %v1513 = vpack.c.b16 %v1456, %v1455
        %v1514 = vpack.c.b16 %v1458, %v1457
        %v1515 = vpack.c.b16 %v1460, %v1459
        %v1516 = vpack.c.b16 %v1462, %v1461
        %v1517 = vpack.c.b16 %v1464, %v1463
        %v1518 = vpack.c.b16 %v1466, %v1465
        %v1519 = vpack.c.b16 %v1468, %v1467
        %v1520 = vpack.c.b16 %v1470, %v1469
        %v1521 = vpack.c.b16 %v1472, %v1471
        %v1522 = vpack.c.b16 %v1474, %v1473
        %v1523 = vpack.c.b16 %v1476, %v1475
        %v1524 = vpack.c.b16 %v1478, %v1477
        %v1525 = vpack.c.b16 %v1480, %v1479
        %v1526 = vpack.c.b16 %v1482, %v1481
        %v1527 = vpack.c.b16 %v1484, %v1483
        %v1528 = vpack.c.b16 %v1486, %v1485
        %v1529 = vpack.c.b16 %v1488, %v1487
        %v1530 = vpack.c.b16 %v1490, %v1489
        %v1531 = vpack.c.b16 %v1492, %v1491
        %v1532 = vpack.c.b16 %v1494, %v1493
        %v1533 = vpack.c.b16 %v1496, %v1495
        %v1534 = vpack.c.b16 %v1498, %v1497
        %v1535 = vpack.c.b16 %v1500, %v1499
        %v1536 = vpack.c.b16 %v1502, %v1501
        %v1537 = vpack.c.b16 %v1504, %v1503
        %v1538 = vpack.c.b16 %v1506, %v1505
        %v1547 = vunpack.c.l.b16 %v793
        %v1548 = vunpack.c.l.b16 %v794
        %v1549 = vunpack.c.l.b16 %v795
        %v1550 = vunpack.c.l.b16 %v796
        %v1551 = vunpack.c.l.b16 %v797
        %v1552 = vunpack.c.l.b16 %v798
        %v1553 = vunpack.c.l.b16 %v799
        %v1554 = vunpack.c.l.b16 %v800
        %v1555 = vpack.c.b16 %v1548, %v1547
        %v1556 = vpack.c.b16 %v1550, %v1549
        %v1557 = vpack.c.b16 %v1552, %v1551
        %v1558 = vpack.c.b16 %v1554, %v1553
        %v1564 = vsel %vm993, %v1507, 0
        %v1567 = vsel %vm993, %v1508, 0
        %v1570 = vsel %vm993, %v1509, 0
        %v1573 = vsel %vm993, %v1510, 0
        %v1576 = vsel %vm993, %v1511, 0
        %v1579 = vsel %vm993, %v1512, 0
        %v1582 = vsel %vm993, %v1513, 0
        %v1585 = vsel %vm993, %v1514, 0
        %v1588 = vsel %vm993, %v1515, 0
        %v1591 = vsel %vm993, %v1516, 0
        %v1594 = vsel %vm993, %v1517, 0
        %v1597 = vsel %vm993, %v1518, 0
        %v1600 = vsel %vm993, %v1519, 0
        %v1603 = vsel %vm993, %v1520, 0
        %v1606 = vsel %vm993, %v1521, 0
        %v1609 = vsel %vm993, %v1522, 0
        %v1612 = vsel %vm993, %v1523, 0
        %v1615 = vsel %vm993, %v1524, 0
        %v1618 = vsel %vm993, %v1525, 0
        %v1621 = vsel %vm993, %v1526, 0
        %v1624 = vsel %vm993, %v1527, 0
        %v1627 = vsel %vm993, %v1528, 0
        %v1630 = vsel %vm993, %v1529, 0
        %v1633 = vsel %vm993, %v1530, 0
        %v1636 = vsel %vm993, %v1531, 0
        %v1639 = vsel %vm993, %v1532, 0
        %v1642 = vsel %vm993, %v1533, 0
        %v1645 = vsel %vm993, %v1534, 0
        %v1648 = vsel %vm993, %v1535, 0
        %v1651 = vsel %vm993, %v1536, 0
        %v1654 = vsel %vm993, %v1537, 0
        %v1657 = vsel %vm993, %v1538, 0
        %1659 = vmatprep.subr.bf16.mxu0 0
        %1660 = vmatpush1.bf16.msra.mxu0 0
        %1661 = vmatprep.subr.bf16.mxu0 0
        %1662 = vmatpush1.bf16.msra.mxu0 0
        %1663 = vmatprep.subr.bf16.mxu0 0
        %1664 = vmatpush1.bf16.msra.mxu0 0
        %1665 = vmatprep.subr.bf16.mxu0 0
        %1666 = vmatpush1.bf16.msra.mxu0 0
        %1667 = vmatprep.subr.bf16.mxu0 0
        %1668 = vmatpush1.bf16.msra.mxu0 %v1558
        %1669 = vmatprep.subr.bf16.mxu0 0
        %1670 = vmatpush1.bf16.msra.mxu0 %v1557
        %1671 = vmatprep.subr.bf16.mxu0 0
        %1672 = vmatpush1.bf16.msra.mxu0 %v1556
        %1673 = vmatprep.subr.bf16.mxu0 0
        %1674 = vmatpush1.bf16.msra.mxu0 %v1555
        %1675 = vmatprep.subr.bf16.mxu0 0
        %1676 = vmatpush2.bf16.msra.mxu0 0
        %1677 = vmatprep.subr.bf16.mxu0 0
        %1678 = vmatpush2.bf16.msra.mxu0 0
        %1679 = vmatprep.subr.bf16.mxu0 0
        %1680 = vmatpush2.bf16.msra.mxu0 0
        %1681 = vmatprep.subr.bf16.mxu0 0
        %1682 = vmatpush2.bf16.msra.mxu0 0
        %1683 = vmatprep.subr.bf16.mxu0 0
        %1684 = vmatpush2.bf16.msra.mxu0 0
        %1685 = vmatprep.subr.bf16.mxu0 0
        %1686 = vmatpush2.bf16.msra.mxu0 0
        %1687 = vmatprep.subr.bf16.mxu0 0
        %1688 = vmatpush2.bf16.msra.mxu0 0
        %1689 = vmatprep.subr.bf16.mxu0 0
        %1690 = vmatpush2.bf16.msra.mxu0 0
        %1691 = vmatprep.mubr.bf16.mxu0 0
        %1692 = vmatmul.mubr.bf16.gmra.mxu0 %v1564
        %v1693 = vpop.f32.mrf.mxu0
        %v1694 = vadd.f32 %v1125, %v1693
        %v1695 = vpop.f32.mrf.mxu0
        %v1696 = vpop.f32.mrf.mxu0
        %v1697 = vadd.f32 %v1128, %v1696
        %v1698 = vpop.f32.mrf.mxu0
        %1699 = vmatprep.mubr.bf16.mxu0 0
        %1700 = vmatmul.mubr.bf16.gmra.mxu0 %v1567
        %v1701 = vpop.f32.mrf.mxu0
        %v1702 = vadd.f32 %v1133, %v1701
        %v1703 = vpop.f32.mrf.mxu0
        %v1704 = vpop.f32.mrf.mxu0
        %v1705 = vadd.f32 %v1136, %v1704
        %v1706 = vpop.f32.mrf.mxu0
        %1707 = vmatprep.mubr.bf16.mxu0 0
        %1708 = vmatmul.mubr.bf16.gmra.mxu0 %v1570
        %v1709 = vpop.f32.mrf.mxu0
        %v1710 = vadd.f32 %v1141, %v1709
        %v1711 = vpop.f32.mrf.mxu0
        %v1712 = vpop.f32.mrf.mxu0
        %v1713 = vadd.f32 %v1144, %v1712
        %v1714 = vpop.f32.mrf.mxu0
        %1715 = vmatprep.mubr.bf16.mxu0 0
        %1716 = vmatmul.mubr.bf16.gmra.mxu0 %v1573
        %v1717 = vpop.f32.mrf.mxu0
        %v1718 = vadd.f32 %v1149, %v1717
        %v1719 = vpop.f32.mrf.mxu0
        %v1720 = vpop.f32.mrf.mxu0
        %v1721 = vadd.f32 %v1152, %v1720
        %v1722 = vpop.f32.mrf.mxu0
        %1723 = vmatprep.mubr.bf16.mxu0 0
        %1724 = vmatmul.mubr.bf16.gmra.mxu0 %v1576
        %v1725 = vpop.f32.mrf.mxu0
        %v1726 = vadd.f32 %v1157, %v1725
        %v1727 = vpop.f32.mrf.mxu0
        %v1728 = vpop.f32.mrf.mxu0
        %v1729 = vadd.f32 %v1160, %v1728
        %v1730 = vpop.f32.mrf.mxu0
        %1731 = vmatprep.mubr.bf16.mxu0 0
        %1732 = vmatmul.mubr.bf16.gmra.mxu0 %v1579
        %v1733 = vpop.f32.mrf.mxu0
        %v1734 = vadd.f32 %v1165, %v1733
        %v1735 = vpop.f32.mrf.mxu0
        %v1736 = vpop.f32.mrf.mxu0
        %v1737 = vadd.f32 %v1168, %v1736
        %v1738 = vpop.f32.mrf.mxu0
        %1739 = vmatprep.mubr.bf16.mxu0 0
        %1740 = vmatmul.mubr.bf16.gmra.mxu0 %v1582
        %v1741 = vpop.f32.mrf.mxu0
        %v1742 = vadd.f32 %v1173, %v1741
        %v1743 = vpop.f32.mrf.mxu0
        %v1744 = vpop.f32.mrf.mxu0
        %v1745 = vadd.f32 %v1176, %v1744
        %v1746 = vpop.f32.mrf.mxu0
        %1747 = vmatprep.mubr.bf16.mxu0 0
        %1748 = vmatmul.mubr.bf16.gmra.mxu0 %v1585
        %v1749 = vpop.f32.mrf.mxu0
        %v1750 = vadd.f32 %v1181, %v1749
        %v1751 = vpop.f32.mrf.mxu0
        %v1752 = vpop.f32.mrf.mxu0
        %v1753 = vadd.f32 %v1184, %v1752
        %v1754 = vpop.f32.mrf.mxu0
        %1755 = vmatprep.mubr.bf16.mxu0 0
        %1756 = vmatmul.mubr.bf16.gmra.mxu0 %v1588
        %v1757 = vpop.f32.mrf.mxu0
        %v1758 = vadd.f32 %v1189, %v1757
        %v1759 = vpop.f32.mrf.mxu0
        %v1760 = vpop.f32.mrf.mxu0
        %v1761 = vadd.f32 %v1192, %v1760
        %v1762 = vpop.f32.mrf.mxu0
        %1763 = vmatprep.mubr.bf16.mxu0 0
        %1764 = vmatmul.mubr.bf16.gmra.mxu0 %v1591
        %v1765 = vpop.f32.mrf.mxu0
        %v1766 = vadd.f32 %v1197, %v1765
        %v1767 = vpop.f32.mrf.mxu0
        %v1768 = vpop.f32.mrf.mxu0
        %v1769 = vadd.f32 %v1200, %v1768
        %v1770 = vpop.f32.mrf.mxu0
        %1771 = vmatprep.mubr.bf16.mxu0 0
        %1772 = vmatmul.mubr.bf16.gmra.mxu0 %v1594
        %v1773 = vpop.f32.mrf.mxu0
        %v1774 = vadd.f32 %v1205, %v1773
        %v1775 = vpop.f32.mrf.mxu0
        %v1776 = vpop.f32.mrf.mxu0
        %v1777 = vadd.f32 %v1208, %v1776
        %v1778 = vpop.f32.mrf.mxu0
        %1779 = vmatprep.mubr.bf16.mxu0 0
        %1780 = vmatmul.mubr.bf16.gmra.mxu0 %v1597
        %v1781 = vpop.f32.mrf.mxu0
        %v1782 = vadd.f32 %v1213, %v1781
        %v1783 = vpop.f32.mrf.mxu0
        %v1784 = vpop.f32.mrf.mxu0
        %v1785 = vadd.f32 %v1216, %v1784
        %v1786 = vpop.f32.mrf.mxu0
        %1787 = vmatprep.mubr.bf16.mxu0 0
        %1788 = vmatmul.mubr.bf16.gmra.mxu0 %v1600
        %v1789 = vpop.f32.mrf.mxu0
        %v1790 = vadd.f32 %v1221, %v1789
        %v1791 = vpop.f32.mrf.mxu0
        %v1792 = vpop.f32.mrf.mxu0
        %v1793 = vadd.f32 %v1224, %v1792
        %v1794 = vpop.f32.mrf.mxu0
        %1795 = vmatprep.mubr.bf16.mxu0 0
        %1796 = vmatmul.mubr.bf16.gmra.mxu0 %v1603
        %v1797 = vpop.f32.mrf.mxu0
        %v1798 = vadd.f32 %v1229, %v1797
        %v1799 = vpop.f32.mrf.mxu0
        %v1800 = vpop.f32.mrf.mxu0
        %v1801 = vadd.f32 %v1232, %v1800
        %v1802 = vpop.f32.mrf.mxu0
        %1803 = vmatprep.mubr.bf16.mxu0 0
        %1804 = vmatmul.mubr.bf16.gmra.mxu0 %v1606
        %v1805 = vpop.f32.mrf.mxu0
        %v1806 = vadd.f32 %v1237, %v1805
        %v1807 = vpop.f32.mrf.mxu0
        %v1808 = vpop.f32.mrf.mxu0
        %v1809 = vadd.f32 %v1240, %v1808
        %v1810 = vpop.f32.mrf.mxu0
        %1811 = vmatprep.mubr.bf16.mxu0 0
        %1812 = vmatmul.mubr.bf16.gmra.mxu0 %v1609
        %v1813 = vpop.f32.mrf.mxu0
        %v1814 = vadd.f32 %v1245, %v1813
        %v1815 = vpop.f32.mrf.mxu0
        %v1816 = vpop.f32.mrf.mxu0
        %v1817 = vadd.f32 %v1248, %v1816
        %v1818 = vpop.f32.mrf.mxu0
        %1819 = vmatprep.mubr.bf16.mxu0 0
        %1820 = vmatmul.mubr.bf16.gmra.mxu0 %v1612
        %v1821 = vpop.f32.mrf.mxu0
        %v1822 = vadd.f32 %v1253, %v1821
        %v1823 = vpop.f32.mrf.mxu0
        %v1824 = vpop.f32.mrf.mxu0
        %v1825 = vadd.f32 %v1256, %v1824
        %v1826 = vpop.f32.mrf.mxu0
        %1827 = vmatprep.mubr.bf16.mxu0 0
        %1828 = vmatmul.mubr.bf16.gmra.mxu0 %v1615
        %v1829 = vpop.f32.mrf.mxu0
        %v1830 = vadd.f32 %v1261, %v1829
        %v1831 = vpop.f32.mrf.mxu0
        %v1832 = vpop.f32.mrf.mxu0
        %v1833 = vadd.f32 %v1264, %v1832
        %v1834 = vpop.f32.mrf.mxu0
        %1835 = vmatprep.mubr.bf16.mxu0 0
        %1836 = vmatmul.mubr.bf16.gmra.mxu0 %v1618
        %v1837 = vpop.f32.mrf.mxu0
        %v1838 = vadd.f32 %v1269, %v1837
        %v1839 = vpop.f32.mrf.mxu0
        %v1840 = vpop.f32.mrf.mxu0
        %v1841 = vadd.f32 %v1272, %v1840
        %v1842 = vpop.f32.mrf.mxu0
        %1843 = vmatprep.mubr.bf16.mxu0 0
        %1844 = vmatmul.mubr.bf16.gmra.mxu0 %v1621
        %v1845 = vpop.f32.mrf.mxu0
        %v1846 = vadd.f32 %v1277, %v1845
        %v1847 = vpop.f32.mrf.mxu0
        %v1848 = vpop.f32.mrf.mxu0
        %v1849 = vadd.f32 %v1280, %v1848
        %v1850 = vpop.f32.mrf.mxu0
        %1851 = vmatprep.mubr.bf16.mxu0 0
        %1852 = vmatmul.mubr.bf16.gmra.mxu0 %v1624
        %v1853 = vpop.f32.mrf.mxu0
        %v1854 = vadd.f32 %v1285, %v1853
        %v1855 = vpop.f32.mrf.mxu0
        %v1856 = vpop.f32.mrf.mxu0
        %v1857 = vadd.f32 %v1288, %v1856
        %v1858 = vpop.f32.mrf.mxu0
        %1859 = vmatprep.mubr.bf16.mxu0 0
        %1860 = vmatmul.mubr.bf16.gmra.mxu0 %v1627
        %v1861 = vpop.f32.mrf.mxu0
        %v1862 = vadd.f32 %v1293, %v1861
        %v1863 = vpop.f32.mrf.mxu0
        %v1864 = vpop.f32.mrf.mxu0
        %v1865 = vadd.f32 %v1296, %v1864
        %v1866 = vpop.f32.mrf.mxu0
        %1867 = vmatprep.mubr.bf16.mxu0 0
        %1868 = vmatmul.mubr.bf16.gmra.mxu0 %v1630
        %v1869 = vpop.f32.mrf.mxu0
        %v1870 = vadd.f32 %v1301, %v1869
        %v1871 = vpop.f32.mrf.mxu0
        %v1872 = vpop.f32.mrf.mxu0
        %v1873 = vadd.f32 %v1304, %v1872
        %v1874 = vpop.f32.mrf.mxu0
        %1875 = vmatprep.mubr.bf16.mxu0 0
        %1876 = vmatmul.mubr.bf16.gmra.mxu0 %v1633
        %v1877 = vpop.f32.mrf.mxu0
        %v1878 = vadd.f32 %v1309, %v1877
        %v1879 = vpop.f32.mrf.mxu0
        %v1880 = vpop.f32.mrf.mxu0
        %v1881 = vadd.f32 %v1312, %v1880
        %v1882 = vpop.f32.mrf.mxu0
        %1883 = vmatprep.mubr.bf16.mxu0 0
        %1884 = vmatmul.mubr.bf16.gmra.mxu0 %v1636
        %v1885 = vpop.f32.mrf.mxu0
        %v1886 = vadd.f32 %v1317, %v1885
        %v1887 = vpop.f32.mrf.mxu0
        %v1888 = vpop.f32.mrf.mxu0
        %v1889 = vadd.f32 %v1320, %v1888
        %v1890 = vpop.f32.mrf.mxu0
        %1891 = vmatprep.mubr.bf16.mxu0 0
        %1892 = vmatmul.mubr.bf16.gmra.mxu0 %v1639
        %v1893 = vpop.f32.mrf.mxu0
        %v1894 = vadd.f32 %v1325, %v1893
        %v1895 = vpop.f32.mrf.mxu0
        %v1896 = vpop.f32.mrf.mxu0
        %v1897 = vadd.f32 %v1328, %v1896
        %v1898 = vpop.f32.mrf.mxu0
        %1899 = vmatprep.mubr.bf16.mxu0 0
        %1900 = vmatmul.mubr.bf16.gmra.mxu0 %v1642
        %v1901 = vpop.f32.mrf.mxu0
        %v1902 = vadd.f32 %v1333, %v1901
        %v1903 = vpop.f32.mrf.mxu0
        %v1904 = vpop.f32.mrf.mxu0
        %v1905 = vadd.f32 %v1336, %v1904
        %v1906 = vpop.f32.mrf.mxu0
        %1907 = vmatprep.mubr.bf16.mxu0 0
        %1908 = vmatmul.mubr.bf16.gmra.mxu0 %v1645
        %v1909 = vpop.f32.mrf.mxu0
        %v1910 = vadd.f32 %v1341, %v1909
        %v1911 = vpop.f32.mrf.mxu0
        %v1912 = vpop.f32.mrf.mxu0
        %v1913 = vadd.f32 %v1344, %v1912
        %v1914 = vpop.f32.mrf.mxu0
        %1915 = vmatprep.mubr.bf16.mxu0 0
        %1916 = vmatmul.mubr.bf16.gmra.mxu0 %v1648
        %v1917 = vpop.f32.mrf.mxu0
        %v1918 = vadd.f32 %v1349, %v1917
        %v1919 = vpop.f32.mrf.mxu0
        %v1920 = vpop.f32.mrf.mxu0
        %v1921 = vadd.f32 %v1352, %v1920
        %v1922 = vpop.f32.mrf.mxu0
        %1923 = vmatprep.mubr.bf16.mxu0 0
        %1924 = vmatmul.mubr.bf16.gmra.mxu0 %v1651
        %v1925 = vpop.f32.mrf.mxu0
        %v1926 = vadd.f32 %v1357, %v1925
        %v1927 = vpop.f32.mrf.mxu0
        %v1928 = vpop.f32.mrf.mxu0
        %v1929 = vadd.f32 %v1360, %v1928
        %v1930 = vpop.f32.mrf.mxu0
        %1931 = vmatprep.mubr.bf16.mxu0 0
        %1932 = vmatmul.mubr.bf16.gmra.mxu0 %v1654
        %v1933 = vpop.f32.mrf.mxu0
        %v1934 = vadd.f32 %v1365, %v1933
        %v1935 = vpop.f32.mrf.mxu0
        %v1936 = vpop.f32.mrf.mxu0
        %v1937 = vadd.f32 %v1368, %v1936
        %v1938 = vpop.f32.mrf.mxu0
        %1939 = vmatprep.mubr.bf16.mxu0 0
        %1940 = vmatmul.mubr.bf16.gmra.mxu0 %v1657
        %v1941 = vpop.f32.mrf.mxu0
        %v1942 = vadd.f32 %v1373, %v1941
        %v1943 = vpop.f32.mrf.mxu0
        %v1944 = vpop.f32.mrf.mxu0
        %v1945 = vadd.f32 %v1376, %v1944
        %v1946 = vpop.f32.mrf.mxu0
        %1947 = vdwg.mxu0
        %v1948 = vld [vmem:[%s4] sm:$0x1]
        %v1950 = vlaneseq
        %v1951 = vshrl.u32 %v1950, 7
        %v1952 = vsub.s32 0, %v1951
        %v1953 = vrot.slane %v1948, %v1952
        %v1955 = vadd.f32 %v1694, %v1953
        %v1956 = vadd.f32 %v1697, %v1953
        %v1957 = vadd.f32 %v1702, %v1953
        %v1958 = vadd.f32 %v1705, %v1953
        %v1959 = vadd.f32 %v1710, %v1953
        %v1960 = vadd.f32 %v1713, %v1953
        %v1961 = vadd.f32 %v1718, %v1953
        %v1962 = vadd.f32 %v1721, %v1953
        %v1963 = vadd.f32 %v1726, %v1953
        %v1964 = vadd.f32 %v1729, %v1953
        %v1965 = vadd.f32 %v1734, %v1953
        %v1966 = vadd.f32 %v1737, %v1953
        %v1967 = vadd.f32 %v1742, %v1953
        %v1968 = vadd.f32 %v1745, %v1953
        %v1969 = vadd.f32 %v1750, %v1953
        %v1970 = vadd.f32 %v1753, %v1953
        %v1971 = vadd.f32 %v1758, %v1953
        %v1972 = vadd.f32 %v1761, %v1953
        %v1973 = vadd.f32 %v1766, %v1953
        %v1974 = vadd.f32 %v1769, %v1953
        %v1975 = vadd.f32 %v1774, %v1953
        %v1976 = vadd.f32 %v1777, %v1953
        %v1977 = vadd.f32 %v1782, %v1953
        %v1978 = vadd.f32 %v1785, %v1953
        %v1979 = vadd.f32 %v1790, %v1953
        %v1980 = vadd.f32 %v1793, %v1953
        %v1981 = vadd.f32 %v1798, %v1953
        %v1982 = vadd.f32 %v1801, %v1953
        %v1983 = vadd.f32 %v1806, %v1953
        %v1984 = vadd.f32 %v1809, %v1953
        %v1985 = vadd.f32 %v1814, %v1953
        %v1986 = vadd.f32 %v1817, %v1953
        %v1987 = vadd.f32 %v1822, %v1953
        %v1988 = vadd.f32 %v1825, %v1953
        %v1989 = vadd.f32 %v1830, %v1953
        %v1990 = vadd.f32 %v1833, %v1953
        %v1991 = vadd.f32 %v1838, %v1953
        %v1992 = vadd.f32 %v1841, %v1953
        %v1993 = vadd.f32 %v1846, %v1953
        %v1994 = vadd.f32 %v1849, %v1953
        %v1995 = vadd.f32 %v1854, %v1953
        %v1996 = vadd.f32 %v1857, %v1953
        %v1997 = vadd.f32 %v1862, %v1953
        %v1998 = vadd.f32 %v1865, %v1953
        %v1999 = vadd.f32 %v1870, %v1953
        %v2000 = vadd.f32 %v1873, %v1953
        %v2001 = vadd.f32 %v1878, %v1953
        %v2002 = vadd.f32 %v1881, %v1953
        %v2003 = vadd.f32 %v1886, %v1953
        %v2004 = vadd.f32 %v1889, %v1953
        %v2005 = vadd.f32 %v1894, %v1953
        %v2006 = vadd.f32 %v1897, %v1953
        %v2007 = vadd.f32 %v1902, %v1953
        %v2008 = vadd.f32 %v1905, %v1953
        %v2009 = vadd.f32 %v1910, %v1953
        %v2010 = vadd.f32 %v1913, %v1953
        %v2011 = vadd.f32 %v1918, %v1953
        %v2012 = vadd.f32 %v1921, %v1953
        %v2013 = vadd.f32 %v1926, %v1953
        %v2014 = vadd.f32 %v1929, %v1953
        %v2015 = vadd.f32 %v1934, %v1953
        %v2016 = vadd.f32 %v1937, %v1953
        %v2017 = vadd.f32 %v1942, %v1953
        %v2018 = vadd.f32 %v1945, %v1953
        %v2019 = vmax.f32 %v1955, 0.0
        %v2020 = vmax.f32 %v1956, 0.0
        %v2021 = vmax.f32 %v1957, 0.0
        %v2022 = vmax.f32 %v1958, 0.0
        %v2023 = vmax.f32 %v1959, 0.0
        %v2024 = vmax.f32 %v1960, 0.0
        %v2025 = vmax.f32 %v1961, 0.0
        %v2026 = vmax.f32 %v1962, 0.0
        %v2027 = vmax.f32 %v1963, 0.0
        %v2028 = vmax.f32 %v1964, 0.0
        %v2029 = vmax.f32 %v1965, 0.0
        %v2030 = vmax.f32 %v1966, 0.0
        %v2031 = vmax.f32 %v1967, 0.0
        %v2032 = vmax.f32 %v1968, 0.0
        %v2033 = vmax.f32 %v1969, 0.0
        %v2034 = vmax.f32 %v1970, 0.0
        %v2035 = vmax.f32 %v1971, 0.0
        %v2036 = vmax.f32 %v1972, 0.0
        %v2037 = vmax.f32 %v1973, 0.0
        %v2038 = vmax.f32 %v1974, 0.0
        %v2039 = vmax.f32 %v1975, 0.0
        %v2040 = vmax.f32 %v1976, 0.0
        %v2041 = vmax.f32 %v1977, 0.0
        %v2042 = vmax.f32 %v1978, 0.0
        %v2043 = vmax.f32 %v1979, 0.0
        %v2044 = vmax.f32 %v1980, 0.0
        %v2045 = vmax.f32 %v1981, 0.0
        %v2046 = vmax.f32 %v1982, 0.0
        %v2047 = vmax.f32 %v1983, 0.0
        %v2048 = vmax.f32 %v1984, 0.0
        %v2049 = vmax.f32 %v1985, 0.0
        %v2050 = vmax.f32 %v1986, 0.0
        %v2051 = vmax.f32 %v1987, 0.0
        %v2052 = vmax.f32 %v1988, 0.0
        %v2053 = vmax.f32 %v1989, 0.0
        %v2054 = vmax.f32 %v1990, 0.0
        %v2055 = vmax.f32 %v1991, 0.0
        %v2056 = vmax.f32 %v1992, 0.0
        %v2057 = vmax.f32 %v1993, 0.0
        %v2058 = vmax.f32 %v1994, 0.0
        %v2059 = vmax.f32 %v1995, 0.0
        %v2060 = vmax.f32 %v1996, 0.0
        %v2061 = vmax.f32 %v1997, 0.0
        %v2062 = vmax.f32 %v1998, 0.0
        %v2063 = vmax.f32 %v1999, 0.0
        %v2064 = vmax.f32 %v2000, 0.0
        %v2065 = vmax.f32 %v2001, 0.0
        %v2066 = vmax.f32 %v2002, 0.0
        %v2067 = vmax.f32 %v2003, 0.0
        %v2068 = vmax.f32 %v2004, 0.0
        %v2069 = vmax.f32 %v2005, 0.0
        %v2070 = vmax.f32 %v2006, 0.0
        %v2071 = vmax.f32 %v2007, 0.0
        %v2072 = vmax.f32 %v2008, 0.0
        %v2073 = vmax.f32 %v2009, 0.0
        %v2074 = vmax.f32 %v2010, 0.0
        %v2075 = vmax.f32 %v2011, 0.0
        %v2076 = vmax.f32 %v2012, 0.0
        %v2077 = vmax.f32 %v2013, 0.0
        %v2078 = vmax.f32 %v2014, 0.0
        %v2079 = vmax.f32 %v2015, 0.0
        %v2080 = vmax.f32 %v2016, 0.0
        %v2081 = vmax.f32 %v2017, 0.0
        %v2082 = vmax.f32 %v2018, 0.0
        %v2083 = vld [vmem:[%s5] sm:$0xf]
        %v2084 = vld [vmem:[%s5 + $0x4] sm:$0xf]
        %v2085 = vld [vmem:[%s5 + $0x8] sm:$0xf]
        %v2086 = vld [vmem:[%s5 + $0xc] sm:$0xf]
        %v2087 = vld [vmem:[%s5 + $0x10] sm:$0xf]
        %v2088 = vld [vmem:[%s5 + $0x14] sm:$0xf]
        %v2089 = vld [vmem:[%s5 + $0x18] sm:$0xf]
        %v2090 = vld [vmem:[%s5 + $0x1c] sm:$0xf]
        %v2091 = vld [vmem:[%s6] sm:$0x1]
        %v2092 = vpack.c.bf16 %v2020, %v2019
        %v2093 = vpack.c.bf16 %v2022, %v2021
        %v2094 = vpack.c.bf16 %v2024, %v2023
        %v2095 = vpack.c.bf16 %v2026, %v2025
        %v2096 = vpack.c.bf16 %v2028, %v2027
        %v2097 = vpack.c.bf16 %v2030, %v2029
        %v2098 = vpack.c.bf16 %v2032, %v2031
        %v2099 = vpack.c.bf16 %v2034, %v2033
        %v2100 = vpack.c.bf16 %v2036, %v2035
        %v2101 = vpack.c.bf16 %v2038, %v2037
        %v2102 = vpack.c.bf16 %v2040, %v2039
        %v2103 = vpack.c.bf16 %v2042, %v2041
        %v2104 = vpack.c.bf16 %v2044, %v2043
        %v2105 = vpack.c.bf16 %v2046, %v2045
        %v2106 = vpack.c.bf16 %v2048, %v2047
        %v2107 = vpack.c.bf16 %v2050, %v2049
        %v2108 = vpack.c.bf16 %v2052, %v2051
        %v2109 = vpack.c.bf16 %v2054, %v2053
        %v2110 = vpack.c.bf16 %v2056, %v2055
        %v2111 = vpack.c.bf16 %v2058, %v2057
        %v2112 = vpack.c.bf16 %v2060, %v2059
        %v2113 = vpack.c.bf16 %v2062, %v2061
        %v2114 = vpack.c.bf16 %v2064, %v2063
        %v2115 = vpack.c.bf16 %v2066, %v2065
        %v2116 = vpack.c.bf16 %v2068, %v2067
        %v2117 = vpack.c.bf16 %v2070, %v2069
        %v2118 = vpack.c.bf16 %v2072, %v2071
        %v2119 = vpack.c.bf16 %v2074, %v2073
        %v2120 = vpack.c.bf16 %v2076, %v2075
        %v2121 = vpack.c.bf16 %v2078, %v2077
        %v2122 = vpack.c.bf16 %v2080, %v2079
        %v2123 = vpack.c.bf16 %v2082, %v2081
        %v2125 = vlaneseq
        %v2126 = vshrl.u32 %v2125, 7
        %v2127 = vsub.s32 0, %v2126
        %v2128 = vrot.slane %v2091, %v2127
        %v2138 = vunpack.c.l.b16 %v2083
        %v2139 = vunpack.c.l.b16 %v2084
        %v2140 = vunpack.c.l.b16 %v2085
        %v2141 = vunpack.c.l.b16 %v2086
        %v2142 = vunpack.c.l.b16 %v2087
        %v2143 = vunpack.c.l.b16 %v2088
        %v2144 = vunpack.c.l.b16 %v2089
        %v2145 = vunpack.c.l.b16 %v2090
        %v2146 = vpack.c.b16 %v2139, %v2138
        %v2147 = vpack.c.b16 %v2141, %v2140
        %v2148 = vpack.c.b16 %v2143, %v2142
        %v2149 = vpack.c.b16 %v2145, %v2144
        %v2155 = vsel %vm993, %v2092, 0
        %v2158 = vsel %vm993, %v2093, 0
        %v2161 = vsel %vm993, %v2094, 0
        %v2164 = vsel %vm993, %v2095, 0
        %v2167 = vsel %vm993, %v2096, 0
        %v2170 = vsel %vm993, %v2097, 0
        %v2173 = vsel %vm993, %v2098, 0
        %v2176 = vsel %vm993, %v2099, 0
        %v2179 = vsel %vm993, %v2100, 0
        %v2182 = vsel %vm993, %v2101, 0
        %v2185 = vsel %vm993, %v2102, 0
        %v2188 = vsel %vm993, %v2103, 0
        %v2191 = vsel %vm993, %v2104, 0
        %v2194 = vsel %vm993, %v2105, 0
        %v2197 = vsel %vm993, %v2106, 0
        %v2200 = vsel %vm993, %v2107, 0
        %v2203 = vsel %vm993, %v2108, 0
        %v2206 = vsel %vm993, %v2109, 0
        %v2209 = vsel %vm993, %v2110, 0
        %v2212 = vsel %vm993, %v2111, 0
        %v2215 = vsel %vm993, %v2112, 0
        %v2218 = vsel %vm993, %v2113, 0
        %v2221 = vsel %vm993, %v2114, 0
        %v2224 = vsel %vm993, %v2115, 0
        %v2227 = vsel %vm993, %v2116, 0
        %v2230 = vsel %vm993, %v2117, 0
        %v2233 = vsel %vm993, %v2118, 0
        %v2236 = vsel %vm993, %v2119, 0
        %v2239 = vsel %vm993, %v2120, 0
        %v2242 = vsel %vm993, %v2121, 0
        %v2245 = vsel %vm993, %v2122, 0
        %v2248 = vsel %vm993, %v2123, 0
        %2250 = vmatprep.subr.bf16.mxu0 0
        %2251 = vmatpush1.bf16.msra.mxu0 0
        %2252 = vmatprep.subr.bf16.mxu0 0
        %2253 = vmatpush1.bf16.msra.mxu0 0
        %2254 = vmatprep.subr.bf16.mxu0 0
        %2255 = vmatpush1.bf16.msra.mxu0 0
        %2256 = vmatprep.subr.bf16.mxu0 0
        %2257 = vmatpush1.bf16.msra.mxu0 0
        %2258 = vmatprep.subr.bf16.mxu0 0
        %2259 = vmatpush1.bf16.msra.mxu0 %v2149
        %2260 = vmatprep.subr.bf16.mxu0 0
        %2261 = vmatpush1.bf16.msra.mxu0 %v2148
        %2262 = vmatprep.subr.bf16.mxu0 0
        %2263 = vmatpush1.bf16.msra.mxu0 %v2147
        %2264 = vmatprep.subr.bf16.mxu0 0
        %2265 = vmatpush1.bf16.msra.mxu0 %v2146
        %2266 = vmatprep.subr.bf16.mxu0 0
        %2267 = vmatpush2.bf16.msra.mxu0 0
        %2268 = vmatprep.subr.bf16.mxu0 0
        %2269 = vmatpush2.bf16.msra.mxu0 0
        %2270 = vmatprep.subr.bf16.mxu0 0
        %2271 = vmatpush2.bf16.msra.mxu0 0
        %2272 = vmatprep.subr.bf16.mxu0 0
        %2273 = vmatpush2.bf16.msra.mxu0 0
        %2274 = vmatprep.subr.bf16.mxu0 0
        %2275 = vmatpush2.bf16.msra.mxu0 0
        %2276 = vmatprep.subr.bf16.mxu0 0
        %2277 = vmatpush2.bf16.msra.mxu0 0
        %2278 = vmatprep.subr.bf16.mxu0 0
        %2279 = vmatpush2.bf16.msra.mxu0 0
        %2280 = vmatprep.subr.bf16.mxu0 0
        %2281 = vmatpush2.bf16.msra.mxu0 0
        %2282 = vmatprep.mubr.bf16.mxu0 0
        %2283 = vmatmul.mubr.bf16.gmra.mxu0 %v2155
        %v2284 = vpop.f32.mrf.mxu0
        %v2285 = vadd.f32 %v2128, %v2284
        %v2286 = vpop.f32.mrf.mxu0
        %v2287 = vpop.f32.mrf.mxu0
        %v2288 = vadd.f32 %v2128, %v2287
        %v2289 = vpop.f32.mrf.mxu0
        %2290 = vmatprep.mubr.bf16.mxu0 0
        %2291 = vmatmul.mubr.bf16.gmra.mxu0 %v2158
        %v2292 = vpop.f32.mrf.mxu0
        %v2293 = vadd.f32 %v2128, %v2292
        %v2294 = vpop.f32.mrf.mxu0
        %v2295 = vpop.f32.mrf.mxu0
        %v2296 = vadd.f32 %v2128, %v2295
        %v2297 = vpop.f32.mrf.mxu0
        %2298 = vmatprep.mubr.bf16.mxu0 0
        %2299 = vmatmul.mubr.bf16.gmra.mxu0 %v2161
        %v2300 = vpop.f32.mrf.mxu0
        %v2301 = vadd.f32 %v2128, %v2300
        %v2302 = vpop.f32.mrf.mxu0
        %v2303 = vpop.f32.mrf.mxu0
        %v2304 = vadd.f32 %v2128, %v2303
        %v2305 = vpop.f32.mrf.mxu0
        %2306 = vmatprep.mubr.bf16.mxu0 0
        %2307 = vmatmul.mubr.bf16.gmra.mxu0 %v2164
        %v2308 = vpop.f32.mrf.mxu0
        %v2309 = vadd.f32 %v2128, %v2308
        %v2310 = vpop.f32.mrf.mxu0
        %v2311 = vpop.f32.mrf.mxu0
        %v2312 = vadd.f32 %v2128, %v2311
        %v2313 = vpop.f32.mrf.mxu0
        %2314 = vmatprep.mubr.bf16.mxu0 0
        %2315 = vmatmul.mubr.bf16.gmra.mxu0 %v2167
        %v2316 = vpop.f32.mrf.mxu0
        %v2317 = vadd.f32 %v2128, %v2316
        %v2318 = vpop.f32.mrf.mxu0
        %v2319 = vpop.f32.mrf.mxu0
        %v2320 = vadd.f32 %v2128, %v2319
        %v2321 = vpop.f32.mrf.mxu0
        %2322 = vmatprep.mubr.bf16.mxu0 0
        %2323 = vmatmul.mubr.bf16.gmra.mxu0 %v2170
        %v2324 = vpop.f32.mrf.mxu0
        %v2325 = vadd.f32 %v2128, %v2324
        %v2326 = vpop.f32.mrf.mxu0
        %v2327 = vpop.f32.mrf.mxu0
        %v2328 = vadd.f32 %v2128, %v2327
        %v2329 = vpop.f32.mrf.mxu0
        %2330 = vmatprep.mubr.bf16.mxu0 0
        %2331 = vmatmul.mubr.bf16.gmra.mxu0 %v2173
        %v2332 = vpop.f32.mrf.mxu0
        %v2333 = vadd.f32 %v2128, %v2332
        %v2334 = vpop.f32.mrf.mxu0
        %v2335 = vpop.f32.mrf.mxu0
        %v2336 = vadd.f32 %v2128, %v2335
        %v2337 = vpop.f32.mrf.mxu0
        %2338 = vmatprep.mubr.bf16.mxu0 0
        %2339 = vmatmul.mubr.bf16.gmra.mxu0 %v2176
        %v2340 = vpop.f32.mrf.mxu0
        %v2341 = vadd.f32 %v2128, %v2340
        %v2342 = vpop.f32.mrf.mxu0
        %v2343 = vpop.f32.mrf.mxu0
        %v2344 = vadd.f32 %v2128, %v2343
        %v2345 = vpop.f32.mrf.mxu0
        %2346 = vmatprep.mubr.bf16.mxu0 0
        %2347 = vmatmul.mubr.bf16.gmra.mxu0 %v2179
        %v2348 = vpop.f32.mrf.mxu0
        %v2349 = vadd.f32 %v2128, %v2348
        %v2350 = vpop.f32.mrf.mxu0
        %v2351 = vpop.f32.mrf.mxu0
        %v2352 = vadd.f32 %v2128, %v2351
        %v2353 = vpop.f32.mrf.mxu0
        %2354 = vmatprep.mubr.bf16.mxu0 0
        %2355 = vmatmul.mubr.bf16.gmra.mxu0 %v2182
        %v2356 = vpop.f32.mrf.mxu0
        %v2357 = vadd.f32 %v2128, %v2356
        %v2358 = vpop.f32.mrf.mxu0
        %v2359 = vpop.f32.mrf.mxu0
        %v2360 = vadd.f32 %v2128, %v2359
        %v2361 = vpop.f32.mrf.mxu0
        %2362 = vmatprep.mubr.bf16.mxu0 0
        %2363 = vmatmul.mubr.bf16.gmra.mxu0 %v2185
        %v2364 = vpop.f32.mrf.mxu0
        %v2365 = vadd.f32 %v2128, %v2364
        %v2366 = vpop.f32.mrf.mxu0
        %v2367 = vpop.f32.mrf.mxu0
        %v2368 = vadd.f32 %v2128, %v2367
        %v2369 = vpop.f32.mrf.mxu0
        %2370 = vmatprep.mubr.bf16.mxu0 0
        %2371 = vmatmul.mubr.bf16.gmra.mxu0 %v2188
        %v2372 = vpop.f32.mrf.mxu0
        %v2373 = vadd.f32 %v2128, %v2372
        %v2374 = vpop.f32.mrf.mxu0
        %v2375 = vpop.f32.mrf.mxu0
        %v2376 = vadd.f32 %v2128, %v2375
        %v2377 = vpop.f32.mrf.mxu0
        %2378 = vmatprep.mubr.bf16.mxu0 0
        %2379 = vmatmul.mubr.bf16.gmra.mxu0 %v2191
        %v2380 = vpop.f32.mrf.mxu0
        %v2381 = vadd.f32 %v2128, %v2380
        %v2382 = vpop.f32.mrf.mxu0
        %v2383 = vpop.f32.mrf.mxu0
        %v2384 = vadd.f32 %v2128, %v2383
        %v2385 = vpop.f32.mrf.mxu0
        %2386 = vmatprep.mubr.bf16.mxu0 0
        %2387 = vmatmul.mubr.bf16.gmra.mxu0 %v2194
        %v2388 = vpop.f32.mrf.mxu0
        %v2389 = vadd.f32 %v2128, %v2388
        %v2390 = vpop.f32.mrf.mxu0
        %v2391 = vpop.f32.mrf.mxu0
        %v2392 = vadd.f32 %v2128, %v2391
        %v2393 = vpop.f32.mrf.mxu0
        %2394 = vmatprep.mubr.bf16.mxu0 0
        %2395 = vmatmul.mubr.bf16.gmra.mxu0 %v2197
        %v2396 = vpop.f32.mrf.mxu0
        %v2397 = vadd.f32 %v2128, %v2396
        %v2398 = vpop.f32.mrf.mxu0
        %v2399 = vpop.f32.mrf.mxu0
        %v2400 = vadd.f32 %v2128, %v2399
        %v2401 = vpop.f32.mrf.mxu0
        %2402 = vmatprep.mubr.bf16.mxu0 0
        %2403 = vmatmul.mubr.bf16.gmra.mxu0 %v2200
        %v2404 = vpop.f32.mrf.mxu0
        %v2405 = vadd.f32 %v2128, %v2404
        %v2406 = vpop.f32.mrf.mxu0
        %v2407 = vpop.f32.mrf.mxu0
        %v2408 = vadd.f32 %v2128, %v2407
        %v2409 = vpop.f32.mrf.mxu0
        %2410 = vmatprep.mubr.bf16.mxu0 0
        %2411 = vmatmul.mubr.bf16.gmra.mxu0 %v2203
        %v2412 = vpop.f32.mrf.mxu0
        %v2413 = vadd.f32 %v2128, %v2412
        %v2414 = vpop.f32.mrf.mxu0
        %v2415 = vpop.f32.mrf.mxu0
        %v2416 = vadd.f32 %v2128, %v2415
        %v2417 = vpop.f32.mrf.mxu0
        %2418 = vmatprep.mubr.bf16.mxu0 0
        %2419 = vmatmul.mubr.bf16.gmra.mxu0 %v2206
        %v2420 = vpop.f32.mrf.mxu0
        %v2421 = vadd.f32 %v2128, %v2420
        %v2422 = vpop.f32.mrf.mxu0
        %v2423 = vpop.f32.mrf.mxu0
        %v2424 = vadd.f32 %v2128, %v2423
        %v2425 = vpop.f32.mrf.mxu0
        %2426 = vmatprep.mubr.bf16.mxu0 0
        %2427 = vmatmul.mubr.bf16.gmra.mxu0 %v2209
        %v2428 = vpop.f32.mrf.mxu0
        %v2429 = vadd.f32 %v2128, %v2428
        %v2430 = vpop.f32.mrf.mxu0
        %v2431 = vpop.f32.mrf.mxu0
        %v2432 = vadd.f32 %v2128, %v2431
        %v2433 = vpop.f32.mrf.mxu0
        %2434 = vmatprep.mubr.bf16.mxu0 0
        %2435 = vmatmul.mubr.bf16.gmra.mxu0 %v2212
        %v2436 = vpop.f32.mrf.mxu0
        %v2437 = vadd.f32 %v2128, %v2436
        %v2438 = vpop.f32.mrf.mxu0
        %v2439 = vpop.f32.mrf.mxu0
        %v2440 = vadd.f32 %v2128, %v2439
        %v2441 = vpop.f32.mrf.mxu0
        %2442 = vmatprep.mubr.bf16.mxu0 0
        %2443 = vmatmul.mubr.bf16.gmra.mxu0 %v2215
        %v2444 = vpop.f32.mrf.mxu0
        %v2445 = vadd.f32 %v2128, %v2444
        %v2446 = vpop.f32.mrf.mxu0
        %v2447 = vpop.f32.mrf.mxu0
        %v2448 = vadd.f32 %v2128, %v2447
        %v2449 = vpop.f32.mrf.mxu0
        %2450 = vmatprep.mubr.bf16.mxu0 0
        %2451 = vmatmul.mubr.bf16.gmra.mxu0 %v2218
        %v2452 = vpop.f32.mrf.mxu0
        %v2453 = vadd.f32 %v2128, %v2452
        %v2454 = vpop.f32.mrf.mxu0
        %v2455 = vpop.f32.mrf.mxu0
        %v2456 = vadd.f32 %v2128, %v2455
        %v2457 = vpop.f32.mrf.mxu0
        %2458 = vmatprep.mubr.bf16.mxu0 0
        %2459 = vmatmul.mubr.bf16.gmra.mxu0 %v2221
        %v2460 = vpop.f32.mrf.mxu0
        %v2461 = vadd.f32 %v2128, %v2460
        %v2462 = vpop.f32.mrf.mxu0
        %v2463 = vpop.f32.mrf.mxu0
        %v2464 = vadd.f32 %v2128, %v2463
        %v2465 = vpop.f32.mrf.mxu0
        %2466 = vmatprep.mubr.bf16.mxu0 0
        %2467 = vmatmul.mubr.bf16.gmra.mxu0 %v2224
        %v2468 = vpop.f32.mrf.mxu0
        %v2469 = vadd.f32 %v2128, %v2468
        %v2470 = vpop.f32.mrf.mxu0
        %v2471 = vpop.f32.mrf.mxu0
        %v2472 = vadd.f32 %v2128, %v2471
        %v2473 = vpop.f32.mrf.mxu0
        %2474 = vmatprep.mubr.bf16.mxu0 0
        %2475 = vmatmul.mubr.bf16.gmra.mxu0 %v2227
        %v2476 = vpop.f32.mrf.mxu0
        %v2477 = vadd.f32 %v2128, %v2476
        %v2478 = vpop.f32.mrf.mxu0
        %v2479 = vpop.f32.mrf.mxu0
        %v2480 = vadd.f32 %v2128, %v2479
        %v2481 = vpop.f32.mrf.mxu0
        %2482 = vmatprep.mubr.bf16.mxu0 0
        %2483 = vmatmul.mubr.bf16.gmra.mxu0 %v2230
        %v2484 = vpop.f32.mrf.mxu0
        %v2485 = vadd.f32 %v2128, %v2484
        %v2486 = vpop.f32.mrf.mxu0
        %v2487 = vpop.f32.mrf.mxu0
        %v2488 = vadd.f32 %v2128, %v2487
        %v2489 = vpop.f32.mrf.mxu0
        %2490 = vmatprep.mubr.bf16.mxu0 0
        %2491 = vmatmul.mubr.bf16.gmra.mxu0 %v2233
        %v2492 = vpop.f32.mrf.mxu0
        %v2493 = vadd.f32 %v2128, %v2492
        %v2494 = vpop.f32.mrf.mxu0
        %v2495 = vpop.f32.mrf.mxu0
        %v2496 = vadd.f32 %v2128, %v2495
        %v2497 = vpop.f32.mrf.mxu0
        %2498 = vmatprep.mubr.bf16.mxu0 0
        %2499 = vmatmul.mubr.bf16.gmra.mxu0 %v2236
        %v2500 = vpop.f32.mrf.mxu0
        %v2501 = vadd.f32 %v2128, %v2500
        %v2502 = vpop.f32.mrf.mxu0
        %v2503 = vpop.f32.mrf.mxu0
        %v2504 = vadd.f32 %v2128, %v2503
        %v2505 = vpop.f32.mrf.mxu0
        %2506 = vmatprep.mubr.bf16.mxu0 0
        %2507 = vmatmul.mubr.bf16.gmra.mxu0 %v2239
        %v2508 = vpop.f32.mrf.mxu0
        %v2509 = vadd.f32 %v2128, %v2508
        %v2510 = vpop.f32.mrf.mxu0
        %v2511 = vpop.f32.mrf.mxu0
        %v2512 = vadd.f32 %v2128, %v2511
        %v2513 = vpop.f32.mrf.mxu0
        %2514 = vmatprep.mubr.bf16.mxu0 0
        %2515 = vmatmul.mubr.bf16.gmra.mxu0 %v2242
        %v2516 = vpop.f32.mrf.mxu0
        %v2517 = vadd.f32 %v2128, %v2516
        %v2518 = vpop.f32.mrf.mxu0
        %v2519 = vpop.f32.mrf.mxu0
        %v2520 = vadd.f32 %v2128, %v2519
        %v2521 = vpop.f32.mrf.mxu0
        %2522 = vmatprep.mubr.bf16.mxu0 0
        %2523 = vmatmul.mubr.bf16.gmra.mxu0 %v2245
        %v2524 = vpop.f32.mrf.mxu0
        %v2525 = vadd.f32 %v2128, %v2524
        %v2526 = vpop.f32.mrf.mxu0
        %v2527 = vpop.f32.mrf.mxu0
        %v2528 = vadd.f32 %v2128, %v2527
        %v2529 = vpop.f32.mrf.mxu0
        %2530 = vmatprep.mubr.bf16.mxu0 0
        %2531 = vmatmul.mubr.bf16.gmra.mxu0 %v2248
        %v2532 = vpop.f32.mrf.mxu0
        %v2533 = vadd.f32 %v2128, %v2532
        %v2534 = vpop.f32.mrf.mxu0
        %v2535 = vpop.f32.mrf.mxu0
        %v2536 = vadd.f32 %v2128, %v2535
        %v2537 = vpop.f32.mrf.mxu0
        %2538 = vdwg.mxu0
        %v2539 = vmax.f32 %v2285, 0.0
        %v2540 = vmax.f32 %v2288, 0.0
        %v2541 = vmax.f32 %v2293, 0.0
        %v2542 = vmax.f32 %v2296, 0.0
        %v2543 = vmax.f32 %v2301, 0.0
        %v2544 = vmax.f32 %v2304, 0.0
        %v2545 = vmax.f32 %v2309, 0.0
        %v2546 = vmax.f32 %v2312, 0.0
        %v2547 = vmax.f32 %v2317, 0.0
        %v2548 = vmax.f32 %v2320, 0.0
        %v2549 = vmax.f32 %v2325, 0.0
        %v2550 = vmax.f32 %v2328, 0.0
        %v2551 = vmax.f32 %v2333, 0.0
        %v2552 = vmax.f32 %v2336, 0.0
        %v2553 = vmax.f32 %v2341, 0.0
        %v2554 = vmax.f32 %v2344, 0.0
        %v2555 = vmax.f32 %v2349, 0.0
        %v2556 = vmax.f32 %v2352, 0.0
        %v2557 = vmax.f32 %v2357, 0.0
        %v2558 = vmax.f32 %v2360, 0.0
        %v2559 = vmax.f32 %v2365, 0.0
        %v2560 = vmax.f32 %v2368, 0.0
        %v2561 = vmax.f32 %v2373, 0.0
        %v2562 = vmax.f32 %v2376, 0.0
        %v2563 = vmax.f32 %v2381, 0.0
        %v2564 = vmax.f32 %v2384, 0.0
        %v2565 = vmax.f32 %v2389, 0.0
        %v2566 = vmax.f32 %v2392, 0.0
        %v2567 = vmax.f32 %v2397, 0.0
        %v2568 = vmax.f32 %v2400, 0.0
        %v2569 = vmax.f32 %v2405, 0.0
        %v2570 = vmax.f32 %v2408, 0.0
        %v2571 = vmax.f32 %v2413, 0.0
        %v2572 = vmax.f32 %v2416, 0.0
        %v2573 = vmax.f32 %v2421, 0.0
        %v2574 = vmax.f32 %v2424, 0.0
        %v2575 = vmax.f32 %v2429, 0.0
        %v2576 = vmax.f32 %v2432, 0.0
        %v2577 = vmax.f32 %v2437, 0.0
        %v2578 = vmax.f32 %v2440, 0.0
        %v2579 = vmax.f32 %v2445, 0.0
        %v2580 = vmax.f32 %v2448, 0.0
        %v2581 = vmax.f32 %v2453, 0.0
        %v2582 = vmax.f32 %v2456, 0.0
        %v2583 = vmax.f32 %v2461, 0.0
        %v2584 = vmax.f32 %v2464, 0.0
        %v2585 = vmax.f32 %v2469, 0.0
        %v2586 = vmax.f32 %v2472, 0.0
        %v2587 = vmax.f32 %v2477, 0.0
        %v2588 = vmax.f32 %v2480, 0.0
        %v2589 = vmax.f32 %v2485, 0.0
        %v2590 = vmax.f32 %v2488, 0.0
        %v2591 = vmax.f32 %v2493, 0.0
        %v2592 = vmax.f32 %v2496, 0.0
        %v2593 = vmax.f32 %v2501, 0.0
        %v2594 = vmax.f32 %v2504, 0.0
        %v2595 = vmax.f32 %v2509, 0.0
        %v2596 = vmax.f32 %v2512, 0.0
        %v2597 = vmax.f32 %v2517, 0.0
        %v2598 = vmax.f32 %v2520, 0.0
        %v2599 = vmax.f32 %v2525, 0.0
        %v2600 = vmax.f32 %v2528, 0.0
        %v2601 = vmax.f32 %v2533, 0.0
        %v2602 = vmax.f32 %v2536, 0.0
        %v2603 = vld [vmem:[%s7] sm:$0xf]
        %v2604 = vld [vmem:[%s7 + $0x4] sm:$0xf]
        %v2605 = vld [vmem:[%s7 + $0x8] sm:$0xf]
        %v2606 = vld [vmem:[%s7 + $0xc] sm:$0xf]
        %v2607 = vld [vmem:[%s7 + $0x10] sm:$0xf]
        %v2608 = vld [vmem:[%s7 + $0x14] sm:$0xf]
        %v2609 = vld [vmem:[%s7 + $0x18] sm:$0xf]
        %v2610 = vld [vmem:[%s7 + $0x1c] sm:$0xf]
        %v2611 = vld [vmem:[%s8] sm:$0x1]
        %v2612 = vpack.c.bf16 %v2540, %v2539
        %v2613 = vpack.c.bf16 %v2542, %v2541
        %v2614 = vpack.c.bf16 %v2544, %v2543
        %v2615 = vpack.c.bf16 %v2546, %v2545
        %v2616 = vpack.c.bf16 %v2548, %v2547
        %v2617 = vpack.c.bf16 %v2550, %v2549
        %v2618 = vpack.c.bf16 %v2552, %v2551
        %v2619 = vpack.c.bf16 %v2554, %v2553
        %v2620 = vpack.c.bf16 %v2556, %v2555
        %v2621 = vpack.c.bf16 %v2558, %v2557
        %v2622 = vpack.c.bf16 %v2560, %v2559
        %v2623 = vpack.c.bf16 %v2562, %v2561
        %v2624 = vpack.c.bf16 %v2564, %v2563
        %v2625 = vpack.c.bf16 %v2566, %v2565
        %v2626 = vpack.c.bf16 %v2568, %v2567
        %v2627 = vpack.c.bf16 %v2570, %v2569
        %v2628 = vpack.c.bf16 %v2572, %v2571
        %v2629 = vpack.c.bf16 %v2574, %v2573
        %v2630 = vpack.c.bf16 %v2576, %v2575
        %v2631 = vpack.c.bf16 %v2578, %v2577
        %v2632 = vpack.c.bf16 %v2580, %v2579
        %v2633 = vpack.c.bf16 %v2582, %v2581
        %v2634 = vpack.c.bf16 %v2584, %v2583
        %v2635 = vpack.c.bf16 %v2586, %v2585
        %v2636 = vpack.c.bf16 %v2588, %v2587
        %v2637 = vpack.c.bf16 %v2590, %v2589
        %v2638 = vpack.c.bf16 %v2592, %v2591
        %v2639 = vpack.c.bf16 %v2594, %v2593
        %v2640 = vpack.c.bf16 %v2596, %v2595
        %v2641 = vpack.c.bf16 %v2598, %v2597
        %v2642 = vpack.c.bf16 %v2600, %v2599
        %v2643 = vpack.c.bf16 %v2602, %v2601
        %v2645 = vlaneseq
        %v2646 = vshrl.u32 %v2645, 7
        %v2647 = vsub.s32 0, %v2646
        %v2648 = vrot.slane %v2611, %v2647
        %v2658 = vunpack.c.l.b16 %v2603
        %v2659 = vunpack.c.l.b16 %v2604
        %v2660 = vunpack.c.l.b16 %v2605
        %v2661 = vunpack.c.l.b16 %v2606
        %v2662 = vunpack.c.l.b16 %v2607
        %v2663 = vunpack.c.l.b16 %v2608
        %v2664 = vunpack.c.l.b16 %v2609
        %v2665 = vunpack.c.l.b16 %v2610
        %v2666 = vpack.c.b16 %v2659, %v2658
        %v2667 = vpack.c.b16 %v2661, %v2660
        %v2668 = vpack.c.b16 %v2663, %v2662
        %v2669 = vpack.c.b16 %v2665, %v2664
        %v2675 = vsel %vm993, %v2612, 0
        %v2678 = vsel %vm993, %v2613, 0
        %v2681 = vsel %vm993, %v2614, 0
        %v2684 = vsel %vm993, %v2615, 0
        %v2687 = vsel %vm993, %v2616, 0
        %v2690 = vsel %vm993, %v2617, 0
        %v2693 = vsel %vm993, %v2618, 0
        %v2696 = vsel %vm993, %v2619, 0
        %v2699 = vsel %vm993, %v2620, 0
        %v2702 = vsel %vm993, %v2621, 0
        %v2705 = vsel %vm993, %v2622, 0
        %v2708 = vsel %vm993, %v2623, 0
        %v2711 = vsel %vm993, %v2624, 0
        %v2714 = vsel %vm993, %v2625, 0
        %v2717 = vsel %vm993, %v2626, 0
        %v2720 = vsel %vm993, %v2627, 0
        %v2723 = vsel %vm993, %v2628, 0
        %v2726 = vsel %vm993, %v2629, 0
        %v2729 = vsel %vm993, %v2630, 0
        %v2732 = vsel %vm993, %v2631, 0
        %v2735 = vsel %vm993, %v2632, 0
        %v2738 = vsel %vm993, %v2633, 0
        %v2741 = vsel %vm993, %v2634, 0
        %v2744 = vsel %vm993, %v2635, 0
        %v2747 = vsel %vm993, %v2636, 0
        %v2750 = vsel %vm993, %v2637, 0
        %v2753 = vsel %vm993, %v2638, 0
        %v2756 = vsel %vm993, %v2639, 0
        %v2759 = vsel %vm993, %v2640, 0
        %v2762 = vsel %vm993, %v2641, 0
        %v2765 = vsel %vm993, %v2642, 0
        %v2768 = vsel %vm993, %v2643, 0
        %2770 = vmatprep.subr.bf16.mxu0 0
        %2771 = vmatpush1.bf16.msra.mxu0 0
        %2772 = vmatprep.subr.bf16.mxu0 0
        %2773 = vmatpush1.bf16.msra.mxu0 0
        %2774 = vmatprep.subr.bf16.mxu0 0
        %2775 = vmatpush1.bf16.msra.mxu0 0
        %2776 = vmatprep.subr.bf16.mxu0 0
        %2777 = vmatpush1.bf16.msra.mxu0 0
        %2778 = vmatprep.subr.bf16.mxu0 0
        %2779 = vmatpush1.bf16.msra.mxu0 %v2669
        %2780 = vmatprep.subr.bf16.mxu0 0
        %2781 = vmatpush1.bf16.msra.mxu0 %v2668
        %2782 = vmatprep.subr.bf16.mxu0 0
        %2783 = vmatpush1.bf16.msra.mxu0 %v2667
        %2784 = vmatprep.subr.bf16.mxu0 0
        %2785 = vmatpush1.bf16.msra.mxu0 %v2666
        %2786 = vmatprep.subr.bf16.mxu0 0
        %2787 = vmatpush2.bf16.msra.mxu0 0
        %2788 = vmatprep.subr.bf16.mxu0 0
        %2789 = vmatpush2.bf16.msra.mxu0 0
        %2790 = vmatprep.subr.bf16.mxu0 0
        %2791 = vmatpush2.bf16.msra.mxu0 0
        %2792 = vmatprep.subr.bf16.mxu0 0
        %2793 = vmatpush2.bf16.msra.mxu0 0
        %2794 = vmatprep.subr.bf16.mxu0 0
        %2795 = vmatpush2.bf16.msra.mxu0 0
        %2796 = vmatprep.subr.bf16.mxu0 0
        %2797 = vmatpush2.bf16.msra.mxu0 0
        %2798 = vmatprep.subr.bf16.mxu0 0
        %2799 = vmatpush2.bf16.msra.mxu0 0
        %2800 = vmatprep.subr.bf16.mxu0 0
        %2801 = vmatpush2.bf16.msra.mxu0 0
        %2802 = vmatprep.mubr.bf16.mxu0 0
        %2803 = vmatmul.mubr.bf16.gmra.mxu0 %v2675
        %v2804 = vpop.f32.mrf.mxu0
        %v2805 = vadd.f32 %v2648, %v2804
        %v2806 = vpop.f32.mrf.mxu0
        %v2807 = vpop.f32.mrf.mxu0
        %v2808 = vadd.f32 %v2648, %v2807
        %v2809 = vpop.f32.mrf.mxu0
        %2810 = vmatprep.mubr.bf16.mxu0 0
        %2811 = vmatmul.mubr.bf16.gmra.mxu0 %v2678
        %v2812 = vpop.f32.mrf.mxu0
        %v2813 = vadd.f32 %v2648, %v2812
        %v2814 = vpop.f32.mrf.mxu0
        %v2815 = vpop.f32.mrf.mxu0
        %v2816 = vadd.f32 %v2648, %v2815
        %v2817 = vpop.f32.mrf.mxu0
        %2818 = vmatprep.mubr.bf16.mxu0 0
        %2819 = vmatmul.mubr.bf16.gmra.mxu0 %v2681
        %v2820 = vpop.f32.mrf.mxu0
        %v2821 = vadd.f32 %v2648, %v2820
        %v2822 = vpop.f32.mrf.mxu0
        %v2823 = vpop.f32.mrf.mxu0
        %v2824 = vadd.f32 %v2648, %v2823
        %v2825 = vpop.f32.mrf.mxu0
        %2826 = vmatprep.mubr.bf16.mxu0 0
        %2827 = vmatmul.mubr.bf16.gmra.mxu0 %v2684
        %v2828 = vpop.f32.mrf.mxu0
        %v2829 = vadd.f32 %v2648, %v2828
        %v2830 = vpop.f32.mrf.mxu0
        %v2831 = vpop.f32.mrf.mxu0
        %v2832 = vadd.f32 %v2648, %v2831
        %v2833 = vpop.f32.mrf.mxu0
        %2834 = vmatprep.mubr.bf16.mxu0 0
        %2835 = vmatmul.mubr.bf16.gmra.mxu0 %v2687
        %v2836 = vpop.f32.mrf.mxu0
        %v2837 = vadd.f32 %v2648, %v2836
        %v2838 = vpop.f32.mrf.mxu0
        %v2839 = vpop.f32.mrf.mxu0
        %v2840 = vadd.f32 %v2648, %v2839
        %v2841 = vpop.f32.mrf.mxu0
        %2842 = vmatprep.mubr.bf16.mxu0 0
        %2843 = vmatmul.mubr.bf16.gmra.mxu0 %v2690
        %v2844 = vpop.f32.mrf.mxu0
        %v2845 = vadd.f32 %v2648, %v2844
        %v2846 = vpop.f32.mrf.mxu0
        %v2847 = vpop.f32.mrf.mxu0
        %v2848 = vadd.f32 %v2648, %v2847
        %v2849 = vpop.f32.mrf.mxu0
        %2850 = vmatprep.mubr.bf16.mxu0 0
        %2851 = vmatmul.mubr.bf16.gmra.mxu0 %v2693
        %v2852 = vpop.f32.mrf.mxu0
        %v2853 = vadd.f32 %v2648, %v2852
        %v2854 = vpop.f32.mrf.mxu0
        %v2855 = vpop.f32.mrf.mxu0
        %v2856 = vadd.f32 %v2648, %v2855
        %v2857 = vpop.f32.mrf.mxu0
        %2858 = vmatprep.mubr.bf16.mxu0 0
        %2859 = vmatmul.mubr.bf16.gmra.mxu0 %v2696
        %v2860 = vpop.f32.mrf.mxu0
        %v2861 = vadd.f32 %v2648, %v2860
        %v2862 = vpop.f32.mrf.mxu0
        %v2863 = vpop.f32.mrf.mxu0
        %v2864 = vadd.f32 %v2648, %v2863
        %v2865 = vpop.f32.mrf.mxu0
        %2866 = vmatprep.mubr.bf16.mxu0 0
        %2867 = vmatmul.mubr.bf16.gmra.mxu0 %v2699
        %v2868 = vpop.f32.mrf.mxu0
        %v2869 = vadd.f32 %v2648, %v2868
        %v2870 = vpop.f32.mrf.mxu0
        %v2871 = vpop.f32.mrf.mxu0
        %v2872 = vadd.f32 %v2648, %v2871
        %v2873 = vpop.f32.mrf.mxu0
        %2874 = vmatprep.mubr.bf16.mxu0 0
        %2875 = vmatmul.mubr.bf16.gmra.mxu0 %v2702
        %v2876 = vpop.f32.mrf.mxu0
        %v2877 = vadd.f32 %v2648, %v2876
        %v2878 = vpop.f32.mrf.mxu0
        %v2879 = vpop.f32.mrf.mxu0
        %v2880 = vadd.f32 %v2648, %v2879
        %v2881 = vpop.f32.mrf.mxu0
        %2882 = vmatprep.mubr.bf16.mxu0 0
        %2883 = vmatmul.mubr.bf16.gmra.mxu0 %v2705
        %v2884 = vpop.f32.mrf.mxu0
        %v2885 = vadd.f32 %v2648, %v2884
        %v2886 = vpop.f32.mrf.mxu0
        %v2887 = vpop.f32.mrf.mxu0
        %v2888 = vadd.f32 %v2648, %v2887
        %v2889 = vpop.f32.mrf.mxu0
        %2890 = vmatprep.mubr.bf16.mxu0 0
        %2891 = vmatmul.mubr.bf16.gmra.mxu0 %v2708
        %v2892 = vpop.f32.mrf.mxu0
        %v2893 = vadd.f32 %v2648, %v2892
        %v2894 = vpop.f32.mrf.mxu0
        %v2895 = vpop.f32.mrf.mxu0
        %v2896 = vadd.f32 %v2648, %v2895
        %v2897 = vpop.f32.mrf.mxu0
        %2898 = vmatprep.mubr.bf16.mxu0 0
        %2899 = vmatmul.mubr.bf16.gmra.mxu0 %v2711
        %v2900 = vpop.f32.mrf.mxu0
        %v2901 = vadd.f32 %v2648, %v2900
        %v2902 = vpop.f32.mrf.mxu0
        %v2903 = vpop.f32.mrf.mxu0
        %v2904 = vadd.f32 %v2648, %v2903
        %v2905 = vpop.f32.mrf.mxu0
        %2906 = vmatprep.mubr.bf16.mxu0 0
        %2907 = vmatmul.mubr.bf16.gmra.mxu0 %v2714
        %v2908 = vpop.f32.mrf.mxu0
        %v2909 = vadd.f32 %v2648, %v2908
        %v2910 = vpop.f32.mrf.mxu0
        %v2911 = vpop.f32.mrf.mxu0
        %v2912 = vadd.f32 %v2648, %v2911
        %v2913 = vpop.f32.mrf.mxu0
        %2914 = vmatprep.mubr.bf16.mxu0 0
        %2915 = vmatmul.mubr.bf16.gmra.mxu0 %v2717
        %v2916 = vpop.f32.mrf.mxu0
        %v2917 = vadd.f32 %v2648, %v2916
        %v2918 = vpop.f32.mrf.mxu0
        %v2919 = vpop.f32.mrf.mxu0
        %v2920 = vadd.f32 %v2648, %v2919
        %v2921 = vpop.f32.mrf.mxu0
        %2922 = vmatprep.mubr.bf16.mxu0 0
        %2923 = vmatmul.mubr.bf16.gmra.mxu0 %v2720
        %v2924 = vpop.f32.mrf.mxu0
        %v2925 = vadd.f32 %v2648, %v2924
        %v2926 = vpop.f32.mrf.mxu0
        %v2927 = vpop.f32.mrf.mxu0
        %v2928 = vadd.f32 %v2648, %v2927
        %v2929 = vpop.f32.mrf.mxu0
        %2930 = vmatprep.mubr.bf16.mxu0 0
        %2931 = vmatmul.mubr.bf16.gmra.mxu0 %v2723
        %v2932 = vpop.f32.mrf.mxu0
        %v2933 = vadd.f32 %v2648, %v2932
        %v2934 = vpop.f32.mrf.mxu0
        %v2935 = vpop.f32.mrf.mxu0
        %v2936 = vadd.f32 %v2648, %v2935
        %v2937 = vpop.f32.mrf.mxu0
        %2938 = vmatprep.mubr.bf16.mxu0 0
        %2939 = vmatmul.mubr.bf16.gmra.mxu0 %v2726
        %v2940 = vpop.f32.mrf.mxu0
        %v2941 = vadd.f32 %v2648, %v2940
        %v2942 = vpop.f32.mrf.mxu0
        %v2943 = vpop.f32.mrf.mxu0
        %v2944 = vadd.f32 %v2648, %v2943
        %v2945 = vpop.f32.mrf.mxu0
        %2946 = vmatprep.mubr.bf16.mxu0 0
        %2947 = vmatmul.mubr.bf16.gmra.mxu0 %v2729
        %v2948 = vpop.f32.mrf.mxu0
        %v2949 = vadd.f32 %v2648, %v2948
        %v2950 = vpop.f32.mrf.mxu0
        %v2951 = vpop.f32.mrf.mxu0
        %v2952 = vadd.f32 %v2648, %v2951
        %v2953 = vpop.f32.mrf.mxu0
        %2954 = vmatprep.mubr.bf16.mxu0 0
        %2955 = vmatmul.mubr.bf16.gmra.mxu0 %v2732
        %v2956 = vpop.f32.mrf.mxu0
        %v2957 = vadd.f32 %v2648, %v2956
        %v2958 = vpop.f32.mrf.mxu0
        %v2959 = vpop.f32.mrf.mxu0
        %v2960 = vadd.f32 %v2648, %v2959
        %v2961 = vpop.f32.mrf.mxu0
        %2962 = vmatprep.mubr.bf16.mxu0 0
        %2963 = vmatmul.mubr.bf16.gmra.mxu0 %v2735
        %v2964 = vpop.f32.mrf.mxu0
        %v2965 = vadd.f32 %v2648, %v2964
        %v2966 = vpop.f32.mrf.mxu0
        %v2967 = vpop.f32.mrf.mxu0
        %v2968 = vadd.f32 %v2648, %v2967
        %v2969 = vpop.f32.mrf.mxu0
        %2970 = vmatprep.mubr.bf16.mxu0 0
        %2971 = vmatmul.mubr.bf16.gmra.mxu0 %v2738
        %v2972 = vpop.f32.mrf.mxu0
        %v2973 = vadd.f32 %v2648, %v2972
        %v2974 = vpop.f32.mrf.mxu0
        %v2975 = vpop.f32.mrf.mxu0
        %v2976 = vadd.f32 %v2648, %v2975
        %v2977 = vpop.f32.mrf.mxu0
        %2978 = vmatprep.mubr.bf16.mxu0 0
        %2979 = vmatmul.mubr.bf16.gmra.mxu0 %v2741
        %v2980 = vpop.f32.mrf.mxu0
        %v2981 = vadd.f32 %v2648, %v2980
        %v2982 = vpop.f32.mrf.mxu0
        %v2983 = vpop.f32.mrf.mxu0
        %v2984 = vadd.f32 %v2648, %v2983
        %v2985 = vpop.f32.mrf.mxu0
        %2986 = vmatprep.mubr.bf16.mxu0 0
        %2987 = vmatmul.mubr.bf16.gmra.mxu0 %v2744
        %v2988 = vpop.f32.mrf.mxu0
        %v2989 = vadd.f32 %v2648, %v2988
        %v2990 = vpop.f32.mrf.mxu0
        %v2991 = vpop.f32.mrf.mxu0
        %v2992 = vadd.f32 %v2648, %v2991
        %v2993 = vpop.f32.mrf.mxu0
        %2994 = vmatprep.mubr.bf16.mxu0 0
        %2995 = vmatmul.mubr.bf16.gmra.mxu0 %v2747
        %v2996 = vpop.f32.mrf.mxu0
        %v2997 = vadd.f32 %v2648, %v2996
        %v2998 = vpop.f32.mrf.mxu0
        %v2999 = vpop.f32.mrf.mxu0
        %v3000 = vadd.f32 %v2648, %v2999
        %v3001 = vpop.f32.mrf.mxu0
        %3002 = vmatprep.mubr.bf16.mxu0 0
        %3003 = vmatmul.mubr.bf16.gmra.mxu0 %v2750
        %v3004 = vpop.f32.mrf.mxu0
        %v3005 = vadd.f32 %v2648, %v3004
        %v3006 = vpop.f32.mrf.mxu0
        %v3007 = vpop.f32.mrf.mxu0
        %v3008 = vadd.f32 %v2648, %v3007
        %v3009 = vpop.f32.mrf.mxu0
        %3010 = vmatprep.mubr.bf16.mxu0 0
        %3011 = vmatmul.mubr.bf16.gmra.mxu0 %v2753
        %v3012 = vpop.f32.mrf.mxu0
        %v3013 = vadd.f32 %v2648, %v3012
        %v3014 = vpop.f32.mrf.mxu0
        %v3015 = vpop.f32.mrf.mxu0
        %v3016 = vadd.f32 %v2648, %v3015
        %v3017 = vpop.f32.mrf.mxu0
        %3018 = vmatprep.mubr.bf16.mxu0 0
        %3019 = vmatmul.mubr.bf16.gmra.mxu0 %v2756
        %v3020 = vpop.f32.mrf.mxu0
        %v3021 = vadd.f32 %v2648, %v3020
        %v3022 = vpop.f32.mrf.mxu0
        %v3023 = vpop.f32.mrf.mxu0
        %v3024 = vadd.f32 %v2648, %v3023
        %v3025 = vpop.f32.mrf.mxu0
        %3026 = vmatprep.mubr.bf16.mxu0 0
        %3027 = vmatmul.mubr.bf16.gmra.mxu0 %v2759
        %v3028 = vpop.f32.mrf.mxu0
        %v3029 = vadd.f32 %v2648, %v3028
        %v3030 = vpop.f32.mrf.mxu0
        %v3031 = vpop.f32.mrf.mxu0
        %v3032 = vadd.f32 %v2648, %v3031
        %v3033 = vpop.f32.mrf.mxu0
        %3034 = vmatprep.mubr.bf16.mxu0 0
        %3035 = vmatmul.mubr.bf16.gmra.mxu0 %v2762
        %v3036 = vpop.f32.mrf.mxu0
        %v3037 = vadd.f32 %v2648, %v3036
        %v3038 = vpop.f32.mrf.mxu0
        %v3039 = vpop.f32.mrf.mxu0
        %v3040 = vadd.f32 %v2648, %v3039
        %v3041 = vpop.f32.mrf.mxu0
        %3042 = vmatprep.mubr.bf16.mxu0 0
        %3043 = vmatmul.mubr.bf16.gmra.mxu0 %v2765
        %v3044 = vpop.f32.mrf.mxu0
        %v3045 = vadd.f32 %v2648, %v3044
        %v3046 = vpop.f32.mrf.mxu0
        %v3047 = vpop.f32.mrf.mxu0
        %v3048 = vadd.f32 %v2648, %v3047
        %v3049 = vpop.f32.mrf.mxu0
        %3050 = vmatprep.mubr.bf16.mxu0 0
        %3051 = vmatmul.mubr.bf16.gmra.mxu0 %v2768
        %v3052 = vpop.f32.mrf.mxu0
        %v3053 = vadd.f32 %v2648, %v3052
        %v3054 = vpop.f32.mrf.mxu0
        %v3055 = vpop.f32.mrf.mxu0
        %v3056 = vadd.f32 %v2648, %v3055
        %v3057 = vpop.f32.mrf.mxu0
        %3058 = vdwg.mxu0
        %v3059 = vmax.f32 %v2805, 0.0
        %v3060 = vmax.f32 %v2808, 0.0
        %v3061 = vmax.f32 %v2813, 0.0
        %v3062 = vmax.f32 %v2816, 0.0
        %v3063 = vmax.f32 %v2821, 0.0
        %v3064 = vmax.f32 %v2824, 0.0
        %v3065 = vmax.f32 %v2829, 0.0
        %v3066 = vmax.f32 %v2832, 0.0
        %v3067 = vmax.f32 %v2837, 0.0
        %v3068 = vmax.f32 %v2840, 0.0
        %v3069 = vmax.f32 %v2845, 0.0
        %v3070 = vmax.f32 %v2848, 0.0
        %v3071 = vmax.f32 %v2853, 0.0
        %v3072 = vmax.f32 %v2856, 0.0
        %v3073 = vmax.f32 %v2861, 0.0
        %v3074 = vmax.f32 %v2864, 0.0
        %v3075 = vmax.f32 %v2869, 0.0
        %v3076 = vmax.f32 %v2872, 0.0
        %v3077 = vmax.f32 %v2877, 0.0
        %v3078 = vmax.f32 %v2880, 0.0
        %v3079 = vmax.f32 %v2885, 0.0
        %v3080 = vmax.f32 %v2888, 0.0
        %v3081 = vmax.f32 %v2893, 0.0
        %v3082 = vmax.f32 %v2896, 0.0
        %v3083 = vmax.f32 %v2901, 0.0
        %v3084 = vmax.f32 %v2904, 0.0
        %v3085 = vmax.f32 %v2909, 0.0
        %v3086 = vmax.f32 %v2912, 0.0
        %v3087 = vmax.f32 %v2917, 0.0
        %v3088 = vmax.f32 %v2920, 0.0
        %v3089 = vmax.f32 %v2925, 0.0
        %v3090 = vmax.f32 %v2928, 0.0
        %v3091 = vmax.f32 %v2933, 0.0
        %v3092 = vmax.f32 %v2936, 0.0
        %v3093 = vmax.f32 %v2941, 0.0
        %v3094 = vmax.f32 %v2944, 0.0
        %v3095 = vmax.f32 %v2949, 0.0
        %v3096 = vmax.f32 %v2952, 0.0
        %v3097 = vmax.f32 %v2957, 0.0
        %v3098 = vmax.f32 %v2960, 0.0
        %v3099 = vmax.f32 %v2965, 0.0
        %v3100 = vmax.f32 %v2968, 0.0
        %v3101 = vmax.f32 %v2973, 0.0
        %v3102 = vmax.f32 %v2976, 0.0
        %v3103 = vmax.f32 %v2981, 0.0
        %v3104 = vmax.f32 %v2984, 0.0
        %v3105 = vmax.f32 %v2989, 0.0
        %v3106 = vmax.f32 %v2992, 0.0
        %v3107 = vmax.f32 %v2997, 0.0
        %v3108 = vmax.f32 %v3000, 0.0
        %v3109 = vmax.f32 %v3005, 0.0
        %v3110 = vmax.f32 %v3008, 0.0
        %v3111 = vmax.f32 %v3013, 0.0
        %v3112 = vmax.f32 %v3016, 0.0
        %v3113 = vmax.f32 %v3021, 0.0
        %v3114 = vmax.f32 %v3024, 0.0
        %v3115 = vmax.f32 %v3029, 0.0
        %v3116 = vmax.f32 %v3032, 0.0
        %v3117 = vmax.f32 %v3037, 0.0
        %v3118 = vmax.f32 %v3040, 0.0
        %v3119 = vmax.f32 %v3045, 0.0
        %v3120 = vmax.f32 %v3048, 0.0
        %v3121 = vmax.f32 %v3053, 0.0
        %v3122 = vmax.f32 %v3056, 0.0
        %v3123 = vld [vmem:[%s10] sm:$0xf]
        %v3124 = vpack.c.bf16 %v3060, %v3059
        %v3125 = vpack.c.bf16 %v3062, %v3061
        %v3126 = vpack.c.bf16 %v3064, %v3063
        %v3127 = vpack.c.bf16 %v3066, %v3065
        %v3128 = vpack.c.bf16 %v3068, %v3067
        %v3129 = vpack.c.bf16 %v3070, %v3069
        %v3130 = vpack.c.bf16 %v3072, %v3071
        %v3131 = vpack.c.bf16 %v3074, %v3073
        %v3132 = vpack.c.bf16 %v3076, %v3075
        %v3133 = vpack.c.bf16 %v3078, %v3077
        %v3134 = vpack.c.bf16 %v3080, %v3079
        %v3135 = vpack.c.bf16 %v3082, %v3081
        %v3136 = vpack.c.bf16 %v3084, %v3083
        %v3137 = vpack.c.bf16 %v3086, %v3085
        %v3138 = vpack.c.bf16 %v3088, %v3087
        %v3139 = vpack.c.bf16 %v3090, %v3089
        %v3140 = vpack.c.bf16 %v3092, %v3091
        %v3141 = vpack.c.bf16 %v3094, %v3093
        %v3142 = vpack.c.bf16 %v3096, %v3095
        %v3143 = vpack.c.bf16 %v3098, %v3097
        %v3144 = vpack.c.bf16 %v3100, %v3099
        %v3145 = vpack.c.bf16 %v3102, %v3101
        %v3146 = vpack.c.bf16 %v3104, %v3103
        %v3147 = vpack.c.bf16 %v3106, %v3105
        %v3148 = vpack.c.bf16 %v3108, %v3107
        %v3149 = vpack.c.bf16 %v3110, %v3109
        %v3150 = vpack.c.bf16 %v3112, %v3111
        %v3151 = vpack.c.bf16 %v3114, %v3113
        %v3152 = vpack.c.bf16 %v3116, %v3115
        %v3153 = vpack.c.bf16 %v3118, %v3117
        %v3154 = vpack.c.bf16 %v3120, %v3119
        %v3155 = vpack.c.bf16 %v3122, %v3121
        %v3157 = vsel %vm993, %v3123, 0
        %v3160 = vsel %vm993, %v3124, 0
        %v3163 = vsel %vm993, %v3125, 0
        %v3166 = vsel %vm993, %v3126, 0
        %v3169 = vsel %vm993, %v3127, 0
        %v3172 = vsel %vm993, %v3128, 0
        %v3175 = vsel %vm993, %v3129, 0
        %v3178 = vsel %vm993, %v3130, 0
        %v3181 = vsel %vm993, %v3131, 0
        %v3184 = vsel %vm993, %v3132, 0
        %v3187 = vsel %vm993, %v3133, 0
        %v3190 = vsel %vm993, %v3134, 0
        %v3193 = vsel %vm993, %v3135, 0
        %v3196 = vsel %vm993, %v3136, 0
        %v3199 = vsel %vm993, %v3137, 0
        %v3202 = vsel %vm993, %v3138, 0
        %v3205 = vsel %vm993, %v3139, 0
        %v3208 = vsel %vm993, %v3140, 0
        %v3211 = vsel %vm993, %v3141, 0
        %v3214 = vsel %vm993, %v3142, 0
        %v3217 = vsel %vm993, %v3143, 0
        %v3220 = vsel %vm993, %v3144, 0
        %v3223 = vsel %vm993, %v3145, 0
        %v3226 = vsel %vm993, %v3146, 0
        %v3229 = vsel %vm993, %v3147, 0
        %v3232 = vsel %vm993, %v3148, 0
        %v3235 = vsel %vm993, %v3149, 0
        %v3238 = vsel %vm993, %v3150, 0
        %v3241 = vsel %vm993, %v3151, 0
        %v3244 = vsel %vm993, %v3152, 0
        %v3247 = vsel %vm993, %v3153, 0
        %v3250 = vsel %vm993, %v3154, 0
        %v3253 = vsel %vm993, %v3155, 0
        %3255 = vmatprep.subr.bf16.mxu0 0
        %3256 = vmatpush1.bf16.xpose.msra.mxu0 %v3181
        %3257 = vmatprep.subr.bf16.mxu0 0
        %3258 = vmatpush1.bf16.xpose.msra.mxu0 %v3178
        %3259 = vmatprep.subr.bf16.mxu0 0
        %3260 = vmatpush1.bf16.xpose.msra.mxu0 %v3175
        %3261 = vmatprep.subr.bf16.mxu0 0
        %3262 = vmatpush1.bf16.xpose.msra.mxu0 %v3172
        %3263 = vmatprep.subr.bf16.mxu0 0
        %3264 = vmatpush1.bf16.xpose.msra.mxu0 %v3169
        %3265 = vmatprep.subr.bf16.mxu0 0
        %3266 = vmatpush1.bf16.xpose.msra.mxu0 %v3166
        %3267 = vmatprep.subr.bf16.mxu0 0
        %3268 = vmatpush1.bf16.xpose.msra.mxu0 %v3163
        %3269 = vmatprep.subr.bf16.mxu0 0
        %3270 = vmatpush1.bf16.xpose.msra.mxu0 %v3160
        %3271 = vmatprep.subr.bf16.mxu0 0
        %3272 = vmatpush2.bf16.xpose.msra.mxu0 %v3205
        %3273 = vmatprep.subr.bf16.mxu0 0
        %3274 = vmatpush2.bf16.xpose.msra.mxu0 %v3202
        %3275 = vmatprep.subr.bf16.mxu0 0
        %3276 = vmatpush2.bf16.xpose.msra.mxu0 %v3199
        %3277 = vmatprep.subr.bf16.mxu0 0
        %3278 = vmatpush2.bf16.xpose.msra.mxu0 %v3196
        %3279 = vmatprep.subr.bf16.mxu0 0
        %3280 = vmatpush2.bf16.xpose.msra.mxu0 %v3193
        %3281 = vmatprep.subr.bf16.mxu0 0
        %3282 = vmatpush2.bf16.xpose.msra.mxu0 %v3190
        %3283 = vmatprep.subr.bf16.mxu0 0
        %3284 = vmatpush2.bf16.xpose.msra.mxu0 %v3187
        %3285 = vmatprep.subr.bf16.mxu0 0
        %3286 = vmatpush2.bf16.xpose.msra.mxu0 %v3184
        %3287 = vmatprep.mubr.bf16.mxu0 0
        %3288 = vmatmul.mubr.bf16.gmra.mxu0 %v3157
        %v3289 = vpop.f32.mrf.mxu0
        %v3290 = vadd.f32 0.0, %v3289
        %v3291 = vpop.f32.mrf.mxu0
        %v3292 = vadd.f32 0.0, %v3291
        %v3293 = vpop.f32.mrf.mxu0
        %v3294 = vpop.f32.mrf.mxu0
        %3295 = vdwg.mxu0
        %3296 = vmatprep.subr.bf16.mxu0 0
        %3297 = vmatpush1.bf16.xpose.msra.mxu0 %v3229
        %3298 = vmatprep.subr.bf16.mxu0 0
        %3299 = vmatpush1.bf16.xpose.msra.mxu0 %v3226
        %3300 = vmatprep.subr.bf16.mxu0 0
        %3301 = vmatpush1.bf16.xpose.msra.mxu0 %v3223
        %3302 = vmatprep.subr.bf16.mxu0 0
        %3303 = vmatpush1.bf16.xpose.msra.mxu0 %v3220
        %3304 = vmatprep.subr.bf16.mxu0 0
        %3305 = vmatpush1.bf16.xpose.msra.mxu0 %v3217
        %3306 = vmatprep.subr.bf16.mxu0 0
        %3307 = vmatpush1.bf16.xpose.msra.mxu0 %v3214
        %3308 = vmatprep.subr.bf16.mxu0 0
        %3309 = vmatpush1.bf16.xpose.msra.mxu0 %v3211
        %3310 = vmatprep.subr.bf16.mxu0 0
        %3311 = vmatpush1.bf16.xpose.msra.mxu0 %v3208
        %3312 = vmatprep.subr.bf16.mxu0 0
        %3313 = vmatpush2.bf16.xpose.msra.mxu0 %v3253
        %3314 = vmatprep.subr.bf16.mxu0 0
        %3315 = vmatpush2.bf16.xpose.msra.mxu0 %v3250
        %3316 = vmatprep.subr.bf16.mxu0 0
        %3317 = vmatpush2.bf16.xpose.msra.mxu0 %v3247
        %3318 = vmatprep.subr.bf16.mxu0 0
        %3319 = vmatpush2.bf16.xpose.msra.mxu0 %v3244
        %3320 = vmatprep.subr.bf16.mxu0 0
        %3321 = vmatpush2.bf16.xpose.msra.mxu0 %v3241
        %3322 = vmatprep.subr.bf16.mxu0 0
        %3323 = vmatpush2.bf16.xpose.msra.mxu0 %v3238
        %3324 = vmatprep.subr.bf16.mxu0 0
        %3325 = vmatpush2.bf16.xpose.msra.mxu0 %v3235
        %3326 = vmatprep.subr.bf16.mxu0 0
        %3327 = vmatpush2.bf16.xpose.msra.mxu0 %v3232
        %3328 = vmatprep.mubr.bf16.mxu0 0
        %3329 = vmatmul.mubr.bf16.gmra.mxu0 %v3157
        %v3330 = vpop.f32.mrf.mxu0
        %v3331 = vadd.f32 0.0, %v3330
        %v3332 = vpop.f32.mrf.mxu0
        %v3333 = vadd.f32 0.0, %v3332
        %v3334 = vpop.f32.mrf.mxu0
        %v3335 = vpop.f32.mrf.mxu0
        %3336 = vdwg.mxu0
        %v3338 = vsel %vm993, %v760, 0
        %v3341 = vsel %vm993, %v761, 0
        %v3344 = vsel %vm993, %v762, 0
        %v3347 = vsel %vm993, %v763, 0
        %v3350 = vsel %vm993, %v764, 0
        %v3353 = vsel %vm993, %v765, 0
        %v3356 = vsel %vm993, %v766, 0
        %v3359 = vsel %vm993, %v767, 0
        %v3362 = vsel %vm993, %v768, 0
        %v3365 = vsel %vm993, %v769, 0
        %v3368 = vsel %vm993, %v770, 0
        %v3371 = vsel %vm993, %v771, 0
        %v3374 = vsel %vm993, %v772, 0
        %v3377 = vsel %vm993, %v773, 0
        %v3380 = vsel %vm993, %v774, 0
        %v3383 = vsel %vm993, %v775, 0
        %v3386 = vsel %vm993, %v776, 0
        %v3389 = vsel %vm993, %v777, 0
        %v3392 = vsel %vm993, %v778, 0
        %v3395 = vsel %vm993, %v779, 0
        %v3398 = vsel %vm993, %v780, 0
        %v3401 = vsel %vm993, %v781, 0
        %v3404 = vsel %vm993, %v782, 0
        %v3407 = vsel %vm993, %v783, 0
        %v3410 = vsel %vm993, %v784, 0
        %v3413 = vsel %vm993, %v785, 0
        %v3416 = vsel %vm993, %v786, 0
        %v3419 = vsel %vm993, %v787, 0
        %v3422 = vsel %vm993, %v788, 0
        %v3425 = vsel %vm993, %v789, 0
        %v3428 = vsel %vm993, %v790, 0
        %v3431 = vsel %vm993, %v791, 0
        %v3434 = vsel %vm993, %v792, 0
        %3436 = vmatprep.subr.bf16.mxu0 0
        %3437 = vmatpush1.bf16.xpose.msra.mxu0 %v3362
        %3438 = vmatprep.subr.bf16.mxu0 0
        %3439 = vmatpush1.bf16.xpose.msra.mxu0 %v3359
        %3440 = vmatprep.subr.bf16.mxu0 0
        %3441 = vmatpush1.bf16.xpose.msra.mxu0 %v3356
        %3442 = vmatprep.subr.bf16.mxu0 0
        %3443 = vmatpush1.bf16.xpose.msra.mxu0 %v3353
        %3444 = vmatprep.subr.bf16.mxu0 0
        %3445 = vmatpush1.bf16.xpose.msra.mxu0 %v3350
        %3446 = vmatprep.subr.bf16.mxu0 0
        %3447 = vmatpush1.bf16.xpose.msra.mxu0 %v3347
        %3448 = vmatprep.subr.bf16.mxu0 0
        %3449 = vmatpush1.bf16.xpose.msra.mxu0 %v3344
        %3450 = vmatprep.subr.bf16.mxu0 0
        %3451 = vmatpush1.bf16.xpose.msra.mxu0 %v3341
        %3452 = vmatprep.subr.bf16.mxu0 0
        %3453 = vmatpush2.bf16.xpose.msra.mxu0 %v3386
        %3454 = vmatprep.subr.bf16.mxu0 0
        %3455 = vmatpush2.bf16.xpose.msra.mxu0 %v3383
        %3456 = vmatprep.subr.bf16.mxu0 0
        %3457 = vmatpush2.bf16.xpose.msra.mxu0 %v3380
        %3458 = vmatprep.subr.bf16.mxu0 0
        %3459 = vmatpush2.bf16.xpose.msra.mxu0 %v3377
        %3460 = vmatprep.subr.bf16.mxu0 0
        %3461 = vmatpush2.bf16.xpose.msra.mxu0 %v3374
        %3462 = vmatprep.subr.bf16.mxu0 0
        %3463 = vmatpush2.bf16.xpose.msra.mxu0 %v3371
        %3464 = vmatprep.subr.bf16.mxu0 0
        %3465 = vmatpush2.bf16.xpose.msra.mxu0 %v3368
        %3466 = vmatprep.subr.bf16.mxu0 0
        %3467 = vmatpush2.bf16.xpose.msra.mxu0 %v3365
        %3468 = vmatprep.mubr.bf16.mxu0 0
        %3469 = vmatmul.mubr.bf16.gmra.mxu0 %v3338
        %v3470 = vpop.f32.mrf.mxu0
        %v3471 = vadd.f32 %v3290, %v3470
        %v3472 = vpop.f32.mrf.mxu0
        %v3473 = vadd.f32 %v3292, %v3472
        %v3474 = vpop.f32.mrf.mxu0
        %v3475 = vpop.f32.mrf.mxu0
        %3476 = vdwg.mxu0
        %3477 = vmatprep.subr.bf16.mxu0 0
        %3478 = vmatpush1.bf16.xpose.msra.mxu0 %v3410
        %3479 = vmatprep.subr.bf16.mxu0 0
        %3480 = vmatpush1.bf16.xpose.msra.mxu0 %v3407
        %3481 = vmatprep.subr.bf16.mxu0 0
        %3482 = vmatpush1.bf16.xpose.msra.mxu0 %v3404
        %3483 = vmatprep.subr.bf16.mxu0 0
        %3484 = vmatpush1.bf16.xpose.msra.mxu0 %v3401
        %3485 = vmatprep.subr.bf16.mxu0 0
        %3486 = vmatpush1.bf16.xpose.msra.mxu0 %v3398
        %3487 = vmatprep.subr.bf16.mxu0 0
        %3488 = vmatpush1.bf16.xpose.msra.mxu0 %v3395
        %3489 = vmatprep.subr.bf16.mxu0 0
        %3490 = vmatpush1.bf16.xpose.msra.mxu0 %v3392
        %3491 = vmatprep.subr.bf16.mxu0 0
        %3492 = vmatpush1.bf16.xpose.msra.mxu0 %v3389
        %3493 = vmatprep.subr.bf16.mxu0 0
        %3494 = vmatpush2.bf16.xpose.msra.mxu0 %v3434
        %3495 = vmatprep.subr.bf16.mxu0 0
        %3496 = vmatpush2.bf16.xpose.msra.mxu0 %v3431
        %3497 = vmatprep.subr.bf16.mxu0 0
        %3498 = vmatpush2.bf16.xpose.msra.mxu0 %v3428
        %3499 = vmatprep.subr.bf16.mxu0 0
        %3500 = vmatpush2.bf16.xpose.msra.mxu0 %v3425
        %3501 = vmatprep.subr.bf16.mxu0 0
        %3502 = vmatpush2.bf16.xpose.msra.mxu0 %v3422
        %3503 = vmatprep.subr.bf16.mxu0 0
        %3504 = vmatpush2.bf16.xpose.msra.mxu0 %v3419
        %3505 = vmatprep.subr.bf16.mxu0 0
        %3506 = vmatpush2.bf16.xpose.msra.mxu0 %v3416
        %3507 = vmatprep.subr.bf16.mxu0 0
        %3508 = vmatpush2.bf16.xpose.msra.mxu0 %v3413
        %3509 = vmatprep.mubr.bf16.mxu0 0
        %3510 = vmatmul.mubr.bf16.gmra.mxu0 %v3338
        %v3511 = vpop.f32.mrf.mxu0
        %v3512 = vadd.f32 %v3331, %v3511
        %v3513 = vpop.f32.mrf.mxu0
        %v3514 = vadd.f32 %v3333, %v3513
        %v3515 = vpop.f32.mrf.mxu0
        %v3516 = vpop.f32.mrf.mxu0
        %3517 = vdwg.mxu0
        %v3518 = vld [vmem:[#allocation2] sm:$0x1]
        %v3520 = vlaneseq
        %v3521 = vshrl.u32 %v3520, 7
        %v3522 = vsub.s32 0, %v3521
        %v3523 = vrot.slane %v3518, %v3522
        %3524 = vset.pattern.permute.xlu0 0
        %3525 = vperm.xlu0 %3524, %v3523
        %v3526 = vpop.permute.xlu0 %3525
        %v3528 = vadd.f32 %v3471, %v3526
        %v3529 = vadd.f32 %v3473, %v3526
        %v3530 = vadd.f32 %v3512, %v3526
        %v3531 = vadd.f32 %v3514, %v3526
        %3532 = vst [vmem:[%s425] sm:$0xff] %v3528
        %3533 = vst [vmem:[%s425 + $0x8] sm:$0xff] %v3529
        %3534 = vst [vmem:[%s425 + $0x10] sm:$0xff] %v3530
        %3535 = vst [vmem:[%s425 + $0x18] sm:$0xff] %v3531
        %s3536 = sand.u32 %s298, 1
        %s3537 = scalar_lea.sflag [#allocation4], %s3536
        %s3538 = sand.u32 %s298, 1
        %s3539 = smul.addr %s3538, 32
        %s3540 = scalar_lea.vmem [#allocation3], %s3539
        // Predicated region
        $region69: #{tpu_custom_call.1} parent=67 // pred_check
          %p3541 = pneg %p308
        $region70: #{tpu_custom_call.1} parent=67 // pred_check_branch
          %3543 = sbr.rel (%p3541) target = $region72
        $region71: #{tpu_custom_call.1} parent=67 // pred_region
          %s3544 = smul.u32 4, %s28
          %s3546 = ssub.s32 512, 512
          %3547 = vsyncadd %s3537, %s3546
          %s3548 = smul.addr %s3544, 128
          %s3549 = scalar_lea.hbm %s12, %s3548
          %s3551 = sshll.u32 %s3540, 4
          %s3552 = int_to_ptr.vmem [resolvable:$true] %s3551
          %3554 = dma.vmem_to_hbm [thread:$0]  %s3552, 512, %s3549, %s3537
        $region72: #{tpu_custom_call.1} parent=67 // pred_fallthru
          _
      $region68: #{tpu_custom_call.1} parent=5 // pred_fallthru
        _
      %p3555 = scmp.le.s32.totalorder 2, %s23
      // Predicated region
      $region73: #{tpu_custom_call.1} parent=5 // pred_check
        %p3556 = pneg %p3555
      $region74: #{tpu_custom_call.1} parent=5 // pred_check_branch
        %3558 = sbr.rel (%p3556) target = $region76
      $region75: #{tpu_custom_call.1} parent=5 // pred_region
        %s3559 = ssub.s32 %s23, 2
        // Predicated region
        $region77: #{tpu_custom_call.1} parent=75 // pred_check
          %p3560 = pneg %p314
        $region78: #{tpu_custom_call.1} parent=75 // pred_check_branch
          %3562 = sbr.rel (%p3560) target = $region80
        $region79: #{tpu_custom_call.1} parent=75 // pred_region
          %s3563 = sand.u32 %s299, 1
          %s3564 = scalar_lea.sflag [#allocation4], %s3563
          %s3565 = sand.u32 %s299, 1
          %s3566 = smul.addr %s3565, 32
          %s3567 = scalar_lea.vmem [#allocation3], %s3566
          %3568 = dma.done %s3564, 512
        $region80: #{tpu_custom_call.1} parent=75 // pred_fallthru
          _
      $region76: #{tpu_custom_call.1} parent=5 // pred_fallthru
        _
    $region6: #{tpu_custom_call.1} parent=1 // loop_footer
      %s27 = sadd.s32 1, %s23
    $region7: #{tpu_custom_call.1} parent=1 // loop_footer_branch
      %22 = sbr.rel target = $region3
    $region8: #{tpu_custom_call.1} parent=1 // loop_exit
      _
    %3569 = vsyncpa [#allocation4], 1
    %s3570 = scalar_lea.sflag [#allocation4], 1
    %3571 = vsyncpa %s3570, 1

</llo_original>
